<compile_context>
chip_gen: v6e
topology: v6e:2x2x1
jax: 0.10.0
libtpu: 0.0.40
codegen_flags: <defaults>
</compile_context>

<pallas_src>
import functools

import jax
import jax.numpy as jnp
from jax.experimental import pallas as pl
from jax.experimental.pallas import tpu as pltpu

K = 3           # 3x3x3 kernels throughout
KT = K * K * K  # 27 taps per conv


def sdm_kernel(f_ref, g_ref, mask_ref, w1_ref, b1_ref, wx_ref, wg_ref,
               wc_ref, b2_ref, out_ref, slab_ref, *, offsets):
    CP, S = f_ref.shape      # channel-padded rows, flattened spatial (lane-dense)
    f32 = jnp.float32

    def shifted(x, t):
        """Tap-t shifted view of x (CP, S) via an XLU lane roll; boundary lanes
        (including every roll-wrapped lane) are zeroed by the precomputed mask."""
        off = offsets[t]
        if off == 0:                       # centre tap: no shift, mask is all-ones
            return x
        v = pltpu.roll(x, (-off) % S, axis=1)
        return v * mask_ref[pl.ds(t, 1), :]

    def dense_conv(x, w, b):
        """Dense 3x3x3 conv: sublane-aligned im2col slab + ONE MXU matmul."""
        for t in range(KT):
            slab_ref[pl.ds(t * CP, CP), :] = shifted(x, t)   # aligned (8,128) stores
        return jnp.dot(w, slab_ref[...], preferred_element_type=f32) + b

    def depthwise_conv(x, wt_ref):
        """Depthwise 3x3x3 conv: 27 per-tap FMAs on the VPU (no slab, no MXU)."""
        acc = shifted(x, 0) * wt_ref[:, pl.ds(0, 1)]
        for t in range(1, KT):
            acc = acc + shifted(x, t) * wt_ref[:, pl.ds(t, 1)]
        return acc

    # conv1 (Cg -> Cin, BN1 folded); output stays channel-padded (pad rows = 0).
    g1 = dense_conv(g_ref[...], w1_ref[...], b1_ref[...])
    # learnable difference (depthwise) convolutions on the VPU.
    g_diff = depthwise_conv(g1, wg_ref)
    x_diff = depthwise_conv(f_ref[...], wx_ref)
    prod = x_diff * (g_diff * g_diff)
    # final dense conv + folded BN2, then ReLU + residual (re-read f_ref here).
    out = dense_conv(prod, wc_ref[...], b2_ref[...])          # (Cin, S)
    cin = out_ref.shape[0]
    out_ref[...] = jnp.maximum(out, 0.0) + f_ref[pl.ds(0, cin), :]


def sdm_forward(feature, guidance, params, eps=1e-5):
    """Fused SDM forward. feature: (N,Cin,D,H,W), guidance: (N,Cg,D,H,W)."""
    N, Cin, D, H, W = feature.shape
    Cg = guidance.shape[1]
    S = D * H * W
    HW = H * W
    f32 = jnp.float32
    CP = ((max(Cin, Cg) + 7) // 8) * 8     # pad channels to a full sublane tile

    # Fold the two BatchNorm3d layers (eval / running stats) into the convs.
    s1 = params["bn1_gamma"] / jnp.sqrt(params["bn1_var"] + eps)
    w1 = params["w_conv1"] * s1[:, None, None, None, None]
    b1 = params["bn1_beta"] - params["bn1_mean"] * s1
    s2 = params["bn2_gamma"] / jnp.sqrt(params["bn2_var"] + eps)
    wc = params["w_conv"] * s2[:, None, None, None, None]
    b2 = params["bn2_beta"] - params["bn2_mean"] * s2
    # TODO(synk): PyTorch training-mode BatchNorm (batch statistics) is not reproduced;
    #             both BatchNorm3d layers are folded in inference (running-stats) mode.

    # Tap order: kd-major, kw-minor (shared by offsets, masks and all weight layouts).
    offsets = tuple(dd * HW + dh * W + dw
                    for dd in (-1, 0, 1) for dh in (-1, 0, 1) for dw in (-1, 0, 1))

    # Precomputed per-tap validity masks (zero every out-of-range / wrapped lane).
    idx = jnp.arange(S, dtype=jnp.int32)
    d_i, h_i, w_i = idx // HW, (idx // W) % H, idx % W
    rows = []
    for dd in (-1, 0, 1):
        for dh in (-1, 0, 1):
            for dw in (-1, 0, 1):
                ok = ((d_i + dd >= 0) & (d_i + dd < D) &
                      (h_i + dh >= 0) & (h_i + dh < H) &
                      (w_i + dw >= 0) & (w_i + dw < W))
                rows.append(ok.astype(f32))
    mask_arr = jnp.stack(rows)                                  # (27, S)

    def dense_mat(w, cp_out):
        """(Co, Ci, 3,3,3) -> (cp_out or Co, 27*CP), col = tap*CP + ci (zero-padded)."""
        co, ci = w.shape[0], w.shape[1]
        wp = jnp.zeros((co, CP, K, K, K), f32).at[:, :ci].set(w.astype(f32))
        m = wp.transpose(0, 2, 3, 4, 1).reshape(co, KT * CP)
        if cp_out is None:
            return m
        return jnp.zeros((cp_out, KT * CP), f32).at[:co].set(m)

    def dw_mat(w):
        """(C, 1, 3,3,3) -> (CP, 27) per-(channel, tap) scalars for the VPU path."""
        c = w.shape[0]
        wt = w[:, 0].reshape(c, KT).astype(f32)
        return jnp.zeros((CP, KT), f32).at[:c].set(wt)

    w1m = dense_mat(w1, CP)          # (CP, 27*CP): output rows >= Cin are zero
    wcm = dense_mat(wc, None)        # (Cin, 27*CP)
    wxm = dw_mat(params["x_kernel_diff"])
    wgm = dw_mat(params["guidance_kernel_diff"])
    b1c = jnp.zeros((CP, 1), f32).at[:Cin, 0].set(b1.astype(f32))
    b2c = b2.reshape(Cin, 1).astype(f32)

    # Channel-pad the activations so every (C, S) block is full 8-sublane tiles.
    f2 = jnp.zeros((N, CP, S), f32).at[:, :Cin].set(feature.reshape(N, Cin, S).astype(f32))
    g2 = jnp.zeros((N, CP, S), f32).at[:, :Cg].set(guidance.reshape(N, Cg, S).astype(f32))

    full2d = lambda shape: pl.BlockSpec(shape, lambda n: (0, 0))

    out = pl.pallas_call(
        functools.partial(sdm_kernel, offsets=offsets),
        out_shape=jax.ShapeDtypeStruct((N, Cin, S), f32),
        grid=(N,),
        in_specs=[
            pl.BlockSpec((None, CP, S), lambda n: (n, 0, 0)),   # feature (channel-padded)
            pl.BlockSpec((None, CP, S), lambda n: (n, 0, 0)),   # guidance (channel-padded)
            full2d((KT, S)),         # per-tap boundary masks (resident)
            full2d((CP, KT * CP)),   # conv1 weight (BN1-folded, im2col layout)
            full2d((CP, 1)),         # BN1 shift
            full2d((CP, KT)),        # x_kernel_diff per-(channel,tap) scalars
            full2d((CP, KT)),        # guidance_kernel_diff per-(channel,tap) scalars
            full2d((Cin, KT * CP)),  # final conv weight (BN2-folded, im2col layout)
            full2d((Cin, 1)),        # BN2 shift
        ],
        out_specs=pl.BlockSpec((None, Cin, S), lambda n: (n, 0, 0)),
        scratch_shapes=[pltpu.VMEM((KT * CP, S), jnp.float32)],   # im2col slab (dense convs only)
        compiler_params=pltpu.CompilerParams(
            dimension_semantics=("parallel",)),
    )(f2, g2, mask_arr, w1m, b1c, wxm, wgm, wcm, b2c)
    return out.reshape(N, Cin, D, H, W)


def sdm_reference(feature, guidance, params, eps=1e-5):
    """Pure-JAX reference mirroring the PyTorch forward (BN in eval mode)."""
    dn = ("NCDHW", "OIDHW", "NCDHW")
    conv3d = functools.partial(
        jax.lax.conv_general_dilated,
        window_strides=(1, 1, 1),
        padding=[(1, 1)] * 3,
        dimension_numbers=dn,
        precision=jax.lax.Precision.HIGHEST,
    )

    def bn(x, gamma, beta, mean, var):
        r = lambda v: v[None, :, None, None, None]
        return (x - r(mean)) / jnp.sqrt(r(var) + eps) * r(gamma) + r(beta)

    Cin = feature.shape[1]
    g = conv3d(guidance, params["w_conv1"])
    g = bn(g, params["bn1_gamma"], params["bn1_beta"], params["bn1_mean"], params["bn1_var"])
    x_diff = conv3d(feature, params["x_kernel_diff"], feature_group_count=Cin)
    g_diff = conv3d(g, params["guidance_kernel_diff"], feature_group_count=Cin)
    out = conv3d(x_diff * g_diff * g_diff, params["w_conv"])
    out = bn(out, params["bn2_gamma"], params["bn2_beta"], params["bn2_mean"], params["bn2_var"])
    return jax.nn.relu(out) + feature


def diff_kernel_init(key, cin):
    """Mirror of SDC.kernel_initialize on a randn-initialized (Cin,1,3,3,3) kernel."""
    w = jax.random.normal(key, (cin, 1, 3, 3, 3), jnp.float32)
    for (a, b, c), v in [((0, 0, 0), -1.0), ((0, 0, 2), 1.0), ((0, 2, 0), 1.0),
                         ((2, 0, 0), 1.0), ((0, 2, 2), -1.0), ((2, 0, 2), -1.0),
                         ((2, 2, 0), -1.0), ((2, 2, 2), 1.0)]:
        w = w.at[:, :, a, b, c].set(v)
    return w


if __name__ == "__main__":
    N, Cin, Cg, D, H, W = 2, 3, 2, 8, 8, 8   # in_channel=3, guidance_channels=2
    keys = jax.random.split(jax.random.PRNGKey(0), 16)

    feature = 0.5 * jax.random.normal(keys[0], (N, Cin, D, H, W), jnp.float32)
    guidance = 0.5 * jax.random.normal(keys[1], (N, Cg, D, H, W), jnp.float32)

    params = dict(
        # SDC.conv1 (Conv3d 2->3, k=3, pad=1, bias=False) and SDC.conv (Conv3d 3->3, k=3, pad=1, bias=False)
        w_conv1=0.1 * jax.random.normal(keys[2], (Cin, Cg, 3, 3, 3), jnp.float32),
        w_conv=0.1 * jax.random.normal(keys[3], (Cin, Cin, 3, 3, 3), jnp.float32),
        # learnable difference kernels (depthwise, groups=in_channels)
        x_kernel_diff=diff_kernel_init(keys[4], Cin),
        guidance_kernel_diff=diff_kernel_init(keys[5], Cin),
        # Conv3dbn's BatchNorm3d (after conv1) — eval-mode running stats
        bn1_gamma=0.5 + jax.random.uniform(keys[6], (Cin,), jnp.float32),
        bn1_beta=0.1 * jax.random.normal(keys[7], (Cin,), jnp.float32),
        bn1_mean=0.1 * jax.random.normal(keys[8], (Cin,), jnp.float32),
        bn1_var=0.5 + jax.random.uniform(keys[9], (Cin,), jnp.float32),
        # SDM.bn (BatchNorm3d over in_channel) — eval-mode running stats
        bn2_gamma=0.5 + jax.random.uniform(keys[10], (Cin,), jnp.float32),
        bn2_beta=0.1 * jax.random.normal(keys[11], (Cin,), jnp.float32),
        bn2_mean=0.1 * jax.random.normal(keys[12], (Cin,), jnp.float32),
        bn2_var=0.5 + jax.random.uniform(keys[13], (Cin,), jnp.float32),
    )

    out = jax.block_until_ready(sdm_forward(feature, guidance, params))
    ref = sdm_reference(feature, guidance, params)

    assert out.shape == (N, Cin, D, H, W), out.shape
    err = float(jnp.max(jnp.abs(out - ref)))
    assert jnp.allclose(out, ref, atol=2e-3, rtol=2e-3), err
    print("KERNEL_OK")
</pallas_src>

<mosaic_0001>
module attributes {stable_mosaic.version = 11 : i64} {
  func.func @sdm_kernel(%arg0: i32, %arg1: memref<1x8x512xf32, #tpu.memory_space<vmem>>, %arg2: memref<1x8x512xf32, #tpu.memory_space<vmem>>, %arg3: memref<27x512xf32, #tpu.memory_space<vmem>>, %arg4: memref<8x216xf32, #tpu.memory_space<vmem>>, %arg5: memref<8x1xf32, #tpu.memory_space<vmem>>, %arg6: memref<8x27xf32, #tpu.memory_space<vmem>>, %arg7: memref<8x27xf32, #tpu.memory_space<vmem>>, %arg8: memref<3x216xf32, #tpu.memory_space<vmem>>, %arg9: memref<3x1xf32, #tpu.memory_space<vmem>>, %arg10: memref<1x3x512xf32, #tpu.memory_space<vmem>>, %arg11: memref<216x512xf32, #tpu.memory_space<vmem>>) attributes {dimension_semantics = [#tpu.dimension_semantics<parallel>], iteration_bounds = array<i64: 2>, scalar_prefetch = 0 : i64, scratch_operands = 1 : i64, tpu.core_type = #tpu.core_type<tc>, window_params = [{transform_indices = @transform_0, window_bounds = array<i64: 1, 8, 512>}, {transform_indices = @transform_1, window_bounds = array<i64: 1, 8, 512>}, {pipeline_mode = #tpu.pipeline_mode<synchronous>, transform_indices = @transform_2, window_bounds = array<i64: 27, 512>}, {pipeline_mode = #tpu.pipeline_mode<synchronous>, transform_indices = @transform_3, window_bounds = array<i64: 8, 216>}, {pipeline_mode = #tpu.pipeline_mode<synchronous>, transform_indices = @transform_4, window_bounds = array<i64: 8, 1>}, {pipeline_mode = #tpu.pipeline_mode<synchronous>, transform_indices = @transform_5, window_bounds = array<i64: 8, 27>}, {pipeline_mode = #tpu.pipeline_mode<synchronous>, transform_indices = @transform_6, window_bounds = array<i64: 8, 27>}, {pipeline_mode = #tpu.pipeline_mode<synchronous>, transform_indices = @transform_7, window_bounds = array<i64: 3, 216>}, {pipeline_mode = #tpu.pipeline_mode<synchronous>, transform_indices = @transform_8, window_bounds = array<i64: 3, 1>}, {transform_indices = @transform_9, window_bounds = array<i64: 1, 3, 512>}]} {
    %c0 = arith.constant 0 : index
    %c0_0 = arith.constant 0 : index
    %c0_1 = arith.constant 0 : index
    %0 = vector.load %arg2[%c0, %c0_0, %c0_1] : memref<1x8x512xf32, #tpu.memory_space<vmem>>, vector<1x8x512xf32>
    %1 = vector.shape_cast %0 : vector<1x8x512xf32> to vector<8x512xf32>
    %c0_2 = arith.constant 0 : index
    %c0_3 = arith.constant 0 : index
    %2 = vector.load %arg4[%c0_2, %c0_3] : memref<8x216xf32, #tpu.memory_space<vmem>>, vector<8x216xf32>
    %c0_4 = arith.constant 0 : index
    %c0_5 = arith.constant 0 : index
    %3 = vector.load %arg5[%c0_4, %c0_5] : memref<8x1xf32, #tpu.memory_space<vmem>>, vector<8x1xf32>
    %c73_i32 = arith.constant 73 : i32
    %4 = tpu.dynamic_rotate %1 by %c73_i32 dim 1 : vector<8x512xf32>, i32 -> vector<8x512xf32>
    %c0_6 = arith.constant 0 : index
    %c0_7 = arith.constant 0 : index
    %5 = vector.load %arg3[%c0_6, %c0_7] : memref<27x512xf32, #tpu.memory_space<vmem>>, vector<1x512xf32>
    %6 = vector.broadcast %5 : vector<1x512xf32> to vector<8x512xf32>
    %7 = arith.mulf %4, %6 : vector<8x512xf32>
    %c0_8 = arith.constant 0 : index
    %c0_9 = arith.constant 0 : index
    %8 = vector.load %arg11[%c0_8, %c0_9] : memref<216x512xf32, #tpu.memory_space<vmem>>, vector<8x512xf32>
    tpu.vector_store %arg11[%c0_8, %c0_9], %7 {strides = array<i32>} : memref<216x512xf32, #tpu.memory_space<vmem>>, vector<8x512xf32>,
    %c72_i32 = arith.constant 72 : i32
    %9 = tpu.dynamic_rotate %1 by %c72_i32 dim 1 : vector<8x512xf32>, i32 -> vector<8x512xf32>
    %c1 = arith.constant 1 : index
    %c0_10 = arith.constant 0 : index
    %10 = vector.load %arg3[%c1, %c0_10] : memref<27x512xf32, #tpu.memory_space<vmem>>, vector<1x512xf32>
    %11 = vector.broadcast %10 : vector<1x512xf32> to vector<8x512xf32>
    %12 = arith.mulf %9, %11 : vector<8x512xf32>
    %c8 = arith.constant 8 : index
    %c0_11 = arith.constant 0 : index
    %13 = vector.load %arg11[%c8, %c0_11] : memref<216x512xf32, #tpu.memory_space<vmem>>, vector<8x512xf32>
    tpu.vector_store %arg11[%c8, %c0_11], %12 {strides = array<i32>} : memref<216x512xf32, #tpu.memory_space<vmem>>, vector<8x512xf32>,
    %c71_i32 = arith.constant 71 : i32
    %14 = tpu.dynamic_rotate %1 by %c71_i32 dim 1 : vector<8x512xf32>, i32 -> vector<8x512xf32>
    %c2 = arith.constant 2 : index
    %c0_12 = arith.constant 0 : index
    %15 = vector.load %arg3[%c2, %c0_12] : memref<27x512xf32, #tpu.memory_space<vmem>>, vector<1x512xf32>
    %16 = vector.broadcast %15 : vector<1x512xf32> to vector<8x512xf32>
    %17 = arith.mulf %14, %16 : vector<8x512xf32>
    %c16 = arith.constant 16 : index
    %c0_13 = arith.constant 0 : index
    %18 = vector.load %arg11[%c16, %c0_13] : memref<216x512xf32, #tpu.memory_space<vmem>>, vector<8x512xf32>
    tpu.vector_store %arg11[%c16, %c0_13], %17 {strides = array<i32>} : memref<216x512xf32, #tpu.memory_space<vmem>>, vector<8x512xf32>,
    %c65_i32 = arith.constant 65 : i32
    %19 = tpu.dynamic_rotate %1 by %c65_i32 dim 1 : vector<8x512xf32>, i32 -> vector<8x512xf32>
    %c3 = arith.constant 3 : index
    %c0_14 = arith.constant 0 : index
    %20 = vector.load %arg3[%c3, %c0_14] : memref<27x512xf32, #tpu.memory_space<vmem>>, vector<1x512xf32>
    %21 = vector.broadcast %20 : vector<1x512xf32> to vector<8x512xf32>
    %22 = arith.mulf %19, %21 : vector<8x512xf32>
    %c24 = arith.constant 24 : index
    %c0_15 = arith.constant 0 : index
    %23 = vector.load %arg11[%c24, %c0_15] : memref<216x512xf32, #tpu.memory_space<vmem>>, vector<8x512xf32>
    tpu.vector_store %arg11[%c24, %c0_15], %22 {strides = array<i32>} : memref<216x512xf32, #tpu.memory_space<vmem>>, vector<8x512xf32>,
    %c64_i32 = arith.constant 64 : i32
    %24 = tpu.dynamic_rotate %1 by %c64_i32 dim 1 : vector<8x512xf32>, i32 -> vector<8x512xf32>
    %c4 = arith.constant 4 : index
    %c0_16 = arith.constant 0 : index
    %25 = vector.load %arg3[%c4, %c0_16] : memref<27x512xf32, #tpu.memory_space<vmem>>, vector<1x512xf32>
    %26 = vector.broadcast %25 : vector<1x512xf32> to vector<8x512xf32>
    %27 = arith.mulf %24, %26 : vector<8x512xf32>
    %c32 = arith.constant 32 : index
    %c0_17 = arith.constant 0 : index
    %28 = vector.load %arg11[%c32, %c0_17] : memref<216x512xf32, #tpu.memory_space<vmem>>, vector<8x512xf32>
    tpu.vector_store %arg11[%c32, %c0_17], %27 {strides = array<i32>} : memref<216x512xf32, #tpu.memory_space<vmem>>, vector<8x512xf32>,
    %c63_i32 = arith.constant 63 : i32
    %29 = tpu.dynamic_rotate %1 by %c63_i32 dim 1 : vector<8x512xf32>, i32 -> vector<8x512xf32>
    %c5 = arith.constant 5 : index
    %c0_18 = arith.constant 0 : index
    %30 = vector.load %arg3[%c5, %c0_18] : memref<27x512xf32, #tpu.memory_space<vmem>>, vector<1x512xf32>
    %31 = vector.broadcast %30 : vector<1x512xf32> to vector<8x512xf32>
    %32 = arith.mulf %29, %31 : vector<8x512xf32>
    %c40 = arith.constant 40 : index
    %c0_19 = arith.constant 0 : index
    %33 = vector.load %arg11[%c40, %c0_19] : memref<216x512xf32, #tpu.memory_space<vmem>>, vector<8x512xf32>
    tpu.vector_store %arg11[%c40, %c0_19], %32 {strides = array<i32>} : memref<216x512xf32, #tpu.memory_space<vmem>>, vector<8x512xf32>,
    %c57_i32 = arith.constant 57 : i32
    %34 = tpu.dynamic_rotate %1 by %c57_i32 dim 1 : vector<8x512xf32>, i32 -> vector<8x512xf32>
    %c6 = arith.constant 6 : index
    %c0_20 = arith.constant 0 : index
    %35 = vector.load %arg3[%c6, %c0_20] : memref<27x512xf32, #tpu.memory_space<vmem>>, vector<1x512xf32>
    %36 = vector.broadcast %35 : vector<1x512xf32> to vector<8x512xf32>
    %37 = arith.mulf %34, %36 : vector<8x512xf32>
    %c48 = arith.constant 48 : index
    %c0_21 = arith.constant 0 : index
    %38 = vector.load %arg11[%c48, %c0_21] : memref<216x512xf32, #tpu.memory_space<vmem>>, vector<8x512xf32>
    tpu.vector_store %arg11[%c48, %c0_21], %37 {strides = array<i32>} : memref<216x512xf32, #tpu.memory_space<vmem>>, vector<8x512xf32>,
    %c56_i32 = arith.constant 56 : i32
    %39 = tpu.dynamic_rotate %1 by %c56_i32 dim 1 : vector<8x512xf32>, i32 -> vector<8x512xf32>
    %c7 = arith.constant 7 : index
    %c0_22 = arith.constant 0 : index
    %40 = vector.load %arg3[%c7, %c0_22] : memref<27x512xf32, #tpu.memory_space<vmem>>, vector<1x512xf32>
    %41 = vector.broadcast %40 : vector<1x512xf32> to vector<8x512xf32>
    %42 = arith.mulf %39, %41 : vector<8x512xf32>
    %c56 = arith.constant 56 : index
    %c0_23 = arith.constant 0 : index
    %43 = vector.load %arg11[%c56, %c0_23] : memref<216x512xf32, #tpu.memory_space<vmem>>, vector<8x512xf32>
    tpu.vector_store %arg11[%c56, %c0_23], %42 {strides = array<i32>} : memref<216x512xf32, #tpu.memory_space<vmem>>, vector<8x512xf32>,
    %c55_i32 = arith.constant 55 : i32
    %44 = tpu.dynamic_rotate %1 by %c55_i32 dim 1 : vector<8x512xf32>, i32 -> vector<8x512xf32>
    %c8_24 = arith.constant 8 : index
    %c0_25 = arith.constant 0 : index
    %45 = vector.load %arg3[%c8_24, %c0_25] : memref<27x512xf32, #tpu.memory_space<vmem>>, vector<1x512xf32>
    %46 = vector.broadcast %45 : vector<1x512xf32> to vector<8x512xf32>
    %47 = arith.mulf %44, %46 : vector<8x512xf32>
    %c64 = arith.constant 64 : index
    %c0_26 = arith.constant 0 : index
    %48 = vector.load %arg11[%c64, %c0_26] : memref<216x512xf32, #tpu.memory_space<vmem>>, vector<8x512xf32>
    tpu.vector_store %arg11[%c64, %c0_26], %47 {strides = array<i32>} : memref<216x512xf32, #tpu.memory_space<vmem>>, vector<8x512xf32>,
    %c9_i32 = arith.constant 9 : i32
    %49 = tpu.dynamic_rotate %1 by %c9_i32 dim 1 : vector<8x512xf32>, i32 -> vector<8x512xf32>
    %c9 = arith.constant 9 : index
    %c0_27 = arith.constant 0 : index
    %50 = vector.load %arg3[%c9, %c0_27] : memref<27x512xf32, #tpu.memory_space<vmem>>, vector<1x512xf32>
    %51 = vector.broadcast %50 : vector<1x512xf32> to vector<8x512xf32>
    %52 = arith.mulf %49, %51 : vector<8x512xf32>
    %c72 = arith.constant 72 : index
    %c0_28 = arith.constant 0 : index
    %53 = vector.load %arg11[%c72, %c0_28] : memref<216x512xf32, #tpu.memory_space<vmem>>, vector<8x512xf32>
    tpu.vector_store %arg11[%c72, %c0_28], %52 {strides = array<i32>} : memref<216x512xf32, #tpu.memory_space<vmem>>, vector<8x512xf32>,
    %c8_i32 = arith.constant 8 : i32
    %54 = tpu.dynamic_rotate %1 by %c8_i32 dim 1 : vector<8x512xf32>, i32 -> vector<8x512xf32>
    %c10 = arith.constant 10 : index
    %c0_29 = arith.constant 0 : index
    %55 = vector.load %arg3[%c10, %c0_29] : memref<27x512xf32, #tpu.memory_space<vmem>>, vector<1x512xf32>
    %56 = vector.broadcast %55 : vector<1x512xf32> to vector<8x512xf32>
    %57 = arith.mulf %54, %56 : vector<8x512xf32>
    %c80 = arith.constant 80 : index
    %c0_30 = arith.constant 0 : index
    %58 = vector.load %arg11[%c80, %c0_30] : memref<216x512xf32, #tpu.memory_space<vmem>>, vector<8x512xf32>
    tpu.vector_store %arg11[%c80, %c0_30], %57 {strides = array<i32>} : memref<216x512xf32, #tpu.memory_space<vmem>>, vector<8x512xf32>,
    %c7_i32 = arith.constant 7 : i32
    %59 = tpu.dynamic_rotate %1 by %c7_i32 dim 1 : vector<8x512xf32>, i32 -> vector<8x512xf32>
    %c11 = arith.constant 11 : index
    %c0_31 = arith.constant 0 : index
    %60 = vector.load %arg3[%c11, %c0_31] : memref<27x512xf32, #tpu.memory_space<vmem>>, vector<1x512xf32>
    %61 = vector.broadcast %60 : vector<1x512xf32> to vector<8x512xf32>
    %62 = arith.mulf %59, %61 : vector<8x512xf32>
    %c88 = arith.constant 88 : index
    %c0_32 = arith.constant 0 : index
    %63 = vector.load %arg11[%c88, %c0_32] : memref<216x512xf32, #tpu.memory_space<vmem>>, vector<8x512xf32>
    tpu.vector_store %arg11[%c88, %c0_32], %62 {strides = array<i32>} : memref<216x512xf32, #tpu.memory_space<vmem>>, vector<8x512xf32>,
    %c1_i32 = arith.constant 1 : i32
    %64 = tpu.dynamic_rotate %1 by %c1_i32 dim 1 : vector<8x512xf32>, i32 -> vector<8x512xf32>
    %c12 = arith.constant 12 : index
    %c0_33 = arith.constant 0 : index
    %65 = vector.load %arg3[%c12, %c0_33] : memref<27x512xf32, #tpu.memory_space<vmem>>, vector<1x512xf32>
    %66 = vector.broadcast %65 : vector<1x512xf32> to vector<8x512xf32>
    %67 = arith.mulf %64, %66 : vector<8x512xf32>
    %c96 = arith.constant 96 : index
    %c0_34 = arith.constant 0 : index
    %68 = vector.load %arg11[%c96, %c0_34] : memref<216x512xf32, #tpu.memory_space<vmem>>, vector<8x512xf32>
    tpu.vector_store %arg11[%c96, %c0_34], %67 {strides = array<i32>} : memref<216x512xf32, #tpu.memory_space<vmem>>, vector<8x512xf32>,
    %c104 = arith.constant 104 : index
    %c0_35 = arith.constant 0 : index
    %69 = vector.load %arg11[%c104, %c0_35] : memref<216x512xf32, #tpu.memory_space<vmem>>, vector<8x512xf32>
    tpu.vector_store %arg11[%c104, %c0_35], %1 {strides = array<i32>} : memref<216x512xf32, #tpu.memory_space<vmem>>, vector<8x512xf32>,
    %c511_i32 = arith.constant 511 : i32
    %70 = tpu.dynamic_rotate %1 by %c511_i32 dim 1 : vector<8x512xf32>, i32 -> vector<8x512xf32>
    %c14 = arith.constant 14 : index
    %c0_36 = arith.constant 0 : index
    %71 = vector.load %arg3[%c14, %c0_36] : memref<27x512xf32, #tpu.memory_space<vmem>>, vector<1x512xf32>
    %72 = vector.broadcast %71 : vector<1x512xf32> to vector<8x512xf32>
    %73 = arith.mulf %70, %72 : vector<8x512xf32>
    %c112 = arith.constant 112 : index
    %c0_37 = arith.constant 0 : index
    %74 = vector.load %arg11[%c112, %c0_37] : memref<216x512xf32, #tpu.memory_space<vmem>>, vector<8x512xf32>
    tpu.vector_store %arg11[%c112, %c0_37], %73 {strides = array<i32>} : memref<216x512xf32, #tpu.memory_space<vmem>>, vector<8x512xf32>,
    %c505_i32 = arith.constant 505 : i32
    %75 = tpu.dynamic_rotate %1 by %c505_i32 dim 1 : vector<8x512xf32>, i32 -> vector<8x512xf32>
    %c15 = arith.constant 15 : index
    %c0_38 = arith.constant 0 : index
    %76 = vector.load %arg3[%c15, %c0_38] : memref<27x512xf32, #tpu.memory_space<vmem>>, vector<1x512xf32>
    %77 = vector.broadcast %76 : vector<1x512xf32> to vector<8x512xf32>
    %78 = arith.mulf %75, %77 : vector<8x512xf32>
    %c120 = arith.constant 120 : index
    %c0_39 = arith.constant 0 : index
    %79 = vector.load %arg11[%c120, %c0_39] : memref<216x512xf32, #tpu.memory_space<vmem>>, vector<8x512xf32>
    tpu.vector_store %arg11[%c120, %c0_39], %78 {strides = array<i32>} : memref<216x512xf32, #tpu.memory_space<vmem>>, vector<8x512xf32>,
    %c504_i32 = arith.constant 504 : i32
    %80 = tpu.dynamic_rotate %1 by %c504_i32 dim 1 : vector<8x512xf32>, i32 -> vector<8x512xf32>
    %c16_40 = arith.constant 16 : index
    %c0_41 = arith.constant 0 : index
    %81 = vector.load %arg3[%c16_40, %c0_41] : memref<27x512xf32, #tpu.memory_space<vmem>>, vector<1x512xf32>
    %82 = vector.broadcast %81 : vector<1x512xf32> to vector<8x512xf32>
    %83 = arith.mulf %80, %82 : vector<8x512xf32>
    %c128 = arith.constant 128 : index
    %c0_42 = arith.constant 0 : index
    %84 = vector.load %arg11[%c128, %c0_42] : memref<216x512xf32, #tpu.memory_space<vmem>>, vector<8x512xf32>
    tpu.vector_store %arg11[%c128, %c0_42], %83 {strides = array<i32>} : memref<216x512xf32, #tpu.memory_space<vmem>>, vector<8x512xf32>,
    %c503_i32 = arith.constant 503 : i32
    %85 = tpu.dynamic_rotate %1 by %c503_i32 dim 1 : vector<8x512xf32>, i32 -> vector<8x512xf32>
    %c17 = arith.constant 17 : index
    %c0_43 = arith.constant 0 : index
    %86 = vector.load %arg3[%c17, %c0_43] : memref<27x512xf32, #tpu.memory_space<vmem>>, vector<1x512xf32>
    %87 = vector.broadcast %86 : vector<1x512xf32> to vector<8x512xf32>
    %88 = arith.mulf %85, %87 : vector<8x512xf32>
    %c136 = arith.constant 136 : index
    %c0_44 = arith.constant 0 : index
    %89 = vector.load %arg11[%c136, %c0_44] : memref<216x512xf32, #tpu.memory_space<vmem>>, vector<8x512xf32>
    tpu.vector_store %arg11[%c136, %c0_44], %88 {strides = array<i32>} : memref<216x512xf32, #tpu.memory_space<vmem>>, vector<8x512xf32>,
    %c457_i32 = arith.constant 457 : i32
    %90 = tpu.dynamic_rotate %1 by %c457_i32 dim 1 : vector<8x512xf32>, i32 -> vector<8x512xf32>
    %c18 = arith.constant 18 : index
    %c0_45 = arith.constant 0 : index
    %91 = vector.load %arg3[%c18, %c0_45] : memref<27x512xf32, #tpu.memory_space<vmem>>, vector<1x512xf32>
    %92 = vector.broadcast %91 : vector<1x512xf32> to vector<8x512xf32>
    %93 = arith.mulf %90, %92 : vector<8x512xf32>
    %c144 = arith.constant 144 : index
    %c0_46 = arith.constant 0 : index
    %94 = vector.load %arg11[%c144, %c0_46] : memref<216x512xf32, #tpu.memory_space<vmem>>, vector<8x512xf32>
    tpu.vector_store %arg11[%c144, %c0_46], %93 {strides = array<i32>} : memref<216x512xf32, #tpu.memory_space<vmem>>, vector<8x512xf32>,
    %c456_i32 = arith.constant 456 : i32
    %95 = tpu.dynamic_rotate %1 by %c456_i32 dim 1 : vector<8x512xf32>, i32 -> vector<8x512xf32>
    %c19 = arith.constant 19 : index
    %c0_47 = arith.constant 0 : index
    %96 = vector.load %arg3[%c19, %c0_47] : memref<27x512xf32, #tpu.memory_space<vmem>>, vector<1x512xf32>
    %97 = vector.broadcast %96 : vector<1x512xf32> to vector<8x512xf32>
    %98 = arith.mulf %95, %97 : vector<8x512xf32>
    %c152 = arith.constant 152 : index
    %c0_48 = arith.constant 0 : index
    %99 = vector.load %arg11[%c152, %c0_48] : memref<216x512xf32, #tpu.memory_space<vmem>>, vector<8x512xf32>
    tpu.vector_store %arg11[%c152, %c0_48], %98 {strides = array<i32>} : memref<216x512xf32, #tpu.memory_space<vmem>>, vector<8x512xf32>,
    %c455_i32 = arith.constant 455 : i32
    %100 = tpu.dynamic_rotate %1 by %c455_i32 dim 1 : vector<8x512xf32>, i32 -> vector<8x512xf32>
    %c20 = arith.constant 20 : index
    %c0_49 = arith.constant 0 : index
    %101 = vector.load %arg3[%c20, %c0_49] : memref<27x512xf32, #tpu.memory_space<vmem>>, vector<1x512xf32>
    %102 = vector.broadcast %101 : vector<1x512xf32> to vector<8x512xf32>
    %103 = arith.mulf %100, %102 : vector<8x512xf32>
    %c160 = arith.constant 160 : index
    %c0_50 = arith.constant 0 : index
    %104 = vector.load %arg11[%c160, %c0_50] : memref<216x512xf32, #tpu.memory_space<vmem>>, vector<8x512xf32>
    tpu.vector_store %arg11[%c160, %c0_50], %103 {strides = array<i32>} : memref<216x512xf32, #tpu.memory_space<vmem>>, vector<8x512xf32>,
    %c449_i32 = arith.constant 449 : i32
    %105 = tpu.dynamic_rotate %1 by %c449_i32 dim 1 : vector<8x512xf32>, i32 -> vector<8x512xf32>
    %c21 = arith.constant 21 : index
    %c0_51 = arith.constant 0 : index
    %106 = vector.load %arg3[%c21, %c0_51] : memref<27x512xf32, #tpu.memory_space<vmem>>, vector<1x512xf32>
    %107 = vector.broadcast %106 : vector<1x512xf32> to vector<8x512xf32>
    %108 = arith.mulf %105, %107 : vector<8x512xf32>
    %c168 = arith.constant 168 : index
    %c0_52 = arith.constant 0 : index
    %109 = vector.load %arg11[%c168, %c0_52] : memref<216x512xf32, #tpu.memory_space<vmem>>, vector<8x512xf32>
    tpu.vector_store %arg11[%c168, %c0_52], %108 {strides = array<i32>} : memref<216x512xf32, #tpu.memory_space<vmem>>, vector<8x512xf32>,
    %c448_i32 = arith.constant 448 : i32
    %110 = tpu.dynamic_rotate %1 by %c448_i32 dim 1 : vector<8x512xf32>, i32 -> vector<8x512xf32>
    %c22 = arith.constant 22 : index
    %c0_53 = arith.constant 0 : index
    %111 = vector.load %arg3[%c22, %c0_53] : memref<27x512xf32, #tpu.memory_space<vmem>>, vector<1x512xf32>
    %112 = vector.broadcast %111 : vector<1x512xf32> to vector<8x512xf32>
    %113 = arith.mulf %110, %112 : vector<8x512xf32>
    %c176 = arith.constant 176 : index
    %c0_54 = arith.constant 0 : index
    %114 = vector.load %arg11[%c176, %c0_54] : memref<216x512xf32, #tpu.memory_space<vmem>>, vector<8x512xf32>
    tpu.vector_store %arg11[%c176, %c0_54], %113 {strides = array<i32>} : memref<216x512xf32, #tpu.memory_space<vmem>>, vector<8x512xf32>,
    %c447_i32 = arith.constant 447 : i32
    %115 = tpu.dynamic_rotate %1 by %c447_i32 dim 1 : vector<8x512xf32>, i32 -> vector<8x512xf32>
    %c23 = arith.constant 23 : index
    %c0_55 = arith.constant 0 : index
    %116 = vector.load %arg3[%c23, %c0_55] : memref<27x512xf32, #tpu.memory_space<vmem>>, vector<1x512xf32>
    %117 = vector.broadcast %116 : vector<1x512xf32> to vector<8x512xf32>
    %118 = arith.mulf %115, %117 : vector<8x512xf32>
    %c184 = arith.constant 184 : index
    %c0_56 = arith.constant 0 : index
    %119 = vector.load %arg11[%c184, %c0_56] : memref<216x512xf32, #tpu.memory_space<vmem>>, vector<8x512xf32>
    tpu.vector_store %arg11[%c184, %c0_56], %118 {strides = array<i32>} : memref<216x512xf32, #tpu.memory_space<vmem>>, vector<8x512xf32>,
    %c441_i32 = arith.constant 441 : i32
    %120 = tpu.dynamic_rotate %1 by %c441_i32 dim 1 : vector<8x512xf32>, i32 -> vector<8x512xf32>
    %c24_57 = arith.constant 24 : index
    %c0_58 = arith.constant 0 : index
    %121 = vector.load %arg3[%c24_57, %c0_58] : memref<27x512xf32, #tpu.memory_space<vmem>>, vector<1x512xf32>
    %122 = vector.broadcast %121 : vector<1x512xf32> to vector<8x512xf32>
    %123 = arith.mulf %120, %122 : vector<8x512xf32>
    %c192 = arith.constant 192 : index
    %c0_59 = arith.constant 0 : index
    %124 = vector.load %arg11[%c192, %c0_59] : memref<216x512xf32, #tpu.memory_space<vmem>>, vector<8x512xf32>
    tpu.vector_store %arg11[%c192, %c0_59], %123 {strides = array<i32>} : memref<216x512xf32, #tpu.memory_space<vmem>>, vector<8x512xf32>,
    %c440_i32 = arith.constant 440 : i32
    %125 = tpu.dynamic_rotate %1 by %c440_i32 dim 1 : vector<8x512xf32>, i32 -> vector<8x512xf32>
    %c25 = arith.constant 25 : index
    %c0_60 = arith.constant 0 : index
    %126 = vector.load %arg3[%c25, %c0_60] : memref<27x512xf32, #tpu.memory_space<vmem>>, vector<1x512xf32>
    %127 = vector.broadcast %126 : vector<1x512xf32> to vector<8x512xf32>
    %128 = arith.mulf %125, %127 : vector<8x512xf32>
    %c200 = arith.constant 200 : index
    %c0_61 = arith.constant 0 : index
    %129 = vector.load %arg11[%c200, %c0_61] : memref<216x512xf32, #tpu.memory_space<vmem>>, vector<8x512xf32>
    tpu.vector_store %arg11[%c200, %c0_61], %128 {strides = array<i32>} : memref<216x512xf32, #tpu.memory_space<vmem>>, vector<8x512xf32>,
    %c439_i32 = arith.constant 439 : i32
    %130 = tpu.dynamic_rotate %1 by %c439_i32 dim 1 : vector<8x512xf32>, i32 -> vector<8x512xf32>
    %c26 = arith.constant 26 : index
    %c0_62 = arith.constant 0 : index
    %131 = vector.load %arg3[%c26, %c0_62] : memref<27x512xf32, #tpu.memory_space<vmem>>, vector<1x512xf32>
    %132 = vector.broadcast %131 : vector<1x512xf32> to vector<8x512xf32>
    %133 = arith.mulf %130, %132 : vector<8x512xf32>
    %c208 = arith.constant 208 : index
    %c0_63 = arith.constant 0 : index
    %134 = vector.load %arg11[%c208, %c0_63] : memref<216x512xf32, #tpu.memory_space<vmem>>, vector<8x512xf32>
    tpu.vector_store %arg11[%c208, %c0_63], %133 {strides = array<i32>} : memref<216x512xf32, #tpu.memory_space<vmem>>, vector<8x512xf32>,
    %c0_64 = arith.constant 0 : index
    %c0_65 = arith.constant 0 : index
    %135 = vector.load %arg11[%c0_64, %c0_65] : memref<216x512xf32, #tpu.memory_space<vmem>>, vector<216x512xf32>
    %cst = arith.constant dense<0.000000e+00> : vector<8x512xf32>
    %136 = tpu.matmul %2, %135, %cst {dimension_numbers = #tpu.dot_dimension_numbers<[1], [0], [0], [1], [0, 0, 1, 1], [], []>} : vector<8x216xf32>, vector<216x512xf32>, vector<8x512xf32> -> vector<8x512xf32>
    %137 = vector.broadcast %3 : vector<8x1xf32> to vector<8x512xf32>
    %138 = arith.addf %136, %137 : vector<8x512xf32>
    %c73_i32_66 = arith.constant 73 : i32
    %139 = tpu.dynamic_rotate %138 by %c73_i32_66 dim 1 : vector<8x512xf32>, i32 -> vector<8x512xf32>
    %c0_67 = arith.constant 0 : index
    %c0_68 = arith.constant 0 : index
    %140 = vector.load %arg3[%c0_67, %c0_68] : memref<27x512xf32, #tpu.memory_space<vmem>>, vector<1x512xf32>
    %141 = vector.broadcast %140 : vector<1x512xf32> to vector<8x512xf32>
    %142 = arith.mulf %139, %141 : vector<8x512xf32>
    %c0_69 = arith.constant 0 : index
    %c0_70 = arith.constant 0 : index
    %143 = vector.load %arg7[%c0_69, %c0_70] : memref<8x27xf32, #tpu.memory_space<vmem>>, vector<8x1xf32>
    %144 = vector.broadcast %143 : vector<8x1xf32> to vector<8x512xf32>
    %145 = arith.mulf %142, %144 : vector<8x512xf32>
    %c72_i32_71 = arith.constant 72 : i32
    %146 = tpu.dynamic_rotate %138 by %c72_i32_71 dim 1 : vector<8x512xf32>, i32 -> vector<8x512xf32>
    %c1_72 = arith.constant 1 : index
    %c0_73 = arith.constant 0 : index
    %147 = vector.load %arg3[%c1_72, %c0_73] : memref<27x512xf32, #tpu.memory_space<vmem>>, vector<1x512xf32>
    %148 = vector.broadcast %147 : vector<1x512xf32> to vector<8x512xf32>
    %149 = arith.mulf %146, %148 : vector<8x512xf32>
    %c0_74 = arith.constant 0 : index
    %c1_75 = arith.constant 1 : index
    %150 = vector.load %arg7[%c0_74, %c1_75] : memref<8x27xf32, #tpu.memory_space<vmem>>, vector<8x1xf32>
    %151 = vector.broadcast %150 : vector<8x1xf32> to vector<8x512xf32>
    %152 = arith.mulf %149, %151 : vector<8x512xf32>
    %153 = arith.addf %145, %152 : vector<8x512xf32>
    %c71_i32_76 = arith.constant 71 : i32
    %154 = tpu.dynamic_rotate %138 by %c71_i32_76 dim 1 : vector<8x512xf32>, i32 -> vector<8x512xf32>
    %c2_77 = arith.constant 2 : index
    %c0_78 = arith.constant 0 : index
    %155 = vector.load %arg3[%c2_77, %c0_78] : memref<27x512xf32, #tpu.memory_space<vmem>>, vector<1x512xf32>
    %156 = vector.broadcast %155 : vector<1x512xf32> to vector<8x512xf32>
    %157 = arith.mulf %154, %156 : vector<8x512xf32>
    %c0_79 = arith.constant 0 : index
    %c2_80 = arith.constant 2 : index
    %158 = vector.load %arg7[%c0_79, %c2_80] : memref<8x27xf32, #tpu.memory_space<vmem>>, vector<8x1xf32>
    %159 = vector.broadcast %158 : vector<8x1xf32> to vector<8x512xf32>
    %160 = arith.mulf %157, %159 : vector<8x512xf32>
    %161 = arith.addf %153, %160 : vector<8x512xf32>
    %c65_i32_81 = arith.constant 65 : i32
    %162 = tpu.dynamic_rotate %138 by %c65_i32_81 dim 1 : vector<8x512xf32>, i32 -> vector<8x512xf32>
    %c3_82 = arith.constant 3 : index
    %c0_83 = arith.constant 0 : index
    %163 = vector.load %arg3[%c3_82, %c0_83] : memref<27x512xf32, #tpu.memory_space<vmem>>, vector<1x512xf32>
    %164 = vector.broadcast %163 : vector<1x512xf32> to vector<8x512xf32>
    %165 = arith.mulf %162, %164 : vector<8x512xf32>
    %c0_84 = arith.constant 0 : index
    %c3_85 = arith.constant 3 : index
    %166 = vector.load %arg7[%c0_84, %c3_85] : memref<8x27xf32, #tpu.memory_space<vmem>>, vector<8x1xf32>
    %167 = vector.broadcast %166 : vector<8x1xf32> to vector<8x512xf32>
    %168 = arith.mulf %165, %167 : vector<8x512xf32>
    %169 = arith.addf %161, %168 : vector<8x512xf32>
    %c64_i32_86 = arith.constant 64 : i32
    %170 = tpu.dynamic_rotate %138 by %c64_i32_86 dim 1 : vector<8x512xf32>, i32 -> vector<8x512xf32>
    %c4_87 = arith.constant 4 : index
    %c0_88 = arith.constant 0 : index
    %171 = vector.load %arg3[%c4_87, %c0_88] : memref<27x512xf32, #tpu.memory_space<vmem>>, vector<1x512xf32>
    %172 = vector.broadcast %171 : vector<1x512xf32> to vector<8x512xf32>
    %173 = arith.mulf %170, %172 : vector<8x512xf32>
    %c0_89 = arith.constant 0 : index
    %c4_90 = arith.constant 4 : index
    %174 = vector.load %arg7[%c0_89, %c4_90] : memref<8x27xf32, #tpu.memory_space<vmem>>, vector<8x1xf32>
    %175 = vector.broadcast %174 : vector<8x1xf32> to vector<8x512xf32>
    %176 = arith.mulf %173, %175 : vector<8x512xf32>
    %177 = arith.addf %169, %176 : vector<8x512xf32>
    %c63_i32_91 = arith.constant 63 : i32
    %178 = tpu.dynamic_rotate %138 by %c63_i32_91 dim 1 : vector<8x512xf32>, i32 -> vector<8x512xf32>
    %c5_92 = arith.constant 5 : index
    %c0_93 = arith.constant 0 : index
    %179 = vector.load %arg3[%c5_92, %c0_93] : memref<27x512xf32, #tpu.memory_space<vmem>>, vector<1x512xf32>
    %180 = vector.broadcast %179 : vector<1x512xf32> to vector<8x512xf32>
    %181 = arith.mulf %178, %180 : vector<8x512xf32>
    %c0_94 = arith.constant 0 : index
    %c5_95 = arith.constant 5 : index
    %182 = vector.load %arg7[%c0_94, %c5_95] : memref<8x27xf32, #tpu.memory_space<vmem>>, vector<8x1xf32>
    %183 = vector.broadcast %182 : vector<8x1xf32> to vector<8x512xf32>
    %184 = arith.mulf %181, %183 : vector<8x512xf32>
    %185 = arith.addf %177, %184 : vector<8x512xf32>
    %c57_i32_96 = arith.constant 57 : i32
    %186 = tpu.dynamic_rotate %138 by %c57_i32_96 dim 1 : vector<8x512xf32>, i32 -> vector<8x512xf32>
    %c6_97 = arith.constant 6 : index
    %c0_98 = arith.constant 0 : index
    %187 = vector.load %arg3[%c6_97, %c0_98] : memref<27x512xf32, #tpu.memory_space<vmem>>, vector<1x512xf32>
    %188 = vector.broadcast %187 : vector<1x512xf32> to vector<8x512xf32>
    %189 = arith.mulf %186, %188 : vector<8x512xf32>
    %c0_99 = arith.constant 0 : index
    %c6_100 = arith.constant 6 : index
    %190 = vector.load %arg7[%c0_99, %c6_100] : memref<8x27xf32, #tpu.memory_space<vmem>>, vector<8x1xf32>
    %191 = vector.broadcast %190 : vector<8x1xf32> to vector<8x512xf32>
    %192 = arith.mulf %189, %191 : vector<8x512xf32>
    %193 = arith.addf %185, %192 : vector<8x512xf32>
    %c56_i32_101 = arith.constant 56 : i32
    %194 = tpu.dynamic_rotate %138 by %c56_i32_101 dim 1 : vector<8x512xf32>, i32 -> vector<8x512xf32>
    %c7_102 = arith.constant 7 : index
    %c0_103 = arith.constant 0 : index
    %195 = vector.load %arg3[%c7_102, %c0_103] : memref<27x512xf32, #tpu.memory_space<vmem>>, vector<1x512xf32>
    %196 = vector.broadcast %195 : vector<1x512xf32> to vector<8x512xf32>
    %197 = arith.mulf %194, %196 : vector<8x512xf32>
    %c0_104 = arith.constant 0 : index
    %c7_105 = arith.constant 7 : index
    %198 = vector.load %arg7[%c0_104, %c7_105] : memref<8x27xf32, #tpu.memory_space<vmem>>, vector<8x1xf32>
    %199 = vector.broadcast %198 : vector<8x1xf32> to vector<8x512xf32>
    %200 = arith.mulf %197, %199 : vector<8x512xf32>
    %201 = arith.addf %193, %200 : vector<8x512xf32>
    %c55_i32_106 = arith.constant 55 : i32
    %202 = tpu.dynamic_rotate %138 by %c55_i32_106 dim 1 : vector<8x512xf32>, i32 -> vector<8x512xf32>
    %c8_107 = arith.constant 8 : index
    %c0_108 = arith.constant 0 : index
    %203 = vector.load %arg3[%c8_107, %c0_108] : memref<27x512xf32, #tpu.memory_space<vmem>>, vector<1x512xf32>
    %204 = vector.broadcast %203 : vector<1x512xf32> to vector<8x512xf32>
    %205 = arith.mulf %202, %204 : vector<8x512xf32>
    %c0_109 = arith.constant 0 : index
    %c8_110 = arith.constant 8 : index
    %206 = vector.load %arg7[%c0_109, %c8_110] : memref<8x27xf32, #tpu.memory_space<vmem>>, vector<8x1xf32>
    %207 = vector.broadcast %206 : vector<8x1xf32> to vector<8x512xf32>
    %208 = arith.mulf %205, %207 : vector<8x512xf32>
    %209 = arith.addf %201, %208 : vector<8x512xf32>
    %c9_i32_111 = arith.constant 9 : i32
    %210 = tpu.dynamic_rotate %138 by %c9_i32_111 dim 1 : vector<8x512xf32>, i32 -> vector<8x512xf32>
    %c9_112 = arith.constant 9 : index
    %c0_113 = arith.constant 0 : index
    %211 = vector.load %arg3[%c9_112, %c0_113] : memref<27x512xf32, #tpu.memory_space<vmem>>, vector<1x512xf32>
    %212 = vector.broadcast %211 : vector<1x512xf32> to vector<8x512xf32>
    %213 = arith.mulf %210, %212 : vector<8x512xf32>
    %c0_114 = arith.constant 0 : index
    %c9_115 = arith.constant 9 : index
    %214 = vector.load %arg7[%c0_114, %c9_115] : memref<8x27xf32, #tpu.memory_space<vmem>>, vector<8x1xf32>
    %215 = vector.broadcast %214 : vector<8x1xf32> to vector<8x512xf32>
    %216 = arith.mulf %213, %215 : vector<8x512xf32>
    %217 = arith.addf %209, %216 : vector<8x512xf32>
    %c8_i32_116 = arith.constant 8 : i32
    %218 = tpu.dynamic_rotate %138 by %c8_i32_116 dim 1 : vector<8x512xf32>, i32 -> vector<8x512xf32>
    %c10_117 = arith.constant 10 : index
    %c0_118 = arith.constant 0 : index
    %219 = vector.load %arg3[%c10_117, %c0_118] : memref<27x512xf32, #tpu.memory_space<vmem>>, vector<1x512xf32>
    %220 = vector.broadcast %219 : vector<1x512xf32> to vector<8x512xf32>
    %221 = arith.mulf %218, %220 : vector<8x512xf32>
    %c0_119 = arith.constant 0 : index
    %c10_120 = arith.constant 10 : index
    %222 = vector.load %arg7[%c0_119, %c10_120] : memref<8x27xf32, #tpu.memory_space<vmem>>, vector<8x1xf32>
    %223 = vector.broadcast %222 : vector<8x1xf32> to vector<8x512xf32>
    %224 = arith.mulf %221, %223 : vector<8x512xf32>
    %225 = arith.addf %217, %224 : vector<8x512xf32>
    %c7_i32_121 = arith.constant 7 : i32
    %226 = tpu.dynamic_rotate %138 by %c7_i32_121 dim 1 : vector<8x512xf32>, i32 -> vector<8x512xf32>
    %c11_122 = arith.constant 11 : index
    %c0_123 = arith.constant 0 : index
    %227 = vector.load %arg3[%c11_122, %c0_123] : memref<27x512xf32, #tpu.memory_space<vmem>>, vector<1x512xf32>
    %228 = vector.broadcast %227 : vector<1x512xf32> to vector<8x512xf32>
    %229 = arith.mulf %226, %228 : vector<8x512xf32>
    %c0_124 = arith.constant 0 : index
    %c11_125 = arith.constant 11 : index
    %230 = vector.load %arg7[%c0_124, %c11_125] : memref<8x27xf32, #tpu.memory_space<vmem>>, vector<8x1xf32>
    %231 = vector.broadcast %230 : vector<8x1xf32> to vector<8x512xf32>
    %232 = arith.mulf %229, %231 : vector<8x512xf32>
    %233 = arith.addf %225, %232 : vector<8x512xf32>
    %c1_i32_126 = arith.constant 1 : i32
    %234 = tpu.dynamic_rotate %138 by %c1_i32_126 dim 1 : vector<8x512xf32>, i32 -> vector<8x512xf32>
    %c12_127 = arith.constant 12 : index
    %c0_128 = arith.constant 0 : index
    %235 = vector.load %arg3[%c12_127, %c0_128] : memref<27x512xf32, #tpu.memory_space<vmem>>, vector<1x512xf32>
    %236 = vector.broadcast %235 : vector<1x512xf32> to vector<8x512xf32>
    %237 = arith.mulf %234, %236 : vector<8x512xf32>
    %c0_129 = arith.constant 0 : index
    %c12_130 = arith.constant 12 : index
    %238 = vector.load %arg7[%c0_129, %c12_130] : memref<8x27xf32, #tpu.memory_space<vmem>>, vector<8x1xf32>
    %239 = vector.broadcast %238 : vector<8x1xf32> to vector<8x512xf32>
    %240 = arith.mulf %237, %239 : vector<8x512xf32>
    %241 = arith.addf %233, %240 : vector<8x512xf32>
    %c0_131 = arith.constant 0 : index
    %c13 = arith.constant 13 : index
    %242 = vector.load %arg7[%c0_131, %c13] : memref<8x27xf32, #tpu.memory_space<vmem>>, vector<8x1xf32>
    %243 = vector.broadcast %242 : vector<8x1xf32> to vector<8x512xf32>
    %244 = arith.mulf %138, %243 : vector<8x512xf32>
    %245 = arith.addf %241, %244 : vector<8x512xf32>
    %c511_i32_132 = arith.constant 511 : i32
    %246 = tpu.dynamic_rotate %138 by %c511_i32_132 dim 1 : vector<8x512xf32>, i32 -> vector<8x512xf32>
    %c14_133 = arith.constant 14 : index
    %c0_134 = arith.constant 0 : index
    %247 = vector.load %arg3[%c14_133, %c0_134] : memref<27x512xf32, #tpu.memory_space<vmem>>, vector<1x512xf32>
    %248 = vector.broadcast %247 : vector<1x512xf32> to vector<8x512xf32>
    %249 = arith.mulf %246, %248 : vector<8x512xf32>
    %c0_135 = arith.constant 0 : index
    %c14_136 = arith.constant 14 : index
    %250 = vector.load %arg7[%c0_135, %c14_136] : memref<8x27xf32, #tpu.memory_space<vmem>>, vector<8x1xf32>
    %251 = vector.broadcast %250 : vector<8x1xf32> to vector<8x512xf32>
    %252 = arith.mulf %249, %251 : vector<8x512xf32>
    %253 = arith.addf %245, %252 : vector<8x512xf32>
    %c505_i32_137 = arith.constant 505 : i32
    %254 = tpu.dynamic_rotate %138 by %c505_i32_137 dim 1 : vector<8x512xf32>, i32 -> vector<8x512xf32>
    %c15_138 = arith.constant 15 : index
    %c0_139 = arith.constant 0 : index
    %255 = vector.load %arg3[%c15_138, %c0_139] : memref<27x512xf32, #tpu.memory_space<vmem>>, vector<1x512xf32>
    %256 = vector.broadcast %255 : vector<1x512xf32> to vector<8x512xf32>
    %257 = arith.mulf %254, %256 : vector<8x512xf32>
    %c0_140 = arith.constant 0 : index
    %c15_141 = arith.constant 15 : index
    %258 = vector.load %arg7[%c0_140, %c15_141] : memref<8x27xf32, #tpu.memory_space<vmem>>, vector<8x1xf32>
    %259 = vector.broadcast %258 : vector<8x1xf32> to vector<8x512xf32>
    %260 = arith.mulf %257, %259 : vector<8x512xf32>
    %261 = arith.addf %253, %260 : vector<8x512xf32>
    %c504_i32_142 = arith.constant 504 : i32
    %262 = tpu.dynamic_rotate %138 by %c504_i32_142 dim 1 : vector<8x512xf32>, i32 -> vector<8x512xf32>
    %c16_143 = arith.constant 16 : index
    %c0_144 = arith.constant 0 : index
    %263 = vector.load %arg3[%c16_143, %c0_144] : memref<27x512xf32, #tpu.memory_space<vmem>>, vector<1x512xf32>
    %264 = vector.broadcast %263 : vector<1x512xf32> to vector<8x512xf32>
    %265 = arith.mulf %262, %264 : vector<8x512xf32>
    %c0_145 = arith.constant 0 : index
    %c16_146 = arith.constant 16 : index
    %266 = vector.load %arg7[%c0_145, %c16_146] : memref<8x27xf32, #tpu.memory_space<vmem>>, vector<8x1xf32>
    %267 = vector.broadcast %266 : vector<8x1xf32> to vector<8x512xf32>
    %268 = arith.mulf %265, %267 : vector<8x512xf32>
    %269 = arith.addf %261, %268 : vector<8x512xf32>
    %c503_i32_147 = arith.constant 503 : i32
    %270 = tpu.dynamic_rotate %138 by %c503_i32_147 dim 1 : vector<8x512xf32>, i32 -> vector<8x512xf32>
    %c17_148 = arith.constant 17 : index
    %c0_149 = arith.constant 0 : index
    %271 = vector.load %arg3[%c17_148, %c0_149] : memref<27x512xf32, #tpu.memory_space<vmem>>, vector<1x512xf32>
    %272 = vector.broadcast %271 : vector<1x512xf32> to vector<8x512xf32>
    %273 = arith.mulf %270, %272 : vector<8x512xf32>
    %c0_150 = arith.constant 0 : index
    %c17_151 = arith.constant 17 : index
    %274 = vector.load %arg7[%c0_150, %c17_151] : memref<8x27xf32, #tpu.memory_space<vmem>>, vector<8x1xf32>
    %275 = vector.broadcast %274 : vector<8x1xf32> to vector<8x512xf32>
    %276 = arith.mulf %273, %275 : vector<8x512xf32>
    %277 = arith.addf %269, %276 : vector<8x512xf32>
    %c457_i32_152 = arith.constant 457 : i32
    %278 = tpu.dynamic_rotate %138 by %c457_i32_152 dim 1 : vector<8x512xf32>, i32 -> vector<8x512xf32>
    %c18_153 = arith.constant 18 : index
    %c0_154 = arith.constant 0 : index
    %279 = vector.load %arg3[%c18_153, %c0_154] : memref<27x512xf32, #tpu.memory_space<vmem>>, vector<1x512xf32>
    %280 = vector.broadcast %279 : vector<1x512xf32> to vector<8x512xf32>
    %281 = arith.mulf %278, %280 : vector<8x512xf32>
    %c0_155 = arith.constant 0 : index
    %c18_156 = arith.constant 18 : index
    %282 = vector.load %arg7[%c0_155, %c18_156] : memref<8x27xf32, #tpu.memory_space<vmem>>, vector<8x1xf32>
    %283 = vector.broadcast %282 : vector<8x1xf32> to vector<8x512xf32>
    %284 = arith.mulf %281, %283 : vector<8x512xf32>
    %285 = arith.addf %277, %284 : vector<8x512xf32>
    %c456_i32_157 = arith.constant 456 : i32
    %286 = tpu.dynamic_rotate %138 by %c456_i32_157 dim 1 : vector<8x512xf32>, i32 -> vector<8x512xf32>
    %c19_158 = arith.constant 19 : index
    %c0_159 = arith.constant 0 : index
    %287 = vector.load %arg3[%c19_158, %c0_159] : memref<27x512xf32, #tpu.memory_space<vmem>>, vector<1x512xf32>
    %288 = vector.broadcast %287 : vector<1x512xf32> to vector<8x512xf32>
    %289 = arith.mulf %286, %288 : vector<8x512xf32>
    %c0_160 = arith.constant 0 : index
    %c19_161 = arith.constant 19 : index
    %290 = vector.load %arg7[%c0_160, %c19_161] : memref<8x27xf32, #tpu.memory_space<vmem>>, vector<8x1xf32>
    %291 = vector.broadcast %290 : vector<8x1xf32> to vector<8x512xf32>
    %292 = arith.mulf %289, %291 : vector<8x512xf32>
    %293 = arith.addf %285, %292 : vector<8x512xf32>
    %c455_i32_162 = arith.constant 455 : i32
    %294 = tpu.dynamic_rotate %138 by %c455_i32_162 dim 1 : vector<8x512xf32>, i32 -> vector<8x512xf32>
    %c20_163 = arith.constant 20 : index
    %c0_164 = arith.constant 0 : index
    %295 = vector.load %arg3[%c20_163, %c0_164] : memref<27x512xf32, #tpu.memory_space<vmem>>, vector<1x512xf32>
    %296 = vector.broadcast %295 : vector<1x512xf32> to vector<8x512xf32>
    %297 = arith.mulf %294, %296 : vector<8x512xf32>
    %c0_165 = arith.constant 0 : index
    %c20_166 = arith.constant 20 : index
    %298 = vector.load %arg7[%c0_165, %c20_166] : memref<8x27xf32, #tpu.memory_space<vmem>>, vector<8x1xf32>
    %299 = vector.broadcast %298 : vector<8x1xf32> to vector<8x512xf32>
    %300 = arith.mulf %297, %299 : vector<8x512xf32>
    %301 = arith.addf %293, %300 : vector<8x512xf32>
    %c449_i32_167 = arith.constant 449 : i32
    %302 = tpu.dynamic_rotate %138 by %c449_i32_167 dim 1 : vector<8x512xf32>, i32 -> vector<8x512xf32>
    %c21_168 = arith.constant 21 : index
    %c0_169 = arith.constant 0 : index
    %303 = vector.load %arg3[%c21_168, %c0_169] : memref<27x512xf32, #tpu.memory_space<vmem>>, vector<1x512xf32>
    %304 = vector.broadcast %303 : vector<1x512xf32> to vector<8x512xf32>
    %305 = arith.mulf %302, %304 : vector<8x512xf32>
    %c0_170 = arith.constant 0 : index
    %c21_171 = arith.constant 21 : index
    %306 = vector.load %arg7[%c0_170, %c21_171] : memref<8x27xf32, #tpu.memory_space<vmem>>, vector<8x1xf32>
    %307 = vector.broadcast %306 : vector<8x1xf32> to vector<8x512xf32>
    %308 = arith.mulf %305, %307 : vector<8x512xf32>
    %309 = arith.addf %301, %308 : vector<8x512xf32>
    %c448_i32_172 = arith.constant 448 : i32
    %310 = tpu.dynamic_rotate %138 by %c448_i32_172 dim 1 : vector<8x512xf32>, i32 -> vector<8x512xf32>
    %c22_173 = arith.constant 22 : index
    %c0_174 = arith.constant 0 : index
    %311 = vector.load %arg3[%c22_173, %c0_174] : memref<27x512xf32, #tpu.memory_space<vmem>>, vector<1x512xf32>
    %312 = vector.broadcast %311 : vector<1x512xf32> to vector<8x512xf32>
    %313 = arith.mulf %310, %312 : vector<8x512xf32>
    %c0_175 = arith.constant 0 : index
    %c22_176 = arith.constant 22 : index
    %314 = vector.load %arg7[%c0_175, %c22_176] : memref<8x27xf32, #tpu.memory_space<vmem>>, vector<8x1xf32>
    %315 = vector.broadcast %314 : vector<8x1xf32> to vector<8x512xf32>
    %316 = arith.mulf %313, %315 : vector<8x512xf32>
    %317 = arith.addf %309, %316 : vector<8x512xf32>
    %c447_i32_177 = arith.constant 447 : i32
    %318 = tpu.dynamic_rotate %138 by %c447_i32_177 dim 1 : vector<8x512xf32>, i32 -> vector<8x512xf32>
    %c23_178 = arith.constant 23 : index
    %c0_179 = arith.constant 0 : index
    %319 = vector.load %arg3[%c23_178, %c0_179] : memref<27x512xf32, #tpu.memory_space<vmem>>, vector<1x512xf32>
    %320 = vector.broadcast %319 : vector<1x512xf32> to vector<8x512xf32>
    %321 = arith.mulf %318, %320 : vector<8x512xf32>
    %c0_180 = arith.constant 0 : index
    %c23_181 = arith.constant 23 : index
    %322 = vector.load %arg7[%c0_180, %c23_181] : memref<8x27xf32, #tpu.memory_space<vmem>>, vector<8x1xf32>
    %323 = vector.broadcast %322 : vector<8x1xf32> to vector<8x512xf32>
    %324 = arith.mulf %321, %323 : vector<8x512xf32>
    %325 = arith.addf %317, %324 : vector<8x512xf32>
    %c441_i32_182 = arith.constant 441 : i32
    %326 = tpu.dynamic_rotate %138 by %c441_i32_182 dim 1 : vector<8x512xf32>, i32 -> vector<8x512xf32>
    %c24_183 = arith.constant 24 : index
    %c0_184 = arith.constant 0 : index
    %327 = vector.load %arg3[%c24_183, %c0_184] : memref<27x512xf32, #tpu.memory_space<vmem>>, vector<1x512xf32>
    %328 = vector.broadcast %327 : vector<1x512xf32> to vector<8x512xf32>
    %329 = arith.mulf %326, %328 : vector<8x512xf32>
    %c0_185 = arith.constant 0 : index
    %c24_186 = arith.constant 24 : index
    %330 = vector.load %arg7[%c0_185, %c24_186] : memref<8x27xf32, #tpu.memory_space<vmem>>, vector<8x1xf32>
    %331 = vector.broadcast %330 : vector<8x1xf32> to vector<8x512xf32>
    %332 = arith.mulf %329, %331 : vector<8x512xf32>
    %333 = arith.addf %325, %332 : vector<8x512xf32>
    %c440_i32_187 = arith.constant 440 : i32
    %334 = tpu.dynamic_rotate %138 by %c440_i32_187 dim 1 : vector<8x512xf32>, i32 -> vector<8x512xf32>
    %c25_188 = arith.constant 25 : index
    %c0_189 = arith.constant 0 : index
    %335 = vector.load %arg3[%c25_188, %c0_189] : memref<27x512xf32, #tpu.memory_space<vmem>>, vector<1x512xf32>
    %336 = vector.broadcast %335 : vector<1x512xf32> to vector<8x512xf32>
    %337 = arith.mulf %334, %336 : vector<8x512xf32>
    %c0_190 = arith.constant 0 : index
    %c25_191 = arith.constant 25 : index
    %338 = vector.load %arg7[%c0_190, %c25_191] : memref<8x27xf32, #tpu.memory_space<vmem>>, vector<8x1xf32>
    %339 = vector.broadcast %338 : vector<8x1xf32> to vector<8x512xf32>
    %340 = arith.mulf %337, %339 : vector<8x512xf32>
    %341 = arith.addf %333, %340 : vector<8x512xf32>
    %c439_i32_192 = arith.constant 439 : i32
    %342 = tpu.dynamic_rotate %138 by %c439_i32_192 dim 1 : vector<8x512xf32>, i32 -> vector<8x512xf32>
    %c26_193 = arith.constant 26 : index
    %c0_194 = arith.constant 0 : index
    %343 = vector.load %arg3[%c26_193, %c0_194] : memref<27x512xf32, #tpu.memory_space<vmem>>, vector<1x512xf32>
    %344 = vector.broadcast %343 : vector<1x512xf32> to vector<8x512xf32>
    %345 = arith.mulf %342, %344 : vector<8x512xf32>
    %c0_195 = arith.constant 0 : index
    %c26_196 = arith.constant 26 : index
    %346 = vector.load %arg7[%c0_195, %c26_196] : memref<8x27xf32, #tpu.memory_space<vmem>>, vector<8x1xf32>
    %347 = vector.broadcast %346 : vector<8x1xf32> to vector<8x512xf32>
    %348 = arith.mulf %345, %347 : vector<8x512xf32>
    %349 = arith.addf %341, %348 : vector<8x512xf32>
    %c0_197 = arith.constant 0 : index
    %c0_198 = arith.constant 0 : index
    %c0_199 = arith.constant 0 : index
    %350 = vector.load %arg1[%c0_197, %c0_198, %c0_199] : memref<1x8x512xf32, #tpu.memory_space<vmem>>, vector<1x8x512xf32>
    %351 = vector.shape_cast %350 : vector<1x8x512xf32> to vector<8x512xf32>
    %c73_i32_200 = arith.constant 73 : i32
    %352 = tpu.dynamic_rotate %351 by %c73_i32_200 dim 1 : vector<8x512xf32>, i32 -> vector<8x512xf32>
    %c0_201 = arith.constant 0 : index
    %c0_202 = arith.constant 0 : index
    %353 = vector.load %arg3[%c0_201, %c0_202] : memref<27x512xf32, #tpu.memory_space<vmem>>, vector<1x512xf32>
    %354 = vector.broadcast %353 : vector<1x512xf32> to vector<8x512xf32>
    %355 = arith.mulf %352, %354 : vector<8x512xf32>
    %c0_203 = arith.constant 0 : index
    %c0_204 = arith.constant 0 : index
    %356 = vector.load %arg6[%c0_203, %c0_204] : memref<8x27xf32, #tpu.memory_space<vmem>>, vector<8x1xf32>
    %357 = vector.broadcast %356 : vector<8x1xf32> to vector<8x512xf32>
    %358 = arith.mulf %355, %357 : vector<8x512xf32>
    %c72_i32_205 = arith.constant 72 : i32
    %359 = tpu.dynamic_rotate %351 by %c72_i32_205 dim 1 : vector<8x512xf32>, i32 -> vector<8x512xf32>
    %c1_206 = arith.constant 1 : index
    %c0_207 = arith.constant 0 : index
    %360 = vector.load %arg3[%c1_206, %c0_207] : memref<27x512xf32, #tpu.memory_space<vmem>>, vector<1x512xf32>
    %361 = vector.broadcast %360 : vector<1x512xf32> to vector<8x512xf32>
    %362 = arith.mulf %359, %361 : vector<8x512xf32>
    %c0_208 = arith.constant 0 : index
    %c1_209 = arith.constant 1 : index
    %363 = vector.load %arg6[%c0_208, %c1_209] : memref<8x27xf32, #tpu.memory_space<vmem>>, vector<8x1xf32>
    %364 = vector.broadcast %363 : vector<8x1xf32> to vector<8x512xf32>
    %365 = arith.mulf %362, %364 : vector<8x512xf32>
    %366 = arith.addf %358, %365 : vector<8x512xf32>
    %c71_i32_210 = arith.constant 71 : i32
    %367 = tpu.dynamic_rotate %351 by %c71_i32_210 dim 1 : vector<8x512xf32>, i32 -> vector<8x512xf32>
    %c2_211 = arith.constant 2 : index
    %c0_212 = arith.constant 0 : index
    %368 = vector.load %arg3[%c2_211, %c0_212] : memref<27x512xf32, #tpu.memory_space<vmem>>, vector<1x512xf32>
    %369 = vector.broadcast %368 : vector<1x512xf32> to vector<8x512xf32>
    %370 = arith.mulf %367, %369 : vector<8x512xf32>
    %c0_213 = arith.constant 0 : index
    %c2_214 = arith.constant 2 : index
    %371 = vector.load %arg6[%c0_213, %c2_214] : memref<8x27xf32, #tpu.memory_space<vmem>>, vector<8x1xf32>
    %372 = vector.broadcast %371 : vector<8x1xf32> to vector<8x512xf32>
    %373 = arith.mulf %370, %372 : vector<8x512xf32>
    %374 = arith.addf %366, %373 : vector<8x512xf32>
    %c65_i32_215 = arith.constant 65 : i32
    %375 = tpu.dynamic_rotate %351 by %c65_i32_215 dim 1 : vector<8x512xf32>, i32 -> vector<8x512xf32>
    %c3_216 = arith.constant 3 : index
    %c0_217 = arith.constant 0 : index
    %376 = vector.load %arg3[%c3_216, %c0_217] : memref<27x512xf32, #tpu.memory_space<vmem>>, vector<1x512xf32>
    %377 = vector.broadcast %376 : vector<1x512xf32> to vector<8x512xf32>
    %378 = arith.mulf %375, %377 : vector<8x512xf32>
    %c0_218 = arith.constant 0 : index
    %c3_219 = arith.constant 3 : index
    %379 = vector.load %arg6[%c0_218, %c3_219] : memref<8x27xf32, #tpu.memory_space<vmem>>, vector<8x1xf32>
    %380 = vector.broadcast %379 : vector<8x1xf32> to vector<8x512xf32>
    %381 = arith.mulf %378, %380 : vector<8x512xf32>
    %382 = arith.addf %374, %381 : vector<8x512xf32>
    %c64_i32_220 = arith.constant 64 : i32
    %383 = tpu.dynamic_rotate %351 by %c64_i32_220 dim 1 : vector<8x512xf32>, i32 -> vector<8x512xf32>
    %c4_221 = arith.constant 4 : index
    %c0_222 = arith.constant 0 : index
    %384 = vector.load %arg3[%c4_221, %c0_222] : memref<27x512xf32, #tpu.memory_space<vmem>>, vector<1x512xf32>
    %385 = vector.broadcast %384 : vector<1x512xf32> to vector<8x512xf32>
    %386 = arith.mulf %383, %385 : vector<8x512xf32>
    %c0_223 = arith.constant 0 : index
    %c4_224 = arith.constant 4 : index
    %387 = vector.load %arg6[%c0_223, %c4_224] : memref<8x27xf32, #tpu.memory_space<vmem>>, vector<8x1xf32>
    %388 = vector.broadcast %387 : vector<8x1xf32> to vector<8x512xf32>
    %389 = arith.mulf %386, %388 : vector<8x512xf32>
    %390 = arith.addf %382, %389 : vector<8x512xf32>
    %c63_i32_225 = arith.constant 63 : i32
    %391 = tpu.dynamic_rotate %351 by %c63_i32_225 dim 1 : vector<8x512xf32>, i32 -> vector<8x512xf32>
    %c5_226 = arith.constant 5 : index
    %c0_227 = arith.constant 0 : index
    %392 = vector.load %arg3[%c5_226, %c0_227] : memref<27x512xf32, #tpu.memory_space<vmem>>, vector<1x512xf32>
    %393 = vector.broadcast %392 : vector<1x512xf32> to vector<8x512xf32>
    %394 = arith.mulf %391, %393 : vector<8x512xf32>
    %c0_228 = arith.constant 0 : index
    %c5_229 = arith.constant 5 : index
    %395 = vector.load %arg6[%c0_228, %c5_229] : memref<8x27xf32, #tpu.memory_space<vmem>>, vector<8x1xf32>
    %396 = vector.broadcast %395 : vector<8x1xf32> to vector<8x512xf32>
    %397 = arith.mulf %394, %396 : vector<8x512xf32>
    %398 = arith.addf %390, %397 : vector<8x512xf32>
    %c57_i32_230 = arith.constant 57 : i32
    %399 = tpu.dynamic_rotate %351 by %c57_i32_230 dim 1 : vector<8x512xf32>, i32 -> vector<8x512xf32>
    %c6_231 = arith.constant 6 : index
    %c0_232 = arith.constant 0 : index
    %400 = vector.load %arg3[%c6_231, %c0_232] : memref<27x512xf32, #tpu.memory_space<vmem>>, vector<1x512xf32>
    %401 = vector.broadcast %400 : vector<1x512xf32> to vector<8x512xf32>
    %402 = arith.mulf %399, %401 : vector<8x512xf32>
    %c0_233 = arith.constant 0 : index
    %c6_234 = arith.constant 6 : index
    %403 = vector.load %arg6[%c0_233, %c6_234] : memref<8x27xf32, #tpu.memory_space<vmem>>, vector<8x1xf32>
    %404 = vector.broadcast %403 : vector<8x1xf32> to vector<8x512xf32>
    %405 = arith.mulf %402, %404 : vector<8x512xf32>
    %406 = arith.addf %398, %405 : vector<8x512xf32>
    %c56_i32_235 = arith.constant 56 : i32
    %407 = tpu.dynamic_rotate %351 by %c56_i32_235 dim 1 : vector<8x512xf32>, i32 -> vector<8x512xf32>
    %c7_236 = arith.constant 7 : index
    %c0_237 = arith.constant 0 : index
    %408 = vector.load %arg3[%c7_236, %c0_237] : memref<27x512xf32, #tpu.memory_space<vmem>>, vector<1x512xf32>
    %409 = vector.broadcast %408 : vector<1x512xf32> to vector<8x512xf32>
    %410 = arith.mulf %407, %409 : vector<8x512xf32>
    %c0_238 = arith.constant 0 : index
    %c7_239 = arith.constant 7 : index
    %411 = vector.load %arg6[%c0_238, %c7_239] : memref<8x27xf32, #tpu.memory_space<vmem>>, vector<8x1xf32>
    %412 = vector.broadcast %411 : vector<8x1xf32> to vector<8x512xf32>
    %413 = arith.mulf %410, %412 : vector<8x512xf32>
    %414 = arith.addf %406, %413 : vector<8x512xf32>
    %c55_i32_240 = arith.constant 55 : i32
    %415 = tpu.dynamic_rotate %351 by %c55_i32_240 dim 1 : vector<8x512xf32>, i32 -> vector<8x512xf32>
    %c8_241 = arith.constant 8 : index
    %c0_242 = arith.constant 0 : index
    %416 = vector.load %arg3[%c8_241, %c0_242] : memref<27x512xf32, #tpu.memory_space<vmem>>, vector<1x512xf32>
    %417 = vector.broadcast %416 : vector<1x512xf32> to vector<8x512xf32>
    %418 = arith.mulf %415, %417 : vector<8x512xf32>
    %c0_243 = arith.constant 0 : index
    %c8_244 = arith.constant 8 : index
    %419 = vector.load %arg6[%c0_243, %c8_244] : memref<8x27xf32, #tpu.memory_space<vmem>>, vector<8x1xf32>
    %420 = vector.broadcast %419 : vector<8x1xf32> to vector<8x512xf32>
    %421 = arith.mulf %418, %420 : vector<8x512xf32>
    %422 = arith.addf %414, %421 : vector<8x512xf32>
    %c9_i32_245 = arith.constant 9 : i32
    %423 = tpu.dynamic_rotate %351 by %c9_i32_245 dim 1 : vector<8x512xf32>, i32 -> vector<8x512xf32>
    %c9_246 = arith.constant 9 : index
    %c0_247 = arith.constant 0 : index
    %424 = vector.load %arg3[%c9_246, %c0_247] : memref<27x512xf32, #tpu.memory_space<vmem>>, vector<1x512xf32>
    %425 = vector.broadcast %424 : vector<1x512xf32> to vector<8x512xf32>
    %426 = arith.mulf %423, %425 : vector<8x512xf32>
    %c0_248 = arith.constant 0 : index
    %c9_249 = arith.constant 9 : index
    %427 = vector.load %arg6[%c0_248, %c9_249] : memref<8x27xf32, #tpu.memory_space<vmem>>, vector<8x1xf32>
    %428 = vector.broadcast %427 : vector<8x1xf32> to vector<8x512xf32>
    %429 = arith.mulf %426, %428 : vector<8x512xf32>
    %430 = arith.addf %422, %429 : vector<8x512xf32>
    %c8_i32_250 = arith.constant 8 : i32
    %431 = tpu.dynamic_rotate %351 by %c8_i32_250 dim 1 : vector<8x512xf32>, i32 -> vector<8x512xf32>
    %c10_251 = arith.constant 10 : index
    %c0_252 = arith.constant 0 : index
    %432 = vector.load %arg3[%c10_251, %c0_252] : memref<27x512xf32, #tpu.memory_space<vmem>>, vector<1x512xf32>
    %433 = vector.broadcast %432 : vector<1x512xf32> to vector<8x512xf32>
    %434 = arith.mulf %431, %433 : vector<8x512xf32>
    %c0_253 = arith.constant 0 : index
    %c10_254 = arith.constant 10 : index
    %435 = vector.load %arg6[%c0_253, %c10_254] : memref<8x27xf32, #tpu.memory_space<vmem>>, vector<8x1xf32>
    %436 = vector.broadcast %435 : vector<8x1xf32> to vector<8x512xf32>
    %437 = arith.mulf %434, %436 : vector<8x512xf32>
    %438 = arith.addf %430, %437 : vector<8x512xf32>
    %c7_i32_255 = arith.constant 7 : i32
    %439 = tpu.dynamic_rotate %351 by %c7_i32_255 dim 1 : vector<8x512xf32>, i32 -> vector<8x512xf32>
    %c11_256 = arith.constant 11 : index
    %c0_257 = arith.constant 0 : index
    %440 = vector.load %arg3[%c11_256, %c0_257] : memref<27x512xf32, #tpu.memory_space<vmem>>, vector<1x512xf32>
    %441 = vector.broadcast %440 : vector<1x512xf32> to vector<8x512xf32>
    %442 = arith.mulf %439, %441 : vector<8x512xf32>
    %c0_258 = arith.constant 0 : index
    %c11_259 = arith.constant 11 : index
    %443 = vector.load %arg6[%c0_258, %c11_259] : memref<8x27xf32, #tpu.memory_space<vmem>>, vector<8x1xf32>
    %444 = vector.broadcast %443 : vector<8x1xf32> to vector<8x512xf32>
    %445 = arith.mulf %442, %444 : vector<8x512xf32>
    %446 = arith.addf %438, %445 : vector<8x512xf32>
    %c1_i32_260 = arith.constant 1 : i32
    %447 = tpu.dynamic_rotate %351 by %c1_i32_260 dim 1 : vector<8x512xf32>, i32 -> vector<8x512xf32>
    %c12_261 = arith.constant 12 : index
    %c0_262 = arith.constant 0 : index
    %448 = vector.load %arg3[%c12_261, %c0_262] : memref<27x512xf32, #tpu.memory_space<vmem>>, vector<1x512xf32>
    %449 = vector.broadcast %448 : vector<1x512xf32> to vector<8x512xf32>
    %450 = arith.mulf %447, %449 : vector<8x512xf32>
    %c0_263 = arith.constant 0 : index
    %c12_264 = arith.constant 12 : index
    %451 = vector.load %arg6[%c0_263, %c12_264] : memref<8x27xf32, #tpu.memory_space<vmem>>, vector<8x1xf32>
    %452 = vector.broadcast %451 : vector<8x1xf32> to vector<8x512xf32>
    %453 = arith.mulf %450, %452 : vector<8x512xf32>
    %454 = arith.addf %446, %453 : vector<8x512xf32>
    %c0_265 = arith.constant 0 : index
    %c13_266 = arith.constant 13 : index
    %455 = vector.load %arg6[%c0_265, %c13_266] : memref<8x27xf32, #tpu.memory_space<vmem>>, vector<8x1xf32>
    %456 = vector.broadcast %455 : vector<8x1xf32> to vector<8x512xf32>
    %457 = arith.mulf %351, %456 : vector<8x512xf32>
    %458 = arith.addf %454, %457 : vector<8x512xf32>
    %c511_i32_267 = arith.constant 511 : i32
    %459 = tpu.dynamic_rotate %351 by %c511_i32_267 dim 1 : vector<8x512xf32>, i32 -> vector<8x512xf32>
    %c14_268 = arith.constant 14 : index
    %c0_269 = arith.constant 0 : index
    %460 = vector.load %arg3[%c14_268, %c0_269] : memref<27x512xf32, #tpu.memory_space<vmem>>, vector<1x512xf32>
    %461 = vector.broadcast %460 : vector<1x512xf32> to vector<8x512xf32>
    %462 = arith.mulf %459, %461 : vector<8x512xf32>
    %c0_270 = arith.constant 0 : index
    %c14_271 = arith.constant 14 : index
    %463 = vector.load %arg6[%c0_270, %c14_271] : memref<8x27xf32, #tpu.memory_space<vmem>>, vector<8x1xf32>
    %464 = vector.broadcast %463 : vector<8x1xf32> to vector<8x512xf32>
    %465 = arith.mulf %462, %464 : vector<8x512xf32>
    %466 = arith.addf %458, %465 : vector<8x512xf32>
    %c505_i32_272 = arith.constant 505 : i32
    %467 = tpu.dynamic_rotate %351 by %c505_i32_272 dim 1 : vector<8x512xf32>, i32 -> vector<8x512xf32>
    %c15_273 = arith.constant 15 : index
    %c0_274 = arith.constant 0 : index
    %468 = vector.load %arg3[%c15_273, %c0_274] : memref<27x512xf32, #tpu.memory_space<vmem>>, vector<1x512xf32>
    %469 = vector.broadcast %468 : vector<1x512xf32> to vector<8x512xf32>
    %470 = arith.mulf %467, %469 : vector<8x512xf32>
    %c0_275 = arith.constant 0 : index
    %c15_276 = arith.constant 15 : index
    %471 = vector.load %arg6[%c0_275, %c15_276] : memref<8x27xf32, #tpu.memory_space<vmem>>, vector<8x1xf32>
    %472 = vector.broadcast %471 : vector<8x1xf32> to vector<8x512xf32>
    %473 = arith.mulf %470, %472 : vector<8x512xf32>
    %474 = arith.addf %466, %473 : vector<8x512xf32>
    %c504_i32_277 = arith.constant 504 : i32
    %475 = tpu.dynamic_rotate %351 by %c504_i32_277 dim 1 : vector<8x512xf32>, i32 -> vector<8x512xf32>
    %c16_278 = arith.constant 16 : index
    %c0_279 = arith.constant 0 : index
    %476 = vector.load %arg3[%c16_278, %c0_279] : memref<27x512xf32, #tpu.memory_space<vmem>>, vector<1x512xf32>
    %477 = vector.broadcast %476 : vector<1x512xf32> to vector<8x512xf32>
    %478 = arith.mulf %475, %477 : vector<8x512xf32>
    %c0_280 = arith.constant 0 : index
    %c16_281 = arith.constant 16 : index
    %479 = vector.load %arg6[%c0_280, %c16_281] : memref<8x27xf32, #tpu.memory_space<vmem>>, vector<8x1xf32>
    %480 = vector.broadcast %479 : vector<8x1xf32> to vector<8x512xf32>
    %481 = arith.mulf %478, %480 : vector<8x512xf32>
    %482 = arith.addf %474, %481 : vector<8x512xf32>
    %c503_i32_282 = arith.constant 503 : i32
    %483 = tpu.dynamic_rotate %351 by %c503_i32_282 dim 1 : vector<8x512xf32>, i32 -> vector<8x512xf32>
    %c17_283 = arith.constant 17 : index
    %c0_284 = arith.constant 0 : index
    %484 = vector.load %arg3[%c17_283, %c0_284] : memref<27x512xf32, #tpu.memory_space<vmem>>, vector<1x512xf32>
    %485 = vector.broadcast %484 : vector<1x512xf32> to vector<8x512xf32>
    %486 = arith.mulf %483, %485 : vector<8x512xf32>
    %c0_285 = arith.constant 0 : index
    %c17_286 = arith.constant 17 : index
    %487 = vector.load %arg6[%c0_285, %c17_286] : memref<8x27xf32, #tpu.memory_space<vmem>>, vector<8x1xf32>
    %488 = vector.broadcast %487 : vector<8x1xf32> to vector<8x512xf32>
    %489 = arith.mulf %486, %488 : vector<8x512xf32>
    %490 = arith.addf %482, %489 : vector<8x512xf32>
    %c457_i32_287 = arith.constant 457 : i32
    %491 = tpu.dynamic_rotate %351 by %c457_i32_287 dim 1 : vector<8x512xf32>, i32 -> vector<8x512xf32>
    %c18_288 = arith.constant 18 : index
    %c0_289 = arith.constant 0 : index
    %492 = vector.load %arg3[%c18_288, %c0_289] : memref<27x512xf32, #tpu.memory_space<vmem>>, vector<1x512xf32>
    %493 = vector.broadcast %492 : vector<1x512xf32> to vector<8x512xf32>
    %494 = arith.mulf %491, %493 : vector<8x512xf32>
    %c0_290 = arith.constant 0 : index
    %c18_291 = arith.constant 18 : index
    %495 = vector.load %arg6[%c0_290, %c18_291] : memref<8x27xf32, #tpu.memory_space<vmem>>, vector<8x1xf32>
    %496 = vector.broadcast %495 : vector<8x1xf32> to vector<8x512xf32>
    %497 = arith.mulf %494, %496 : vector<8x512xf32>
    %498 = arith.addf %490, %497 : vector<8x512xf32>
    %c456_i32_292 = arith.constant 456 : i32
    %499 = tpu.dynamic_rotate %351 by %c456_i32_292 dim 1 : vector<8x512xf32>, i32 -> vector<8x512xf32>
    %c19_293 = arith.constant 19 : index
    %c0_294 = arith.constant 0 : index
    %500 = vector.load %arg3[%c19_293, %c0_294] : memref<27x512xf32, #tpu.memory_space<vmem>>, vector<1x512xf32>
    %501 = vector.broadcast %500 : vector<1x512xf32> to vector<8x512xf32>
    %502 = arith.mulf %499, %501 : vector<8x512xf32>
    %c0_295 = arith.constant 0 : index
    %c19_296 = arith.constant 19 : index
    %503 = vector.load %arg6[%c0_295, %c19_296] : memref<8x27xf32, #tpu.memory_space<vmem>>, vector<8x1xf32>
    %504 = vector.broadcast %503 : vector<8x1xf32> to vector<8x512xf32>
    %505 = arith.mulf %502, %504 : vector<8x512xf32>
    %506 = arith.addf %498, %505 : vector<8x512xf32>
    %c455_i32_297 = arith.constant 455 : i32
    %507 = tpu.dynamic_rotate %351 by %c455_i32_297 dim 1 : vector<8x512xf32>, i32 -> vector<8x512xf32>
    %c20_298 = arith.constant 20 : index
    %c0_299 = arith.constant 0 : index
    %508 = vector.load %arg3[%c20_298, %c0_299] : memref<27x512xf32, #tpu.memory_space<vmem>>, vector<1x512xf32>
    %509 = vector.broadcast %508 : vector<1x512xf32> to vector<8x512xf32>
    %510 = arith.mulf %507, %509 : vector<8x512xf32>
    %c0_300 = arith.constant 0 : index
    %c20_301 = arith.constant 20 : index
    %511 = vector.load %arg6[%c0_300, %c20_301] : memref<8x27xf32, #tpu.memory_space<vmem>>, vector<8x1xf32>
    %512 = vector.broadcast %511 : vector<8x1xf32> to vector<8x512xf32>
    %513 = arith.mulf %510, %512 : vector<8x512xf32>
    %514 = arith.addf %506, %513 : vector<8x512xf32>
    %c449_i32_302 = arith.constant 449 : i32
    %515 = tpu.dynamic_rotate %351 by %c449_i32_302 dim 1 : vector<8x512xf32>, i32 -> vector<8x512xf32>
    %c21_303 = arith.constant 21 : index
    %c0_304 = arith.constant 0 : index
    %516 = vector.load %arg3[%c21_303, %c0_304] : memref<27x512xf32, #tpu.memory_space<vmem>>, vector<1x512xf32>
    %517 = vector.broadcast %516 : vector<1x512xf32> to vector<8x512xf32>
    %518 = arith.mulf %515, %517 : vector<8x512xf32>
    %c0_305 = arith.constant 0 : index
    %c21_306 = arith.constant 21 : index
    %519 = vector.load %arg6[%c0_305, %c21_306] : memref<8x27xf32, #tpu.memory_space<vmem>>, vector<8x1xf32>
    %520 = vector.broadcast %519 : vector<8x1xf32> to vector<8x512xf32>
    %521 = arith.mulf %518, %520 : vector<8x512xf32>
    %522 = arith.addf %514, %521 : vector<8x512xf32>
    %c448_i32_307 = arith.constant 448 : i32
    %523 = tpu.dynamic_rotate %351 by %c448_i32_307 dim 1 : vector<8x512xf32>, i32 -> vector<8x512xf32>
    %c22_308 = arith.constant 22 : index
    %c0_309 = arith.constant 0 : index
    %524 = vector.load %arg3[%c22_308, %c0_309] : memref<27x512xf32, #tpu.memory_space<vmem>>, vector<1x512xf32>
    %525 = vector.broadcast %524 : vector<1x512xf32> to vector<8x512xf32>
    %526 = arith.mulf %523, %525 : vector<8x512xf32>
    %c0_310 = arith.constant 0 : index
    %c22_311 = arith.constant 22 : index
    %527 = vector.load %arg6[%c0_310, %c22_311] : memref<8x27xf32, #tpu.memory_space<vmem>>, vector<8x1xf32>
    %528 = vector.broadcast %527 : vector<8x1xf32> to vector<8x512xf32>
    %529 = arith.mulf %526, %528 : vector<8x512xf32>
    %530 = arith.addf %522, %529 : vector<8x512xf32>
    %c447_i32_312 = arith.constant 447 : i32
    %531 = tpu.dynamic_rotate %351 by %c447_i32_312 dim 1 : vector<8x512xf32>, i32 -> vector<8x512xf32>
    %c23_313 = arith.constant 23 : index
    %c0_314 = arith.constant 0 : index
    %532 = vector.load %arg3[%c23_313, %c0_314] : memref<27x512xf32, #tpu.memory_space<vmem>>, vector<1x512xf32>
    %533 = vector.broadcast %532 : vector<1x512xf32> to vector<8x512xf32>
    %534 = arith.mulf %531, %533 : vector<8x512xf32>
    %c0_315 = arith.constant 0 : index
    %c23_316 = arith.constant 23 : index
    %535 = vector.load %arg6[%c0_315, %c23_316] : memref<8x27xf32, #tpu.memory_space<vmem>>, vector<8x1xf32>
    %536 = vector.broadcast %535 : vector<8x1xf32> to vector<8x512xf32>
    %537 = arith.mulf %534, %536 : vector<8x512xf32>
    %538 = arith.addf %530, %537 : vector<8x512xf32>
    %c441_i32_317 = arith.constant 441 : i32
    %539 = tpu.dynamic_rotate %351 by %c441_i32_317 dim 1 : vector<8x512xf32>, i32 -> vector<8x512xf32>
    %c24_318 = arith.constant 24 : index
    %c0_319 = arith.constant 0 : index
    %540 = vector.load %arg3[%c24_318, %c0_319] : memref<27x512xf32, #tpu.memory_space<vmem>>, vector<1x512xf32>
    %541 = vector.broadcast %540 : vector<1x512xf32> to vector<8x512xf32>
    %542 = arith.mulf %539, %541 : vector<8x512xf32>
    %c0_320 = arith.constant 0 : index
    %c24_321 = arith.constant 24 : index
    %543 = vector.load %arg6[%c0_320, %c24_321] : memref<8x27xf32, #tpu.memory_space<vmem>>, vector<8x1xf32>
    %544 = vector.broadcast %543 : vector<8x1xf32> to vector<8x512xf32>
    %545 = arith.mulf %542, %544 : vector<8x512xf32>
    %546 = arith.addf %538, %545 : vector<8x512xf32>
    %c440_i32_322 = arith.constant 440 : i32
    %547 = tpu.dynamic_rotate %351 by %c440_i32_322 dim 1 : vector<8x512xf32>, i32 -> vector<8x512xf32>
    %c25_323 = arith.constant 25 : index
    %c0_324 = arith.constant 0 : index
    %548 = vector.load %arg3[%c25_323, %c0_324] : memref<27x512xf32, #tpu.memory_space<vmem>>, vector<1x512xf32>
    %549 = vector.broadcast %548 : vector<1x512xf32> to vector<8x512xf32>
    %550 = arith.mulf %547, %549 : vector<8x512xf32>
    %c0_325 = arith.constant 0 : index
    %c25_326 = arith.constant 25 : index
    %551 = vector.load %arg6[%c0_325, %c25_326] : memref<8x27xf32, #tpu.memory_space<vmem>>, vector<8x1xf32>
    %552 = vector.broadcast %551 : vector<8x1xf32> to vector<8x512xf32>
    %553 = arith.mulf %550, %552 : vector<8x512xf32>
    %554 = arith.addf %546, %553 : vector<8x512xf32>
    %c439_i32_327 = arith.constant 439 : i32
    %555 = tpu.dynamic_rotate %351 by %c439_i32_327 dim 1 : vector<8x512xf32>, i32 -> vector<8x512xf32>
    %c26_328 = arith.constant 26 : index
    %c0_329 = arith.constant 0 : index
    %556 = vector.load %arg3[%c26_328, %c0_329] : memref<27x512xf32, #tpu.memory_space<vmem>>, vector<1x512xf32>
    %557 = vector.broadcast %556 : vector<1x512xf32> to vector<8x512xf32>
    %558 = arith.mulf %555, %557 : vector<8x512xf32>
    %c0_330 = arith.constant 0 : index
    %c26_331 = arith.constant 26 : index
    %559 = vector.load %arg6[%c0_330, %c26_331] : memref<8x27xf32, #tpu.memory_space<vmem>>, vector<8x1xf32>
    %560 = vector.broadcast %559 : vector<8x1xf32> to vector<8x512xf32>
    %561 = arith.mulf %558, %560 : vector<8x512xf32>
    %562 = arith.addf %554, %561 : vector<8x512xf32>
    %563 = arith.mulf %349, %349 : vector<8x512xf32>
    %564 = arith.mulf %562, %563 : vector<8x512xf32>
    %c0_332 = arith.constant 0 : index
    %c0_333 = arith.constant 0 : index
    %565 = vector.load %arg8[%c0_332, %c0_333] : memref<3x216xf32, #tpu.memory_space<vmem>>, vector<3x216xf32>
    %c0_334 = arith.constant 0 : index
    %c0_335 = arith.constant 0 : index
    %566 = vector.load %arg9[%c0_334, %c0_335] : memref<3x1xf32, #tpu.memory_space<vmem>>, vector<3x1xf32>
    %c73_i32_336 = arith.constant 73 : i32
    %567 = tpu.dynamic_rotate %564 by %c73_i32_336 dim 1 : vector<8x512xf32>, i32 -> vector<8x512xf32>
    %c0_337 = arith.constant 0 : index
    %c0_338 = arith.constant 0 : index
    %568 = vector.load %arg3[%c0_337, %c0_338] : memref<27x512xf32, #tpu.memory_space<vmem>>, vector<1x512xf32>
    %569 = vector.broadcast %568 : vector<1x512xf32> to vector<8x512xf32>
    %570 = arith.mulf %567, %569 : vector<8x512xf32>
    %c0_339 = arith.constant 0 : index
    %c0_340 = arith.constant 0 : index
    %571 = vector.load %arg11[%c0_339, %c0_340] : memref<216x512xf32, #tpu.memory_space<vmem>>, vector<8x512xf32>
    tpu.vector_store %arg11[%c0_339, %c0_340], %570 {strides = array<i32>} : memref<216x512xf32, #tpu.memory_space<vmem>>, vector<8x512xf32>,
    %c72_i32_341 = arith.constant 72 : i32
    %572 = tpu.dynamic_rotate %564 by %c72_i32_341 dim 1 : vector<8x512xf32>, i32 -> vector<8x512xf32>
    %c1_342 = arith.constant 1 : index
    %c0_343 = arith.constant 0 : index
    %573 = vector.load %arg3[%c1_342, %c0_343] : memref<27x512xf32, #tpu.memory_space<vmem>>, vector<1x512xf32>
    %574 = vector.broadcast %573 : vector<1x512xf32> to vector<8x512xf32>
    %575 = arith.mulf %572, %574 : vector<8x512xf32>
    %c8_344 = arith.constant 8 : index
    %c0_345 = arith.constant 0 : index
    %576 = vector.load %arg11[%c8_344, %c0_345] : memref<216x512xf32, #tpu.memory_space<vmem>>, vector<8x512xf32>
    tpu.vector_store %arg11[%c8_344, %c0_345], %575 {strides = array<i32>} : memref<216x512xf32, #tpu.memory_space<vmem>>, vector<8x512xf32>,
    %c71_i32_346 = arith.constant 71 : i32
    %577 = tpu.dynamic_rotate %564 by %c71_i32_346 dim 1 : vector<8x512xf32>, i32 -> vector<8x512xf32>
    %c2_347 = arith.constant 2 : index
    %c0_348 = arith.constant 0 : index
    %578 = vector.load %arg3[%c2_347, %c0_348] : memref<27x512xf32, #tpu.memory_space<vmem>>, vector<1x512xf32>
    %579 = vector.broadcast %578 : vector<1x512xf32> to vector<8x512xf32>
    %580 = arith.mulf %577, %579 : vector<8x512xf32>
    %c16_349 = arith.constant 16 : index
    %c0_350 = arith.constant 0 : index
    %581 = vector.load %arg11[%c16_349, %c0_350] : memref<216x512xf32, #tpu.memory_space<vmem>>, vector<8x512xf32>
    tpu.vector_store %arg11[%c16_349, %c0_350], %580 {strides = array<i32>} : memref<216x512xf32, #tpu.memory_space<vmem>>, vector<8x512xf32>,
    %c65_i32_351 = arith.constant 65 : i32
    %582 = tpu.dynamic_rotate %564 by %c65_i32_351 dim 1 : vector<8x512xf32>, i32 -> vector<8x512xf32>
    %c3_352 = arith.constant 3 : index
    %c0_353 = arith.constant 0 : index
    %583 = vector.load %arg3[%c3_352, %c0_353] : memref<27x512xf32, #tpu.memory_space<vmem>>, vector<1x512xf32>
    %584 = vector.broadcast %583 : vector<1x512xf32> to vector<8x512xf32>
    %585 = arith.mulf %582, %584 : vector<8x512xf32>
    %c24_354 = arith.constant 24 : index
    %c0_355 = arith.constant 0 : index
    %586 = vector.load %arg11[%c24_354, %c0_355] : memref<216x512xf32, #tpu.memory_space<vmem>>, vector<8x512xf32>
    tpu.vector_store %arg11[%c24_354, %c0_355], %585 {strides = array<i32>} : memref<216x512xf32, #tpu.memory_space<vmem>>, vector<8x512xf32>,
    %c64_i32_356 = arith.constant 64 : i32
    %587 = tpu.dynamic_rotate %564 by %c64_i32_356 dim 1 : vector<8x512xf32>, i32 -> vector<8x512xf32>
    %c4_357 = arith.constant 4 : index
    %c0_358 = arith.constant 0 : index
    %588 = vector.load %arg3[%c4_357, %c0_358] : memref<27x512xf32, #tpu.memory_space<vmem>>, vector<1x512xf32>
    %589 = vector.broadcast %588 : vector<1x512xf32> to vector<8x512xf32>
    %590 = arith.mulf %587, %589 : vector<8x512xf32>
    %c32_359 = arith.constant 32 : index
    %c0_360 = arith.constant 0 : index
    %591 = vector.load %arg11[%c32_359, %c0_360] : memref<216x512xf32, #tpu.memory_space<vmem>>, vector<8x512xf32>
    tpu.vector_store %arg11[%c32_359, %c0_360], %590 {strides = array<i32>} : memref<216x512xf32, #tpu.memory_space<vmem>>, vector<8x512xf32>,
    %c63_i32_361 = arith.constant 63 : i32
    %592 = tpu.dynamic_rotate %564 by %c63_i32_361 dim 1 : vector<8x512xf32>, i32 -> vector<8x512xf32>
    %c5_362 = arith.constant 5 : index
    %c0_363 = arith.constant 0 : index
    %593 = vector.load %arg3[%c5_362, %c0_363] : memref<27x512xf32, #tpu.memory_space<vmem>>, vector<1x512xf32>
    %594 = vector.broadcast %593 : vector<1x512xf32> to vector<8x512xf32>
    %595 = arith.mulf %592, %594 : vector<8x512xf32>
    %c40_364 = arith.constant 40 : index
    %c0_365 = arith.constant 0 : index
    %596 = vector.load %arg11[%c40_364, %c0_365] : memref<216x512xf32, #tpu.memory_space<vmem>>, vector<8x512xf32>
    tpu.vector_store %arg11[%c40_364, %c0_365], %595 {strides = array<i32>} : memref<216x512xf32, #tpu.memory_space<vmem>>, vector<8x512xf32>,
    %c57_i32_366 = arith.constant 57 : i32
    %597 = tpu.dynamic_rotate %564 by %c57_i32_366 dim 1 : vector<8x512xf32>, i32 -> vector<8x512xf32>
    %c6_367 = arith.constant 6 : index
    %c0_368 = arith.constant 0 : index
    %598 = vector.load %arg3[%c6_367, %c0_368] : memref<27x512xf32, #tpu.memory_space<vmem>>, vector<1x512xf32>
    %599 = vector.broadcast %598 : vector<1x512xf32> to vector<8x512xf32>
    %600 = arith.mulf %597, %599 : vector<8x512xf32>
    %c48_369 = arith.constant 48 : index
    %c0_370 = arith.constant 0 : index
    %601 = vector.load %arg11[%c48_369, %c0_370] : memref<216x512xf32, #tpu.memory_space<vmem>>, vector<8x512xf32>
    tpu.vector_store %arg11[%c48_369, %c0_370], %600 {strides = array<i32>} : memref<216x512xf32, #tpu.memory_space<vmem>>, vector<8x512xf32>,
    %c56_i32_371 = arith.constant 56 : i32
    %602 = tpu.dynamic_rotate %564 by %c56_i32_371 dim 1 : vector<8x512xf32>, i32 -> vector<8x512xf32>
    %c7_372 = arith.constant 7 : index
    %c0_373 = arith.constant 0 : index
    %603 = vector.load %arg3[%c7_372, %c0_373] : memref<27x512xf32, #tpu.memory_space<vmem>>, vector<1x512xf32>
    %604 = vector.broadcast %603 : vector<1x512xf32> to vector<8x512xf32>
    %605 = arith.mulf %602, %604 : vector<8x512xf32>
    %c56_374 = arith.constant 56 : index
    %c0_375 = arith.constant 0 : index
    %606 = vector.load %arg11[%c56_374, %c0_375] : memref<216x512xf32, #tpu.memory_space<vmem>>, vector<8x512xf32>
    tpu.vector_store %arg11[%c56_374, %c0_375], %605 {strides = array<i32>} : memref<216x512xf32, #tpu.memory_space<vmem>>, vector<8x512xf32>,
    %c55_i32_376 = arith.constant 55 : i32
    %607 = tpu.dynamic_rotate %564 by %c55_i32_376 dim 1 : vector<8x512xf32>, i32 -> vector<8x512xf32>
    %c8_377 = arith.constant 8 : index
    %c0_378 = arith.constant 0 : index
    %608 = vector.load %arg3[%c8_377, %c0_378] : memref<27x512xf32, #tpu.memory_space<vmem>>, vector<1x512xf32>
    %609 = vector.broadcast %608 : vector<1x512xf32> to vector<8x512xf32>
    %610 = arith.mulf %607, %609 : vector<8x512xf32>
    %c64_379 = arith.constant 64 : index
    %c0_380 = arith.constant 0 : index
    %611 = vector.load %arg11[%c64_379, %c0_380] : memref<216x512xf32, #tpu.memory_space<vmem>>, vector<8x512xf32>
    tpu.vector_store %arg11[%c64_379, %c0_380], %610 {strides = array<i32>} : memref<216x512xf32, #tpu.memory_space<vmem>>, vector<8x512xf32>,
    %c9_i32_381 = arith.constant 9 : i32
    %612 = tpu.dynamic_rotate %564 by %c9_i32_381 dim 1 : vector<8x512xf32>, i32 -> vector<8x512xf32>
    %c9_382 = arith.constant 9 : index
    %c0_383 = arith.constant 0 : index
    %613 = vector.load %arg3[%c9_382, %c0_383] : memref<27x512xf32, #tpu.memory_space<vmem>>, vector<1x512xf32>
    %614 = vector.broadcast %613 : vector<1x512xf32> to vector<8x512xf32>
    %615 = arith.mulf %612, %614 : vector<8x512xf32>
    %c72_384 = arith.constant 72 : index
    %c0_385 = arith.constant 0 : index
    %616 = vector.load %arg11[%c72_384, %c0_385] : memref<216x512xf32, #tpu.memory_space<vmem>>, vector<8x512xf32>
    tpu.vector_store %arg11[%c72_384, %c0_385], %615 {strides = array<i32>} : memref<216x512xf32, #tpu.memory_space<vmem>>, vector<8x512xf32>,
    %c8_i32_386 = arith.constant 8 : i32
    %617 = tpu.dynamic_rotate %564 by %c8_i32_386 dim 1 : vector<8x512xf32>, i32 -> vector<8x512xf32>
    %c10_387 = arith.constant 10 : index
    %c0_388 = arith.constant 0 : index
    %618 = vector.load %arg3[%c10_387, %c0_388] : memref<27x512xf32, #tpu.memory_space<vmem>>, vector<1x512xf32>
    %619 = vector.broadcast %618 : vector<1x512xf32> to vector<8x512xf32>
    %620 = arith.mulf %617, %619 : vector<8x512xf32>
    %c80_389 = arith.constant 80 : index
    %c0_390 = arith.constant 0 : index
    %621 = vector.load %arg11[%c80_389, %c0_390] : memref<216x512xf32, #tpu.memory_space<vmem>>, vector<8x512xf32>
    tpu.vector_store %arg11[%c80_389, %c0_390], %620 {strides = array<i32>} : memref<216x512xf32, #tpu.memory_space<vmem>>, vector<8x512xf32>,
    %c7_i32_391 = arith.constant 7 : i32
    %622 = tpu.dynamic_rotate %564 by %c7_i32_391 dim 1 : vector<8x512xf32>, i32 -> vector<8x512xf32>
    %c11_392 = arith.constant 11 : index
    %c0_393 = arith.constant 0 : index
    %623 = vector.load %arg3[%c11_392, %c0_393] : memref<27x512xf32, #tpu.memory_space<vmem>>, vector<1x512xf32>
    %624 = vector.broadcast %623 : vector<1x512xf32> to vector<8x512xf32>
    %625 = arith.mulf %622, %624 : vector<8x512xf32>
    %c88_394 = arith.constant 88 : index
    %c0_395 = arith.constant 0 : index
    %626 = vector.load %arg11[%c88_394, %c0_395] : memref<216x512xf32, #tpu.memory_space<vmem>>, vector<8x512xf32>
    tpu.vector_store %arg11[%c88_394, %c0_395], %625 {strides = array<i32>} : memref<216x512xf32, #tpu.memory_space<vmem>>, vector<8x512xf32>,
    %c1_i32_396 = arith.constant 1 : i32
    %627 = tpu.dynamic_rotate %564 by %c1_i32_396 dim 1 : vector<8x512xf32>, i32 -> vector<8x512xf32>
    %c12_397 = arith.constant 12 : index
    %c0_398 = arith.constant 0 : index
    %628 = vector.load %arg3[%c12_397, %c0_398] : memref<27x512xf32, #tpu.memory_space<vmem>>, vector<1x512xf32>
    %629 = vector.broadcast %628 : vector<1x512xf32> to vector<8x512xf32>
    %630 = arith.mulf %627, %629 : vector<8x512xf32>
    %c96_399 = arith.constant 96 : index
    %c0_400 = arith.constant 0 : index
    %631 = vector.load %arg11[%c96_399, %c0_400] : memref<216x512xf32, #tpu.memory_space<vmem>>, vector<8x512xf32>
    tpu.vector_store %arg11[%c96_399, %c0_400], %630 {strides = array<i32>} : memref<216x512xf32, #tpu.memory_space<vmem>>, vector<8x512xf32>,
    %c104_401 = arith.constant 104 : index
    %c0_402 = arith.constant 0 : index
    %632 = vector.load %arg11[%c104_401, %c0_402] : memref<216x512xf32, #tpu.memory_space<vmem>>, vector<8x512xf32>
    tpu.vector_store %arg11[%c104_401, %c0_402], %564 {strides = array<i32>} : memref<216x512xf32, #tpu.memory_space<vmem>>, vector<8x512xf32>,
    %c511_i32_403 = arith.constant 511 : i32
    %633 = tpu.dynamic_rotate %564 by %c511_i32_403 dim 1 : vector<8x512xf32>, i32 -> vector<8x512xf32>
    %c14_404 = arith.constant 14 : index
    %c0_405 = arith.constant 0 : index
    %634 = vector.load %arg3[%c14_404, %c0_405] : memref<27x512xf32, #tpu.memory_space<vmem>>, vector<1x512xf32>
    %635 = vector.broadcast %634 : vector<1x512xf32> to vector<8x512xf32>
    %636 = arith.mulf %633, %635 : vector<8x512xf32>
    %c112_406 = arith.constant 112 : index
    %c0_407 = arith.constant 0 : index
    %637 = vector.load %arg11[%c112_406, %c0_407] : memref<216x512xf32, #tpu.memory_space<vmem>>, vector<8x512xf32>
    tpu.vector_store %arg11[%c112_406, %c0_407], %636 {strides = array<i32>} : memref<216x512xf32, #tpu.memory_space<vmem>>, vector<8x512xf32>,
    %c505_i32_408 = arith.constant 505 : i32
    %638 = tpu.dynamic_rotate %564 by %c505_i32_408 dim 1 : vector<8x512xf32>, i32 -> vector<8x512xf32>
    %c15_409 = arith.constant 15 : index
    %c0_410 = arith.constant 0 : index
    %639 = vector.load %arg3[%c15_409, %c0_410] : memref<27x512xf32, #tpu.memory_space<vmem>>, vector<1x512xf32>
    %640 = vector.broadcast %639 : vector<1x512xf32> to vector<8x512xf32>
    %641 = arith.mulf %638, %640 : vector<8x512xf32>
    %c120_411 = arith.constant 120 : index
    %c0_412 = arith.constant 0 : index
    %642 = vector.load %arg11[%c120_411, %c0_412] : memref<216x512xf32, #tpu.memory_space<vmem>>, vector<8x512xf32>
    tpu.vector_store %arg11[%c120_411, %c0_412], %641 {strides = array<i32>} : memref<216x512xf32, #tpu.memory_space<vmem>>, vector<8x512xf32>,
    %c504_i32_413 = arith.constant 504 : i32
    %643 = tpu.dynamic_rotate %564 by %c504_i32_413 dim 1 : vector<8x512xf32>, i32 -> vector<8x512xf32>
    %c16_414 = arith.constant 16 : index
    %c0_415 = arith.constant 0 : index
    %644 = vector.load %arg3[%c16_414, %c0_415] : memref<27x512xf32, #tpu.memory_space<vmem>>, vector<1x512xf32>
    %645 = vector.broadcast %644 : vector<1x512xf32> to vector<8x512xf32>
    %646 = arith.mulf %643, %645 : vector<8x512xf32>
    %c128_416 = arith.constant 128 : index
    %c0_417 = arith.constant 0 : index
    %647 = vector.load %arg11[%c128_416, %c0_417] : memref<216x512xf32, #tpu.memory_space<vmem>>, vector<8x512xf32>
    tpu.vector_store %arg11[%c128_416, %c0_417], %646 {strides = array<i32>} : memref<216x512xf32, #tpu.memory_space<vmem>>, vector<8x512xf32>,
    %c503_i32_418 = arith.constant 503 : i32
    %648 = tpu.dynamic_rotate %564 by %c503_i32_418 dim 1 : vector<8x512xf32>, i32 -> vector<8x512xf32>
    %c17_419 = arith.constant 17 : index
    %c0_420 = arith.constant 0 : index
    %649 = vector.load %arg3[%c17_419, %c0_420] : memref<27x512xf32, #tpu.memory_space<vmem>>, vector<1x512xf32>
    %650 = vector.broadcast %649 : vector<1x512xf32> to vector<8x512xf32>
    %651 = arith.mulf %648, %650 : vector<8x512xf32>
    %c136_421 = arith.constant 136 : index
    %c0_422 = arith.constant 0 : index
    %652 = vector.load %arg11[%c136_421, %c0_422] : memref<216x512xf32, #tpu.memory_space<vmem>>, vector<8x512xf32>
    tpu.vector_store %arg11[%c136_421, %c0_422], %651 {strides = array<i32>} : memref<216x512xf32, #tpu.memory_space<vmem>>, vector<8x512xf32>,
    %c457_i32_423 = arith.constant 457 : i32
    %653 = tpu.dynamic_rotate %564 by %c457_i32_423 dim 1 : vector<8x512xf32>, i32 -> vector<8x512xf32>
    %c18_424 = arith.constant 18 : index
    %c0_425 = arith.constant 0 : index
    %654 = vector.load %arg3[%c18_424, %c0_425] : memref<27x512xf32, #tpu.memory_space<vmem>>, vector<1x512xf32>
    %655 = vector.broadcast %654 : vector<1x512xf32> to vector<8x512xf32>
    %656 = arith.mulf %653, %655 : vector<8x512xf32>
    %c144_426 = arith.constant 144 : index
    %c0_427 = arith.constant 0 : index
    %657 = vector.load %arg11[%c144_426, %c0_427] : memref<216x512xf32, #tpu.memory_space<vmem>>, vector<8x512xf32>
    tpu.vector_store %arg11[%c144_426, %c0_427], %656 {strides = array<i32>} : memref<216x512xf32, #tpu.memory_space<vmem>>, vector<8x512xf32>,
    %c456_i32_428 = arith.constant 456 : i32
    %658 = tpu.dynamic_rotate %564 by %c456_i32_428 dim 1 : vector<8x512xf32>, i32 -> vector<8x512xf32>
    %c19_429 = arith.constant 19 : index
    %c0_430 = arith.constant 0 : index
    %659 = vector.load %arg3[%c19_429, %c0_430] : memref<27x512xf32, #tpu.memory_space<vmem>>, vector<1x512xf32>
    %660 = vector.broadcast %659 : vector<1x512xf32> to vector<8x512xf32>
    %661 = arith.mulf %658, %660 : vector<8x512xf32>
    %c152_431 = arith.constant 152 : index
    %c0_432 = arith.constant 0 : index
    %662 = vector.load %arg11[%c152_431, %c0_432] : memref<216x512xf32, #tpu.memory_space<vmem>>, vector<8x512xf32>
    tpu.vector_store %arg11[%c152_431, %c0_432], %661 {strides = array<i32>} : memref<216x512xf32, #tpu.memory_space<vmem>>, vector<8x512xf32>,
    %c455_i32_433 = arith.constant 455 : i32
    %663 = tpu.dynamic_rotate %564 by %c455_i32_433 dim 1 : vector<8x512xf32>, i32 -> vector<8x512xf32>
    %c20_434 = arith.constant 20 : index
    %c0_435 = arith.constant 0 : index
    %664 = vector.load %arg3[%c20_434, %c0_435] : memref<27x512xf32, #tpu.memory_space<vmem>>, vector<1x512xf32>
    %665 = vector.broadcast %664 : vector<1x512xf32> to vector<8x512xf32>
    %666 = arith.mulf %663, %665 : vector<8x512xf32>
    %c160_436 = arith.constant 160 : index
    %c0_437 = arith.constant 0 : index
    %667 = vector.load %arg11[%c160_436, %c0_437] : memref<216x512xf32, #tpu.memory_space<vmem>>, vector<8x512xf32>
    tpu.vector_store %arg11[%c160_436, %c0_437], %666 {strides = array<i32>} : memref<216x512xf32, #tpu.memory_space<vmem>>, vector<8x512xf32>,
    %c449_i32_438 = arith.constant 449 : i32
    %668 = tpu.dynamic_rotate %564 by %c449_i32_438 dim 1 : vector<8x512xf32>, i32 -> vector<8x512xf32>
    %c21_439 = arith.constant 21 : index
    %c0_440 = arith.constant 0 : index
    %669 = vector.load %arg3[%c21_439, %c0_440] : memref<27x512xf32, #tpu.memory_space<vmem>>, vector<1x512xf32>
    %670 = vector.broadcast %669 : vector<1x512xf32> to vector<8x512xf32>
    %671 = arith.mulf %668, %670 : vector<8x512xf32>
    %c168_441 = arith.constant 168 : index
    %c0_442 = arith.constant 0 : index
    %672 = vector.load %arg11[%c168_441, %c0_442] : memref<216x512xf32, #tpu.memory_space<vmem>>, vector<8x512xf32>
    tpu.vector_store %arg11[%c168_441, %c0_442], %671 {strides = array<i32>} : memref<216x512xf32, #tpu.memory_space<vmem>>, vector<8x512xf32>,
    %c448_i32_443 = arith.constant 448 : i32
    %673 = tpu.dynamic_rotate %564 by %c448_i32_443 dim 1 : vector<8x512xf32>, i32 -> vector<8x512xf32>
    %c22_444 = arith.constant 22 : index
    %c0_445 = arith.constant 0 : index
    %674 = vector.load %arg3[%c22_444, %c0_445] : memref<27x512xf32, #tpu.memory_space<vmem>>, vector<1x512xf32>
    %675 = vector.broadcast %674 : vector<1x512xf32> to vector<8x512xf32>
    %676 = arith.mulf %673, %675 : vector<8x512xf32>
    %c176_446 = arith.constant 176 : index
    %c0_447 = arith.constant 0 : index
    %677 = vector.load %arg11[%c176_446, %c0_447] : memref<216x512xf32, #tpu.memory_space<vmem>>, vector<8x512xf32>
    tpu.vector_store %arg11[%c176_446, %c0_447], %676 {strides = array<i32>} : memref<216x512xf32, #tpu.memory_space<vmem>>, vector<8x512xf32>,
    %c447_i32_448 = arith.constant 447 : i32
    %678 = tpu.dynamic_rotate %564 by %c447_i32_448 dim 1 : vector<8x512xf32>, i32 -> vector<8x512xf32>
    %c23_449 = arith.constant 23 : index
    %c0_450 = arith.constant 0 : index
    %679 = vector.load %arg3[%c23_449, %c0_450] : memref<27x512xf32, #tpu.memory_space<vmem>>, vector<1x512xf32>
    %680 = vector.broadcast %679 : vector<1x512xf32> to vector<8x512xf32>
    %681 = arith.mulf %678, %680 : vector<8x512xf32>
    %c184_451 = arith.constant 184 : index
    %c0_452 = arith.constant 0 : index
    %682 = vector.load %arg11[%c184_451, %c0_452] : memref<216x512xf32, #tpu.memory_space<vmem>>, vector<8x512xf32>
    tpu.vector_store %arg11[%c184_451, %c0_452], %681 {strides = array<i32>} : memref<216x512xf32, #tpu.memory_space<vmem>>, vector<8x512xf32>,
    %c441_i32_453 = arith.constant 441 : i32
    %683 = tpu.dynamic_rotate %564 by %c441_i32_453 dim 1 : vector<8x512xf32>, i32 -> vector<8x512xf32>
    %c24_454 = arith.constant 24 : index
    %c0_455 = arith.constant 0 : index
    %684 = vector.load %arg3[%c24_454, %c0_455] : memref<27x512xf32, #tpu.memory_space<vmem>>, vector<1x512xf32>
    %685 = vector.broadcast %684 : vector<1x512xf32> to vector<8x512xf32>
    %686 = arith.mulf %683, %685 : vector<8x512xf32>
    %c192_456 = arith.constant 192 : index
    %c0_457 = arith.constant 0 : index
    %687 = vector.load %arg11[%c192_456, %c0_457] : memref<216x512xf32, #tpu.memory_space<vmem>>, vector<8x512xf32>
    tpu.vector_store %arg11[%c192_456, %c0_457], %686 {strides = array<i32>} : memref<216x512xf32, #tpu.memory_space<vmem>>, vector<8x512xf32>,
    %c440_i32_458 = arith.constant 440 : i32
    %688 = tpu.dynamic_rotate %564 by %c440_i32_458 dim 1 : vector<8x512xf32>, i32 -> vector<8x512xf32>
    %c25_459 = arith.constant 25 : index
    %c0_460 = arith.constant 0 : index
    %689 = vector.load %arg3[%c25_459, %c0_460] : memref<27x512xf32, #tpu.memory_space<vmem>>, vector<1x512xf32>
    %690 = vector.broadcast %689 : vector<1x512xf32> to vector<8x512xf32>
    %691 = arith.mulf %688, %690 : vector<8x512xf32>
    %c200_461 = arith.constant 200 : index
    %c0_462 = arith.constant 0 : index
    %692 = vector.load %arg11[%c200_461, %c0_462] : memref<216x512xf32, #tpu.memory_space<vmem>>, vector<8x512xf32>
    tpu.vector_store %arg11[%c200_461, %c0_462], %691 {strides = array<i32>} : memref<216x512xf32, #tpu.memory_space<vmem>>, vector<8x512xf32>,
    %c439_i32_463 = arith.constant 439 : i32
    %693 = tpu.dynamic_rotate %564 by %c439_i32_463 dim 1 : vector<8x512xf32>, i32 -> vector<8x512xf32>
    %c26_464 = arith.constant 26 : index
    %c0_465 = arith.constant 0 : index
    %694 = vector.load %arg3[%c26_464, %c0_465] : memref<27x512xf32, #tpu.memory_space<vmem>>, vector<1x512xf32>
    %695 = vector.broadcast %694 : vector<1x512xf32> to vector<8x512xf32>
    %696 = arith.mulf %693, %695 : vector<8x512xf32>
    %c208_466 = arith.constant 208 : index
    %c0_467 = arith.constant 0 : index
    %697 = vector.load %arg11[%c208_466, %c0_467] : memref<216x512xf32, #tpu.memory_space<vmem>>, vector<8x512xf32>
    tpu.vector_store %arg11[%c208_466, %c0_467], %696 {strides = array<i32>} : memref<216x512xf32, #tpu.memory_space<vmem>>, vector<8x512xf32>,
    %c0_468 = arith.constant 0 : index
    %c0_469 = arith.constant 0 : index
    %698 = vector.load %arg11[%c0_468, %c0_469] : memref<216x512xf32, #tpu.memory_space<vmem>>, vector<216x512xf32>
    %cst_470 = arith.constant dense<0.000000e+00> : vector<3x512xf32>
    %699 = tpu.matmul %565, %698, %cst_470 {dimension_numbers = #tpu.dot_dimension_numbers<[1], [0], [0], [1], [0, 0, 1, 1], [], []>} : vector<3x216xf32>, vector<216x512xf32>, vector<3x512xf32> -> vector<3x512xf32>
    %700 = vector.broadcast %566 : vector<3x1xf32> to vector<3x512xf32>
    %701 = arith.addf %699, %700 : vector<3x512xf32>
    %cst_471 = arith.constant 0.000000e+00 : f32
    %702 = vector.broadcast %cst_471 : f32 to vector<3x512xf32>
    %703 = arith.maximumf %701, %702 : vector<3x512xf32>
    %c0_472 = arith.constant 0 : index
    %c0_473 = arith.constant 0 : index
    %c0_474 = arith.constant 0 : index
    %704 = vector.load %arg1[%c0_472, %c0_473, %c0_474] : memref<1x8x512xf32, #tpu.memory_space<vmem>>, vector<1x3x512xf32>
    %705 = vector.shape_cast %704 : vector<1x3x512xf32> to vector<3x512xf32>
    %706 = arith.addf %703, %705 : vector<3x512xf32>
    %c0_475 = arith.constant 0 : index
    %c0_476 = arith.constant 0 : index
    %c0_477 = arith.constant 0 : index
    %707 = vector.load %arg10[%c0_475, %c0_476, %c0_477] : memref<1x3x512xf32, #tpu.memory_space<vmem>>, vector<1x3x512xf32>
    %708 = vector.shape_cast %707 : vector<1x3x512xf32> to vector<3x512xf32>
    %709 = vector.shape_cast %706 : vector<3x512xf32> to vector<1x3x512xf32>
    tpu.vector_store %arg10[%c0_475, %c0_476, %c0_477], %709 {strides = array<i32>} : memref<1x3x512xf32, #tpu.memory_space<vmem>>, vector<1x3x512xf32>,
    return
  }
  func.func @transform_0(%arg0: i32) -> (i32, i32, i32) {
    %c0_i32 = arith.constant 0 : i32
    %c0_i32_0 = arith.constant 0 : i32
    %c0_i32_1 = arith.constant 0 : i32
    return %arg0, %c0_i32, %c0_i32_0 : i32, i32, i32
  }
  func.func @transform_1(%arg0: i32) -> (i32, i32, i32) {
    %c0_i32 = arith.constant 0 : i32
    %c0_i32_0 = arith.constant 0 : i32
    %c0_i32_1 = arith.constant 0 : i32
    return %arg0, %c0_i32, %c0_i32_0 : i32, i32, i32
  }
  func.func @transform_2(%arg0: i32) -> (i32, i32) {
    %c0_i32 = arith.constant 0 : i32
    %c0_i32_0 = arith.constant 0 : i32
    %c0_i32_1 = arith.constant 0 : i32
    return %c0_i32, %c0_i32_0 : i32, i32
  }
  func.func @transform_3(%arg0: i32) -> (i32, i32) {
    %c0_i32 = arith.constant 0 : i32
    %c0_i32_0 = arith.constant 0 : i32
    %c0_i32_1 = arith.constant 0 : i32
    return %c0_i32, %c0_i32_0 : i32, i32
  }
  func.func @transform_4(%arg0: i32) -> (i32, i32) {
    %c0_i32 = arith.constant 0 : i32
    %c0_i32_0 = arith.constant 0 : i32
    %c0_i32_1 = arith.constant 0 : i32
    return %c0_i32, %c0_i32_0 : i32, i32
  }
  func.func @transform_5(%arg0: i32) -> (i32, i32) {
    %c0_i32 = arith.constant 0 : i32
    %c0_i32_0 = arith.constant 0 : i32
    %c0_i32_1 = arith.constant 0 : i32
    return %c0_i32, %c0_i32_0 : i32, i32
  }
  func.func @transform_6(%arg0: i32) -> (i32, i32) {
    %c0_i32 = arith.constant 0 : i32
    %c0_i32_0 = arith.constant 0 : i32
    %c0_i32_1 = arith.constant 0 : i32
    return %c0_i32, %c0_i32_0 : i32, i32
  }
  func.func @transform_7(%arg0: i32) -> (i32, i32) {
    %c0_i32 = arith.constant 0 : i32
    %c0_i32_0 = arith.constant 0 : i32
    %c0_i32_1 = arith.constant 0 : i32
    return %c0_i32, %c0_i32_0 : i32, i32
  }
  func.func @transform_8(%arg0: i32) -> (i32, i32) {
    %c0_i32 = arith.constant 0 : i32
    %c0_i32_0 = arith.constant 0 : i32
    %c0_i32_1 = arith.constant 0 : i32
    return %c0_i32, %c0_i32_0 : i32, i32
  }
  func.func @transform_9(%arg0: i32) -> (i32, i32, i32) {
    %c0_i32 = arith.constant 0 : i32
    %c0_i32_0 = arith.constant 0 : i32
    %c0_i32_1 = arith.constant 0 : i32
    return %arg0, %c0_i32, %c0_i32_0 : i32, i32, i32
  }
}

</mosaic_0001>

<llo_original>
// kernel: tpu_custom_call.1
$region0: #{tpu_custom_call.1}
  #allocation0 [shape = 'u32[]', space=smem, size = 0x4, offset = 0x4, fixed_abs, tag = 'smem constant byte address 0x4 - core index']
  #allocation1 [shape = 'u32[144,128]{1,0:T(1,128)}', space=vmem, size = 0x12000, scoped, tag = 'internal scratch']
  #allocation2 [shape = 'f32[216,512]{1,0:T(8,128)}', space=vmem, size = 0x6c000, scoped, tag = 'scratch operand']
  %s0 = inlined_call_operand.hbm [shape: f32[2,8,512], index: 0, kind: input, shape index: {}]
  %s1 = inlined_call_operand.hbm [shape: f32[2,8,512], index: 1, kind: input, shape index: {}]
  %s2 = inlined_call_operand.hbm [shape: f32[27,512], index: 2, kind: input, shape index: {}]
  %s3 = inlined_call_operand.vmem [shape: f32[8,216], index: 3, kind: input, shape index: {}]
  %s4 = inlined_call_operand.vmem [shape: f32[8,1], index: 4, kind: input, shape index: {}]
  %s5 = inlined_call_operand.hbm [shape: f32[8,27], index: 5, kind: input, shape index: {}]
  %s6 = inlined_call_operand.vmem [shape: f32[8,27], index: 6, kind: input, shape index: {}]
  %s7 = inlined_call_operand.hbm [shape: f32[3,216], index: 7, kind: input, shape index: {}]
  %s8 = inlined_call_operand.vmem [shape: f32[3,1], index: 8, kind: input, shape index: {}]
  %s9 = inlined_call_operand.vmem [shape: f32[2,3,512], index: 9, kind: output, shape index: {}]
  %s10 = sld [smem:[#allocation0]]
  $region89: #{tpu_custom_call.1} parent=0
    _
  %s12 = ssub.s32 1, %s10
  %s13 = scalar_select 0, %s12, %s10
  $region1: #{tpu_custom_call.1} parent=0
    #allocation3 [shape = 'u8[32768]{0}', space=vmem, size = 0x8000, scoped, tag = 'input window, operand 0']
    #allocation4 [shape = 's32[2]{0}', space=sflag, size = 0x8, scoped, tag = 'scoped memory for tpu_custom_call.1']
    #allocation5 [shape = 'u8[32768]{0}', space=vmem, size = 0x8000, scoped, tag = 'input window, operand 1']
    #allocation6 [shape = 's32[2]{0}', space=sflag, size = 0x8, scoped, tag = 'scoped memory for tpu_custom_call.1']
    #allocation7 [shape = 'u8[65536]{0}', space=vmem, size = 0x10000, scoped, tag = 'input window, operand 2, single buffered']
    #allocation8 [shape = 'u8[4096]{0}', space=vmem, size = 0x1000, scoped, tag = 'input window, operand 5, single buffered']
    #allocation9 [shape = 's32[1]{0}', space=sflag, size = 0x4, scoped, tag = 'scoped memory for tpu_custom_call.1']
    #allocation10 [shape = 'u8[4096]{0}', space=vmem, size = 0x1000, scoped, tag = 'input window, operand 7, single buffered']
    %14 = vsyncpa [#allocation4], 0
    %s15 = scalar_lea.sflag [#allocation4], 1
    %16 = vsyncpa %s15, 0
    %17 = vsyncpa [#allocation6], 0
    %s18 = scalar_lea.sflag [#allocation6], 1
    %19 = vsyncpa %s18, 0
    %20 = vsyncpa [#allocation9], 0
    loop: start=0, step=1, limit=4
    $region2: #{tpu_custom_call.1} parent=1 // loop_pre_header
      _
    $region3: #{tpu_custom_call.1} parent=1 // loop_header
      %s22 = sphi 0, %s26
      %p23 = scmp.ge.s32.totalorder %s22, 4
      %s32 = sphi 0, %s34
      %s35 = sphi 0, %s32
      %s36 = sphi 0, %s35
      %s52 = sphi 0, %s36
      %s58 = sphi 0, %s60
      %s61 = sphi 0, %s58
      %s62 = sphi 0, %s61
      %s78 = sphi 0, %s62
      %s82 = sphi 0, %s82
      %s84 = sphi 0, %s82
      %s85 = sphi 0, %s84
      %s99 = sphi 0, %s85
      %s103 = sphi 0, %s103
      %s105 = sphi 0, %s103
      %s106 = sphi 0, %s105
      %s120 = sphi 0, %s106
      %s124 = sphi 0, %s124
      %s126 = sphi 0, %s124
      %s127 = sphi 0, %s126
      %s141 = sphi 0, %s127
      %s145 = sphi 0, %s145
      %s147 = sphi 0, %s145
      %s148 = sphi 0, %s147
      %s162 = sphi 0, %s148
      %s166 = sphi 0, %s166
      %s168 = sphi 0, %s166
      %s169 = sphi 0, %s168
      %s183 = sphi 0, %s169
      %s187 = sphi 0, %s187
      %s189 = sphi 0, %s187
      %s190 = sphi 0, %s189
      %s204 = sphi 0, %s190
      %s208 = sphi 0, %s208
      %s210 = sphi 0, %s208
      %s211 = sphi 0, %s210
      %s225 = sphi 0, %s211
      %s231 = sphi 0, %s233
      %s234 = sphi 0, %s231
      %s235 = sphi 0, %s234
      %s251 = sphi 0, %s235
    $region4: #{tpu_custom_call.1} parent=1 // loop_header_branch
      %25 = sbr.rel (%p23) target = $region8
    $region5: #{tpu_custom_call.1} parent=1 // loop_body
      %s27 = ssub.s32 %s22, 1
      %s28 = ssub.s32 %s22, 2
      %s29 = sadd.s32 %s22, 1
      %s30 = ssub.s32 %s22, %s29
      %p31 = scmp.eq.s32.totalorder %s30, 0
      %s33 = sadd.s32 %s32, 1
      %s34 = scalar_select %p31, %s32, %s33
      %p37 = pneg %p31
      %p38 = scmp.eq.s32.totalorder %s22, 1
      %p39 = por %p37, %p38
      %p40 = scmp.ne.s32.totalorder %s32, %s35
      %p41 = scmp.eq.s32.totalorder %s22, 0
      %p42 = por %p40, %p41
      %p43 = scmp.ne.s32.totalorder %s32, %s35
      %p44 = scmp.eq.s32.totalorder %s27, 1
      %p45 = por %p43, %p44
      %p46 = scmp.ne.s32.totalorder %s35, %s36
      %p47 = scmp.eq.s32.totalorder %s27, 0
      %p48 = por %p46, %p47
      %p49 = scmp.ne.s32.totalorder %s35, %s36
      %p50 = scmp.eq.s32.totalorder %s28, 1
      %p51 = por %p49, %p50
      %p53 = scmp.ne.s32.totalorder %s36, %s52
      %p54 = scmp.eq.s32.totalorder %s28, 0
      %p55 = por %p53, %p54
      %s56 = ssub.s32 %s22, %s29
      %p57 = scmp.eq.s32.totalorder %s56, 0
      %s59 = sadd.s32 %s58, 1
      %s60 = scalar_select %p57, %s58, %s59
      %p63 = pneg %p57
      %p64 = scmp.eq.s32.totalorder %s22, 1
      %p65 = por %p63, %p64
      %p66 = scmp.ne.s32.totalorder %s58, %s61
      %p67 = scmp.eq.s32.totalorder %s22, 0
      %p68 = por %p66, %p67
      %p69 = scmp.ne.s32.totalorder %s58, %s61
      %p70 = scmp.eq.s32.totalorder %s27, 1
      %p71 = por %p69, %p70
      %p72 = scmp.ne.s32.totalorder %s61, %s62
      %p73 = scmp.eq.s32.totalorder %s27, 0
      %p74 = por %p72, %p73
      %p75 = scmp.ne.s32.totalorder %s61, %s62
      %p76 = scmp.eq.s32.totalorder %s28, 1
      %p77 = por %p75, %p76
      %p79 = scmp.ne.s32.totalorder %s62, %s78
      %p80 = scmp.eq.s32.totalorder %s28, 0
      %p81 = por %p79, %p80
      %s83 = sadd.s32 %s82, 1
      %p86 = scmp.eq.s32.totalorder %s22, 1
      %p87 = scmp.ne.s32.totalorder %s82, %s84
      %p88 = scmp.eq.s32.totalorder %s22, 0
      %p89 = por %p87, %p88
      %p90 = scmp.ne.s32.totalorder %s82, %s84
      %p91 = scmp.eq.s32.totalorder %s27, 1
      %p92 = por %p90, %p91
      %p93 = scmp.ne.s32.totalorder %s84, %s85
      %p94 = scmp.eq.s32.totalorder %s27, 0
      %p95 = por %p93, %p94
      %p96 = scmp.ne.s32.totalorder %s84, %s85
      %p97 = scmp.eq.s32.totalorder %s28, 1
      %p98 = por %p96, %p97
      %p100 = scmp.ne.s32.totalorder %s85, %s99
      %p101 = scmp.eq.s32.totalorder %s28, 0
      %p102 = por %p100, %p101
      %s104 = sadd.s32 %s103, 1
      %p107 = scmp.eq.s32.totalorder %s22, 1
      %p108 = scmp.ne.s32.totalorder %s103, %s105
      %p109 = scmp.eq.s32.totalorder %s22, 0
      %p110 = por %p108, %p109
      %p111 = scmp.ne.s32.totalorder %s103, %s105
      %p112 = scmp.eq.s32.totalorder %s27, 1
      %p113 = por %p111, %p112
      %p114 = scmp.ne.s32.totalorder %s105, %s106
      %p115 = scmp.eq.s32.totalorder %s27, 0
      %p116 = por %p114, %p115
      %p117 = scmp.ne.s32.totalorder %s105, %s106
      %p118 = scmp.eq.s32.totalorder %s28, 1
      %p119 = por %p117, %p118
      %p121 = scmp.ne.s32.totalorder %s106, %s120
      %p122 = scmp.eq.s32.totalorder %s28, 0
      %p123 = por %p121, %p122
      %s125 = sadd.s32 %s124, 1
      %p128 = scmp.eq.s32.totalorder %s22, 1
      %p129 = scmp.ne.s32.totalorder %s124, %s126
      %p130 = scmp.eq.s32.totalorder %s22, 0
      %p131 = por %p129, %p130
      %p132 = scmp.ne.s32.totalorder %s124, %s126
      %p133 = scmp.eq.s32.totalorder %s27, 1
      %p134 = por %p132, %p133
      %p135 = scmp.ne.s32.totalorder %s126, %s127
      %p136 = scmp.eq.s32.totalorder %s27, 0
      %p137 = por %p135, %p136
      %p138 = scmp.ne.s32.totalorder %s126, %s127
      %p139 = scmp.eq.s32.totalorder %s28, 1
      %p140 = por %p138, %p139
      %p142 = scmp.ne.s32.totalorder %s127, %s141
      %p143 = scmp.eq.s32.totalorder %s28, 0
      %p144 = por %p142, %p143
      %s146 = sadd.s32 %s145, 1
      %p149 = scmp.eq.s32.totalorder %s22, 1
      %p150 = scmp.ne.s32.totalorder %s145, %s147
      %p151 = scmp.eq.s32.totalorder %s22, 0
      %p152 = por %p150, %p151
      %p153 = scmp.ne.s32.totalorder %s145, %s147
      %p154 = scmp.eq.s32.totalorder %s27, 1
      %p155 = por %p153, %p154
      %p156 = scmp.ne.s32.totalorder %s147, %s148
      %p157 = scmp.eq.s32.totalorder %s27, 0
      %p158 = por %p156, %p157
      %p159 = scmp.ne.s32.totalorder %s147, %s148
      %p160 = scmp.eq.s32.totalorder %s28, 1
      %p161 = por %p159, %p160
      %p163 = scmp.ne.s32.totalorder %s148, %s162
      %p164 = scmp.eq.s32.totalorder %s28, 0
      %p165 = por %p163, %p164
      %s167 = sadd.s32 %s166, 1
      %p170 = scmp.eq.s32.totalorder %s22, 1
      %p171 = scmp.ne.s32.totalorder %s166, %s168
      %p172 = scmp.eq.s32.totalorder %s22, 0
      %p173 = por %p171, %p172
      %p174 = scmp.ne.s32.totalorder %s166, %s168
      %p175 = scmp.eq.s32.totalorder %s27, 1
      %p176 = por %p174, %p175
      %p177 = scmp.ne.s32.totalorder %s168, %s169
      %p178 = scmp.eq.s32.totalorder %s27, 0
      %p179 = por %p177, %p178
      %p180 = scmp.ne.s32.totalorder %s168, %s169
      %p181 = scmp.eq.s32.totalorder %s28, 1
      %p182 = por %p180, %p181
      %p184 = scmp.ne.s32.totalorder %s169, %s183
      %p185 = scmp.eq.s32.totalorder %s28, 0
      %p186 = por %p184, %p185
      %s188 = sadd.s32 %s187, 1
      %p191 = scmp.eq.s32.totalorder %s22, 1
      %p192 = scmp.ne.s32.totalorder %s187, %s189
      %p193 = scmp.eq.s32.totalorder %s22, 0
      %p194 = por %p192, %p193
      %p195 = scmp.ne.s32.totalorder %s187, %s189
      %p196 = scmp.eq.s32.totalorder %s27, 1
      %p197 = por %p195, %p196
      %p198 = scmp.ne.s32.totalorder %s189, %s190
      %p199 = scmp.eq.s32.totalorder %s27, 0
      %p200 = por %p198, %p199
      %p201 = scmp.ne.s32.totalorder %s189, %s190
      %p202 = scmp.eq.s32.totalorder %s28, 1
      %p203 = por %p201, %p202
      %p205 = scmp.ne.s32.totalorder %s190, %s204
      %p206 = scmp.eq.s32.totalorder %s28, 0
      %p207 = por %p205, %p206
      %s209 = sadd.s32 %s208, 1
      %p212 = scmp.eq.s32.totalorder %s22, 1
      %p213 = scmp.ne.s32.totalorder %s208, %s210
      %p214 = scmp.eq.s32.totalorder %s22, 0
      %p215 = por %p213, %p214
      %p216 = scmp.ne.s32.totalorder %s208, %s210
      %p217 = scmp.eq.s32.totalorder %s27, 1
      %p218 = por %p216, %p217
      %p219 = scmp.ne.s32.totalorder %s210, %s211
      %p220 = scmp.eq.s32.totalorder %s27, 0
      %p221 = por %p219, %p220
      %p222 = scmp.ne.s32.totalorder %s210, %s211
      %p223 = scmp.eq.s32.totalorder %s28, 1
      %p224 = por %p222, %p223
      %p226 = scmp.ne.s32.totalorder %s211, %s225
      %p227 = scmp.eq.s32.totalorder %s28, 0
      %p228 = por %p226, %p227
      %s229 = ssub.s32 %s22, %s29
      %p230 = scmp.eq.s32.totalorder %s229, 0
      %s232 = sadd.s32 %s231, 1
      %s233 = scalar_select %p230, %s231, %s232
      %p236 = pneg %p230
      %p237 = scmp.eq.s32.totalorder %s22, 1
      %p238 = por %p236, %p237
      %p239 = scmp.ne.s32.totalorder %s231, %s234
      %p240 = scmp.eq.s32.totalorder %s22, 0
      %p241 = por %p239, %p240
      %p242 = scmp.ne.s32.totalorder %s231, %s234
      %p243 = scmp.eq.s32.totalorder %s27, 1
      %p244 = por %p242, %p243
      %p245 = scmp.ne.s32.totalorder %s234, %s235
      %p246 = scmp.eq.s32.totalorder %s27, 0
      %p247 = por %p245, %p246
      %p248 = scmp.ne.s32.totalorder %s234, %s235
      %p249 = scmp.eq.s32.totalorder %s28, 1
      %p250 = por %p248, %p249
      %p252 = scmp.ne.s32.totalorder %s235, %s251
      %p253 = scmp.eq.s32.totalorder %s28, 0
      %p254 = por %p252, %p253
      %p255 = scmp.le.s32.totalorder 1, %s22
      %p256 = scmp.lt.s32.totalorder %s22, 3
      %p257 = pnand %p255, %p256
      %p258 = pneg %p257
      // Predicated region
      $region9: #{tpu_custom_call.1} parent=5 // pred_check
        _
      $region10: #{tpu_custom_call.1} parent=5 // pred_check_branch
        %260 = sbr.rel (%p257) target = $region12
      $region11: #{tpu_custom_call.1} parent=5 // pred_region
        %s261 = ssub.s32 %s22, 1
        // Predicated region
        $region13: #{tpu_custom_call.1} parent=11 // pred_check
          %p262 = pneg %p95
        $region14: #{tpu_custom_call.1} parent=11 // pred_check_branch
          %264 = sbr.rel (%p262) target = $region16
        $region15: #{tpu_custom_call.1} parent=11 // pred_region
          %s266 = ssub.s32 2048, 2048
          %267 = vsyncadd [#allocation6], %s266
          %s268 = sshll.u32 [#allocation7], 4
          %s269 = int_to_ptr.vmem [resolvable:$true] %s268
          %274 = dma.hbm_to_vmem [thread:$0]  %s2, 2048, %s269, [#allocation6], 512, 512, 32
        $region16: #{tpu_custom_call.1} parent=11 // pred_fallthru
          _
        // Predicated region
        $region17: #{tpu_custom_call.1} parent=11 // pred_check
          %p275 = pneg %p116
        $region18: #{tpu_custom_call.1} parent=11 // pred_check_branch
          %277 = sbr.rel (%p275) target = $region20
        $region19: #{tpu_custom_call.1} parent=11 // pred_region
          _
        $region20: #{tpu_custom_call.1} parent=11 // pred_fallthru
          _
        // Predicated region
        $region21: #{tpu_custom_call.1} parent=11 // pred_check
          %p278 = pneg %p137
        $region22: #{tpu_custom_call.1} parent=11 // pred_check_branch
          %280 = sbr.rel (%p278) target = $region24
        $region23: #{tpu_custom_call.1} parent=11 // pred_region
          _
        $region24: #{tpu_custom_call.1} parent=11 // pred_fallthru
          _
        // Predicated region
        $region25: #{tpu_custom_call.1} parent=11 // pred_check
          %p281 = pneg %p158
        $region26: #{tpu_custom_call.1} parent=11 // pred_check_branch
          %283 = sbr.rel (%p281) target = $region28
        $region27: #{tpu_custom_call.1} parent=11 // pred_region
          %s285 = ssub.s32 128, 128
          %286 = vsyncadd [#allocation9], %s285
          %s288 = sshll.u32 [#allocation8], 4
          %s289 = int_to_ptr.vmem [resolvable:$true] %s288
          %291 = dma.hbm_to_vmem [thread:$0]  %s5, 128, %s289, [#allocation9]
        $region28: #{tpu_custom_call.1} parent=11 // pred_fallthru
          _
        // Predicated region
        $region29: #{tpu_custom_call.1} parent=11 // pred_check
          %p292 = pneg %p179
        $region30: #{tpu_custom_call.1} parent=11 // pred_check_branch
          %294 = sbr.rel (%p292) target = $region32
        $region31: #{tpu_custom_call.1} parent=11 // pred_region
          _
        $region32: #{tpu_custom_call.1} parent=11 // pred_fallthru
          _
        // Predicated region
        $region33: #{tpu_custom_call.1} parent=11 // pred_check
          %p295 = pneg %p200
        $region34: #{tpu_custom_call.1} parent=11 // pred_check_branch
          %297 = sbr.rel (%p295) target = $region36
        $region35: #{tpu_custom_call.1} parent=11 // pred_region
          %s299 = ssub.s32 128, 128
          %300 = vsyncadd [#allocation9], %s299
          %s302 = sshll.u32 [#allocation10], 4
          %s303 = int_to_ptr.vmem [resolvable:$true] %s302
          %305 = dma.hbm_to_vmem [thread:$0]  %s7, 128, %s303, [#allocation9]
        $region36: #{tpu_custom_call.1} parent=11 // pred_fallthru
          _
        // Predicated region
        $region37: #{tpu_custom_call.1} parent=11 // pred_check
          %p306 = pneg %p221
        $region38: #{tpu_custom_call.1} parent=11 // pred_check_branch
          %308 = sbr.rel (%p306) target = $region40
        $region39: #{tpu_custom_call.1} parent=11 // pred_region
          _
        $region40: #{tpu_custom_call.1} parent=11 // pred_fallthru
          _
      $region12: #{tpu_custom_call.1} parent=5 // pred_fallthru
        _
      %p309 = scmp.lt.s32.totalorder %s22, 2
      // Predicated region
      $region41: #{tpu_custom_call.1} parent=5 // pred_check
        %p310 = pneg %p309
      $region42: #{tpu_custom_call.1} parent=5 // pred_check_branch
        %312 = sbr.rel (%p310) target = $region44
      $region43: #{tpu_custom_call.1} parent=5 // pred_region
        // Predicated region
        $region45: #{tpu_custom_call.1} parent=43 // pred_check
          %p313 = pneg %p42
        $region46: #{tpu_custom_call.1} parent=43 // pred_check_branch
          %315 = sbr.rel (%p313) target = $region48
        $region47: #{tpu_custom_call.1} parent=43 // pred_region
          %s316 = sand.u32 %s32, 1
          %s317 = scalar_lea.sflag [#allocation4], %s316
          %s318 = sand.u32 %s32, 1
          %s319 = smul.addr %s318, 32
          %s320 = scalar_lea.vmem [#allocation3], %s319
          %s322 = ssub.s32 512, 512
          %323 = vsyncadd %s317, %s322
          %s324 = smul.addr %s22, 4
          %s325 = smul.addr %s324, 128
          %s326 = scalar_lea.hbm %s0, %s325
          %s328 = sshll.u32 %s320, 4
          %s329 = int_to_ptr.vmem [resolvable:$true] %s328
          %331 = dma.hbm_to_vmem [thread:$0]  %s326, 512, %s329, %s317
        $region48: #{tpu_custom_call.1} parent=43 // pred_fallthru
          _
        // Predicated region
        $region49: #{tpu_custom_call.1} parent=43 // pred_check
          %p332 = pneg %p68
        $region50: #{tpu_custom_call.1} parent=43 // pred_check_branch
          %334 = sbr.rel (%p332) target = $region52
        $region51: #{tpu_custom_call.1} parent=43 // pred_region
          %s335 = sand.u32 %s22, 1
          %s336 = scalar_lea.sflag [#allocation6], %s335
          %s337 = sand.u32 %s58, 1
          %s338 = smul.addr %s337, 32
          %s339 = scalar_lea.vmem [#allocation5], %s338
          %s341 = ssub.s32 512, 512
          %342 = vsyncadd %s336, %s341
          %s343 = smul.addr %s22, 4
          %s344 = smul.addr %s343, 128
          %s345 = scalar_lea.hbm %s1, %s344
          %s347 = sshll.u32 %s339, 4
          %s348 = int_to_ptr.vmem [resolvable:$true] %s347
          %350 = dma.hbm_to_vmem [thread:$0]  %s345, 512, %s348, %s336
        $region52: #{tpu_custom_call.1} parent=43 // pred_fallthru
          _
      $region44: #{tpu_custom_call.1} parent=5 // pred_fallthru
        _
      %p351 = scmp.le.s32.totalorder 1, %s22
      %p352 = scmp.lt.s32.totalorder %s22, 3
      %p353 = pnand %p351, %p352
      %p354 = pneg %p353
      // Predicated region
      $region53: #{tpu_custom_call.1} parent=5 // pred_check
        _
      $region54: #{tpu_custom_call.1} parent=5 // pred_check_branch
        %356 = sbr.rel (%p353) target = $region56
      $region55: #{tpu_custom_call.1} parent=5 // pred_region
        %s357 = ssub.s32 %s22, 1
        %s358 = sand.u32 %s35, 1
        %s359 = scalar_lea.sflag [#allocation4], %s358
        %s360 = sand.u32 %s35, 1
        %s361 = smul.addr %s360, 32
        %s362 = scalar_lea.vmem [#allocation3], %s361
        // Predicated region
        $region57: #{tpu_custom_call.1} parent=55 // pred_check
          %p363 = pneg %p48
        $region58: #{tpu_custom_call.1} parent=55 // pred_check_branch
          %365 = sbr.rel (%p363) target = $region60
        $region59: #{tpu_custom_call.1} parent=55 // pred_region
          %366 = dma.done %s359, 512
        $region60: #{tpu_custom_call.1} parent=55 // pred_fallthru
          _
        %s367 = sand.u32 %s27, 1
        %s368 = scalar_lea.sflag [#allocation6], %s367
        %s369 = sand.u32 %s61, 1
        %s370 = smul.addr %s369, 32
        %s371 = scalar_lea.vmem [#allocation5], %s370
        // Predicated region
        $region61: #{tpu_custom_call.1} parent=55 // pred_check
          %p372 = pneg %p74
        $region62: #{tpu_custom_call.1} parent=55 // pred_check_branch
          %374 = sbr.rel (%p372) target = $region64
        $region63: #{tpu_custom_call.1} parent=55 // pred_region
          %375 = dma.done %s368, 512
        $region64: #{tpu_custom_call.1} parent=55 // pred_fallthru
          _
        // Predicated region
        $region65: #{tpu_custom_call.1} parent=55 // pred_check
          %p376 = pneg %p95
        $region66: #{tpu_custom_call.1} parent=55 // pred_check_branch
          %378 = sbr.rel (%p376) target = $region68
        $region67: #{tpu_custom_call.1} parent=55 // pred_region
          %379 = dma.done [#allocation6], 2048
        $region68: #{tpu_custom_call.1} parent=55 // pred_fallthru
          _
        // Predicated region
        $region69: #{tpu_custom_call.1} parent=55 // pred_check
          %p380 = pneg %p158
        $region70: #{tpu_custom_call.1} parent=55 // pred_check_branch
          %382 = sbr.rel (%p380) target = $region72
        $region71: #{tpu_custom_call.1} parent=55 // pred_region
          %383 = dma.done [#allocation9], 128
        $region72: #{tpu_custom_call.1} parent=55 // pred_fallthru
          _
        // Predicated region
        $region73: #{tpu_custom_call.1} parent=55 // pred_check
          %p384 = pneg %p200
        $region74: #{tpu_custom_call.1} parent=55 // pred_check_branch
          %386 = sbr.rel (%p384) target = $region76
        $region75: #{tpu_custom_call.1} parent=55 // pred_region
          %387 = dma.done [#allocation9], 128
        $region76: #{tpu_custom_call.1} parent=55 // pred_fallthru
          _
        %s388 = sand.u32 %s35, 1
        %s389 = scalar_lea.sflag [#allocation4], %s388
        %s390 = sand.u32 %s35, 1
        %s391 = smul.addr %s390, 32
        %s392 = scalar_lea.vmem [#allocation3], %s391
        %p393 = pneg %p48
        %p394 = pneg %p45
        %s395 = sand.u32 %s27, 1
        %s396 = scalar_lea.sflag [#allocation6], %s395
        %s397 = sand.u32 %s61, 1
        %s398 = smul.addr %s397, 32
        %s399 = scalar_lea.vmem [#allocation5], %s398
        %p400 = pneg %p74
        %p401 = pneg %p71
        %p402 = pneg %p95
        %p403 = pneg %p92
        %p404 = pneg %p116
        %p405 = pneg %p113
        %p406 = pneg %p137
        %p407 = pneg %p134
        %p408 = pneg %p158
        %p409 = pneg %p155
        %p410 = pneg %p179
        %p411 = pneg %p176
        %p412 = pneg %p200
        %p413 = pneg %p197
        %p414 = pneg %p221
        %p415 = pneg %p218
        %p416 = pneg %p247
        %p417 = pneg %p244
        %p418 = scmp.lt.s32.totalorder %s27, 1
        %s419 = scalar_select %p418, %s27, 1
        %s420 = smul.addr %s419, 4
        %s421 = smul.addr %s420, 4
        %s422 = scalar_lea.vmem %s9, %s421
        %p423 = scmp.lt.s32.totalorder %s27, 1
        %s424 = scalar_select %p423, %s27, 1
        %s425 = smul.addr %s424, 4
        %s426 = smul.addr %s425, 4
        %s427 = scalar_lea.vmem %s9, %s426
        %v428 = vld [vmem:[%s371] sm:$0xff]
        %v429 = vld [vmem:[%s371 + $0x8] sm:$0xff]
        %v430 = vld [vmem:[%s371 + $0x10] sm:$0xff]
        %v431 = vld [vmem:[%s371 + $0x18] sm:$0xff]
        %v432 = vld [vmem:[%s3] sm:$0xff]
        %v433 = vld [vmem:[%s3 + $0x8] sm:$0xff]
        %v434 = vld [vmem:[%s4] sm:$0xff]
        %435 = vrot.lane.b32.xlu0 %v428, 73
        %v436 = vpop.permute.xlu0 %435
        %437 = vrot.lane.b32.xlu0 %v429, 73
        %v438 = vpop.permute.xlu0 %437
        %439 = vrot.lane.b32.xlu0 %v430, 73
        %v440 = vpop.permute.xlu0 %439
        %441 = vrot.lane.b32.xlu0 %v431, 73
        %v442 = vpop.permute.xlu0 %441
        %v443 = vlaneseq
        %v444 = vand.u32 %v443, 127
        %vm445 = vcmp.lt.s32.totalorder %v444, 73
        %v446 = vsel %vm445, %v440, %v442
        %v447 = vsel %vm445, %v438, %v440
        %v448 = vsel %vm445, %v436, %v438
        %v449 = vsel %vm445, %v442, %v436
        %v450 = vld [vmem:[#allocation7] ss:$8 sm:$0xf]
        %v452 = vlaneseq
        %v453 = vshrl.u32 %v452, 7
        %v454 = vsub.s32 0, %v453
        %v455 = vrot.slane %v450, %v454
        %v456 = vlaneseq
        %v457 = vshrl.u32 %v456, 7
        %v458 = vsub.s32 1, %v457
        %v459 = vrot.slane %v450, %v458
        %v460 = vlaneseq
        %v461 = vshrl.u32 %v460, 7
        %v462 = vsub.s32 2, %v461
        %v463 = vrot.slane %v450, %v462
        %v464 = vlaneseq
        %v465 = vshrl.u32 %v464, 7
        %v466 = vsub.s32 3, %v465
        %v467 = vrot.slane %v450, %v466
        %v472 = vmul.f32 %v449, %v455
        %v473 = vmul.f32 %v448, %v459
        %v474 = vmul.f32 %v447, %v463
        %v475 = vmul.f32 %v446, %v467
        %476 = vst [vmem:[#allocation2] sm:$0xff] %v472
        %477 = vst [vmem:[#allocation2 + $0x8] sm:$0xff] %v473
        %478 = vst [vmem:[#allocation2 + $0x10] sm:$0xff] %v474
        %479 = vst [vmem:[#allocation2 + $0x18] sm:$0xff] %v475
        %480 = vrot.lane.b32.xlu0 %v428, 72
        %v481 = vpop.permute.xlu0 %480
        %482 = vrot.lane.b32.xlu0 %v429, 72
        %v483 = vpop.permute.xlu0 %482
        %484 = vrot.lane.b32.xlu0 %v430, 72
        %v485 = vpop.permute.xlu0 %484
        %486 = vrot.lane.b32.xlu0 %v431, 72
        %v487 = vpop.permute.xlu0 %486
        %vm488 = vcmp.lt.s32.totalorder %v444, 72
        %v489 = vsel %vm488, %v485, %v487
        %v490 = vsel %vm488, %v483, %v485
        %v491 = vsel %vm488, %v481, %v483
        %v492 = vsel %vm488, %v487, %v481
        %s493 = scalar_lea.vmem [#allocation7], 1
        %v494 = vld [vmem:[%s493] ss:$8 sm:$0xf]
        %v496 = vlaneseq
        %v497 = vshrl.u32 %v496, 7
        %v498 = vsub.s32 0, %v497
        %v499 = vrot.slane %v494, %v498
        %v500 = vlaneseq
        %v501 = vshrl.u32 %v500, 7
        %v502 = vsub.s32 1, %v501
        %v503 = vrot.slane %v494, %v502
        %v504 = vlaneseq
        %v505 = vshrl.u32 %v504, 7
        %v506 = vsub.s32 2, %v505
        %v507 = vrot.slane %v494, %v506
        %v508 = vlaneseq
        %v509 = vshrl.u32 %v508, 7
        %v510 = vsub.s32 3, %v509
        %v511 = vrot.slane %v494, %v510
        %v516 = vmul.f32 %v492, %v499
        %v517 = vmul.f32 %v491, %v503
        %v518 = vmul.f32 %v490, %v507
        %v519 = vmul.f32 %v489, %v511
        %520 = vst [vmem:[#allocation2 + $0x20] sm:$0xff] %v516
        %521 = vst [vmem:[#allocation2 + $0x28] sm:$0xff] %v517
        %522 = vst [vmem:[#allocation2 + $0x30] sm:$0xff] %v518
        %523 = vst [vmem:[#allocation2 + $0x38] sm:$0xff] %v519
        %524 = vrot.lane.b32.xlu0 %v428, 71
        %v525 = vpop.permute.xlu0 %524
        %526 = vrot.lane.b32.xlu0 %v429, 71
        %v527 = vpop.permute.xlu0 %526
        %528 = vrot.lane.b32.xlu0 %v430, 71
        %v529 = vpop.permute.xlu0 %528
        %530 = vrot.lane.b32.xlu0 %v431, 71
        %v531 = vpop.permute.xlu0 %530
        %vm532 = vcmp.lt.s32.totalorder %v444, 71
        %v533 = vsel %vm532, %v529, %v531
        %v534 = vsel %vm532, %v527, %v529
        %v535 = vsel %vm532, %v525, %v527
        %v536 = vsel %vm532, %v531, %v525
        %s537 = scalar_lea.vmem [#allocation7], 2
        %v538 = vld [vmem:[%s537] ss:$8 sm:$0xf]
        %v540 = vlaneseq
        %v541 = vshrl.u32 %v540, 7
        %v542 = vsub.s32 0, %v541
        %v543 = vrot.slane %v538, %v542
        %v544 = vlaneseq
        %v545 = vshrl.u32 %v544, 7
        %v546 = vsub.s32 1, %v545
        %v547 = vrot.slane %v538, %v546
        %v548 = vlaneseq
        %v549 = vshrl.u32 %v548, 7
        %v550 = vsub.s32 2, %v549
        %v551 = vrot.slane %v538, %v550
        %v552 = vlaneseq
        %v553 = vshrl.u32 %v552, 7
        %v554 = vsub.s32 3, %v553
        %v555 = vrot.slane %v538, %v554
        %v560 = vmul.f32 %v536, %v543
        %v561 = vmul.f32 %v535, %v547
        %v562 = vmul.f32 %v534, %v551
        %v563 = vmul.f32 %v533, %v555
        %564 = vst [vmem:[#allocation2 + $0x40] sm:$0xff] %v560
        %565 = vst [vmem:[#allocation2 + $0x48] sm:$0xff] %v561
        %566 = vst [vmem:[#allocation2 + $0x50] sm:$0xff] %v562
        %567 = vst [vmem:[#allocation2 + $0x58] sm:$0xff] %v563
        %568 = vrot.lane.b32.xlu0 %v428, 65
        %v569 = vpop.permute.xlu0 %568
        %570 = vrot.lane.b32.xlu0 %v429, 65
        %v571 = vpop.permute.xlu0 %570
        %572 = vrot.lane.b32.xlu0 %v430, 65
        %v573 = vpop.permute.xlu0 %572
        %574 = vrot.lane.b32.xlu0 %v431, 65
        %v575 = vpop.permute.xlu0 %574
        %vm576 = vcmp.lt.s32.totalorder %v444, 65
        %v577 = vsel %vm576, %v573, %v575
        %v578 = vsel %vm576, %v571, %v573
        %v579 = vsel %vm576, %v569, %v571
        %v580 = vsel %vm576, %v575, %v569
        %s581 = scalar_lea.vmem [#allocation7], 3
        %v582 = vld [vmem:[%s581] ss:$8 sm:$0xf]
        %v584 = vlaneseq
        %v585 = vshrl.u32 %v584, 7
        %v586 = vsub.s32 0, %v585
        %v587 = vrot.slane %v582, %v586
        %v588 = vlaneseq
        %v589 = vshrl.u32 %v588, 7
        %v590 = vsub.s32 1, %v589
        %v591 = vrot.slane %v582, %v590
        %v592 = vlaneseq
        %v593 = vshrl.u32 %v592, 7
        %v594 = vsub.s32 2, %v593
        %v595 = vrot.slane %v582, %v594
        %v596 = vlaneseq
        %v597 = vshrl.u32 %v596, 7
        %v598 = vsub.s32 3, %v597
        %v599 = vrot.slane %v582, %v598
        %v604 = vmul.f32 %v580, %v587
        %v605 = vmul.f32 %v579, %v591
        %v606 = vmul.f32 %v578, %v595
        %v607 = vmul.f32 %v577, %v599
        %608 = vst [vmem:[#allocation2 + $0x60] sm:$0xff] %v604
        %609 = vst [vmem:[#allocation2 + $0x68] sm:$0xff] %v605
        %610 = vst [vmem:[#allocation2 + $0x70] sm:$0xff] %v606
        %611 = vst [vmem:[#allocation2 + $0x78] sm:$0xff] %v607
        %612 = vrot.lane.b32.xlu0 %v428, 64
        %v613 = vpop.permute.xlu0 %612
        %614 = vrot.lane.b32.xlu0 %v429, 64
        %v615 = vpop.permute.xlu0 %614
        %616 = vrot.lane.b32.xlu0 %v430, 64
        %v617 = vpop.permute.xlu0 %616
        %618 = vrot.lane.b32.xlu0 %v431, 64
        %v619 = vpop.permute.xlu0 %618
        %vm620 = vcmp.lt.s32.totalorder %v444, 64
        %v621 = vsel %vm620, %v617, %v619
        %v622 = vsel %vm620, %v615, %v617
        %v623 = vsel %vm620, %v613, %v615
        %v624 = vsel %vm620, %v619, %v613
        %s625 = scalar_lea.vmem [#allocation7], 4
        %v626 = vld [vmem:[%s625] ss:$8 sm:$0xf]
        %v628 = vlaneseq
        %v629 = vshrl.u32 %v628, 7
        %v630 = vsub.s32 0, %v629
        %v631 = vrot.slane %v626, %v630
        %v632 = vlaneseq
        %v633 = vshrl.u32 %v632, 7
        %v634 = vsub.s32 1, %v633
        %v635 = vrot.slane %v626, %v634
        %v636 = vlaneseq
        %v637 = vshrl.u32 %v636, 7
        %v638 = vsub.s32 2, %v637
        %v639 = vrot.slane %v626, %v638
        %v640 = vlaneseq
        %v641 = vshrl.u32 %v640, 7
        %v642 = vsub.s32 3, %v641
        %v643 = vrot.slane %v626, %v642
        %v648 = vmul.f32 %v624, %v631
        %v649 = vmul.f32 %v623, %v635
        %v650 = vmul.f32 %v622, %v639
        %v651 = vmul.f32 %v621, %v643
        %652 = vst [vmem:[#allocation2 + $0x80] sm:$0xff] %v648
        %653 = vst [vmem:[#allocation2 + $0x88] sm:$0xff] %v649
        %654 = vst [vmem:[#allocation2 + $0x90] sm:$0xff] %v650
        %655 = vst [vmem:[#allocation2 + $0x98] sm:$0xff] %v651
        %656 = vrot.lane.b32.xlu0 %v428, 63
        %v657 = vpop.permute.xlu0 %656
        %658 = vrot.lane.b32.xlu0 %v429, 63
        %v659 = vpop.permute.xlu0 %658
        %660 = vrot.lane.b32.xlu0 %v430, 63
        %v661 = vpop.permute.xlu0 %660
        %662 = vrot.lane.b32.xlu0 %v431, 63
        %v663 = vpop.permute.xlu0 %662
        %vm664 = vcmp.lt.s32.totalorder %v444, 63
        %v665 = vsel %vm664, %v661, %v663
        %v666 = vsel %vm664, %v659, %v661
        %v667 = vsel %vm664, %v657, %v659
        %v668 = vsel %vm664, %v663, %v657
        %s669 = scalar_lea.vmem [#allocation7], 5
        %v670 = vld [vmem:[%s669] ss:$8 sm:$0xf]
        %v672 = vlaneseq
        %v673 = vshrl.u32 %v672, 7
        %v674 = vsub.s32 0, %v673
        %v675 = vrot.slane %v670, %v674
        %v676 = vlaneseq
        %v677 = vshrl.u32 %v676, 7
        %v678 = vsub.s32 1, %v677
        %v679 = vrot.slane %v670, %v678
        %v680 = vlaneseq
        %v681 = vshrl.u32 %v680, 7
        %v682 = vsub.s32 2, %v681
        %v683 = vrot.slane %v670, %v682
        %v684 = vlaneseq
        %v685 = vshrl.u32 %v684, 7
        %v686 = vsub.s32 3, %v685
        %v687 = vrot.slane %v670, %v686
        %v692 = vmul.f32 %v668, %v675
        %v693 = vmul.f32 %v667, %v679
        %v694 = vmul.f32 %v666, %v683
        %v695 = vmul.f32 %v665, %v687
        %696 = vst [vmem:[#allocation2 + $0xa0] sm:$0xff] %v692
        %697 = vst [vmem:[#allocation2 + $0xa8] sm:$0xff] %v693
        %698 = vst [vmem:[#allocation2 + $0xb0] sm:$0xff] %v694
        %699 = vst [vmem:[#allocation2 + $0xb8] sm:$0xff] %v695
        %700 = vrot.lane.b32.xlu0 %v428, 57
        %v701 = vpop.permute.xlu0 %700
        %702 = vrot.lane.b32.xlu0 %v429, 57
        %v703 = vpop.permute.xlu0 %702
        %704 = vrot.lane.b32.xlu0 %v430, 57
        %v705 = vpop.permute.xlu0 %704
        %706 = vrot.lane.b32.xlu0 %v431, 57
        %v707 = vpop.permute.xlu0 %706
        %vm708 = vcmp.lt.s32.totalorder %v444, 57
        %v709 = vsel %vm708, %v705, %v707
        %v710 = vsel %vm708, %v703, %v705
        %v711 = vsel %vm708, %v701, %v703
        %v712 = vsel %vm708, %v707, %v701
        %s713 = scalar_lea.vmem [#allocation7], 6
        %v714 = vld [vmem:[%s713] ss:$8 sm:$0xf]
        %v716 = vlaneseq
        %v717 = vshrl.u32 %v716, 7
        %v718 = vsub.s32 0, %v717
        %v719 = vrot.slane %v714, %v718
        %v720 = vlaneseq
        %v721 = vshrl.u32 %v720, 7
        %v722 = vsub.s32 1, %v721
        %v723 = vrot.slane %v714, %v722
        %v724 = vlaneseq
        %v725 = vshrl.u32 %v724, 7
        %v726 = vsub.s32 2, %v725
        %v727 = vrot.slane %v714, %v726
        %v728 = vlaneseq
        %v729 = vshrl.u32 %v728, 7
        %v730 = vsub.s32 3, %v729
        %v731 = vrot.slane %v714, %v730
        %v736 = vmul.f32 %v712, %v719
        %v737 = vmul.f32 %v711, %v723
        %v738 = vmul.f32 %v710, %v727
        %v739 = vmul.f32 %v709, %v731
        %740 = vst [vmem:[#allocation2 + $0xc0] sm:$0xff] %v736
        %741 = vst [vmem:[#allocation2 + $0xc8] sm:$0xff] %v737
        %742 = vst [vmem:[#allocation2 + $0xd0] sm:$0xff] %v738
        %743 = vst [vmem:[#allocation2 + $0xd8] sm:$0xff] %v739
        %744 = vrot.lane.b32.xlu0 %v428, 56
        %v745 = vpop.permute.xlu0 %744
        %746 = vrot.lane.b32.xlu0 %v429, 56
        %v747 = vpop.permute.xlu0 %746
        %748 = vrot.lane.b32.xlu0 %v430, 56
        %v749 = vpop.permute.xlu0 %748
        %750 = vrot.lane.b32.xlu0 %v431, 56
        %v751 = vpop.permute.xlu0 %750
        %vm752 = vcmp.lt.s32.totalorder %v444, 56
        %v753 = vsel %vm752, %v749, %v751
        %v754 = vsel %vm752, %v747, %v749
        %v755 = vsel %vm752, %v745, %v747
        %v756 = vsel %vm752, %v751, %v745
        %s757 = scalar_lea.vmem [#allocation7], 7
        %v758 = vld [vmem:[%s757] ss:$8 sm:$0xf]
        %v760 = vlaneseq
        %v761 = vshrl.u32 %v760, 7
        %v762 = vsub.s32 0, %v761
        %v763 = vrot.slane %v758, %v762
        %v764 = vlaneseq
        %v765 = vshrl.u32 %v764, 7
        %v766 = vsub.s32 1, %v765
        %v767 = vrot.slane %v758, %v766
        %v768 = vlaneseq
        %v769 = vshrl.u32 %v768, 7
        %v770 = vsub.s32 2, %v769
        %v771 = vrot.slane %v758, %v770
        %v772 = vlaneseq
        %v773 = vshrl.u32 %v772, 7
        %v774 = vsub.s32 3, %v773
        %v775 = vrot.slane %v758, %v774
        %v780 = vmul.f32 %v756, %v763
        %v781 = vmul.f32 %v755, %v767
        %v782 = vmul.f32 %v754, %v771
        %v783 = vmul.f32 %v753, %v775
        %784 = vst [vmem:[#allocation2 + $0xe0] sm:$0xff] %v780
        %785 = vst [vmem:[#allocation2 + $0xe8] sm:$0xff] %v781
        %786 = vst [vmem:[#allocation2 + $0xf0] sm:$0xff] %v782
        %787 = vst [vmem:[#allocation2 + $0xf8] sm:$0xff] %v783
        %788 = vrot.lane.b32.xlu0 %v428, 55
        %v789 = vpop.permute.xlu0 %788
        %790 = vrot.lane.b32.xlu0 %v429, 55
        %v791 = vpop.permute.xlu0 %790
        %792 = vrot.lane.b32.xlu0 %v430, 55
        %v793 = vpop.permute.xlu0 %792
        %794 = vrot.lane.b32.xlu0 %v431, 55
        %v795 = vpop.permute.xlu0 %794
        %vm796 = vcmp.lt.s32.totalorder %v444, 55
        %v797 = vsel %vm796, %v793, %v795
        %v798 = vsel %vm796, %v791, %v793
        %v799 = vsel %vm796, %v789, %v791
        %v800 = vsel %vm796, %v795, %v789
        %s801 = scalar_lea.vmem [#allocation7], 32
        %v802 = vld [vmem:[%s801] ss:$8 sm:$0xf]
        %v804 = vlaneseq
        %v805 = vshrl.u32 %v804, 7
        %v806 = vsub.s32 0, %v805
        %v807 = vrot.slane %v802, %v806
        %v808 = vlaneseq
        %v809 = vshrl.u32 %v808, 7
        %v810 = vsub.s32 1, %v809
        %v811 = vrot.slane %v802, %v810
        %v812 = vlaneseq
        %v813 = vshrl.u32 %v812, 7
        %v814 = vsub.s32 2, %v813
        %v815 = vrot.slane %v802, %v814
        %v816 = vlaneseq
        %v817 = vshrl.u32 %v816, 7
        %v818 = vsub.s32 3, %v817
        %v819 = vrot.slane %v802, %v818
        %v824 = vmul.f32 %v800, %v807
        %v825 = vmul.f32 %v799, %v811
        %v826 = vmul.f32 %v798, %v815
        %v827 = vmul.f32 %v797, %v819
        %828 = vst [vmem:[#allocation2 + $0x100] sm:$0xff] %v824
        %829 = vst [vmem:[#allocation2 + $0x108] sm:$0xff] %v825
        %830 = vst [vmem:[#allocation2 + $0x110] sm:$0xff] %v826
        %831 = vst [vmem:[#allocation2 + $0x118] sm:$0xff] %v827
        %832 = vrot.lane.b32.xlu0 %v428, 9
        %v833 = vpop.permute.xlu0 %832
        %834 = vrot.lane.b32.xlu0 %v429, 9
        %v835 = vpop.permute.xlu0 %834
        %836 = vrot.lane.b32.xlu0 %v430, 9
        %v837 = vpop.permute.xlu0 %836
        %838 = vrot.lane.b32.xlu0 %v431, 9
        %v839 = vpop.permute.xlu0 %838
        %vm840 = vcmp.lt.s32.totalorder %v444, 9
        %v841 = vsel %vm840, %v837, %v839
        %v842 = vsel %vm840, %v835, %v837
        %v843 = vsel %vm840, %v833, %v835
        %v844 = vsel %vm840, %v839, %v833
        %s845 = scalar_lea.vmem [#allocation7], 33
        %v846 = vld [vmem:[%s845] ss:$8 sm:$0xf]
        %v848 = vlaneseq
        %v849 = vshrl.u32 %v848, 7
        %v850 = vsub.s32 0, %v849
        %v851 = vrot.slane %v846, %v850
        %v852 = vlaneseq
        %v853 = vshrl.u32 %v852, 7
        %v854 = vsub.s32 1, %v853
        %v855 = vrot.slane %v846, %v854
        %v856 = vlaneseq
        %v857 = vshrl.u32 %v856, 7
        %v858 = vsub.s32 2, %v857
        %v859 = vrot.slane %v846, %v858
        %v860 = vlaneseq
        %v861 = vshrl.u32 %v860, 7
        %v862 = vsub.s32 3, %v861
        %v863 = vrot.slane %v846, %v862
        %v868 = vmul.f32 %v844, %v851
        %v869 = vmul.f32 %v843, %v855
        %v870 = vmul.f32 %v842, %v859
        %v871 = vmul.f32 %v841, %v863
        %872 = vst [vmem:[#allocation2 + $0x120] sm:$0xff] %v868
        %873 = vst [vmem:[#allocation2 + $0x128] sm:$0xff] %v869
        %874 = vst [vmem:[#allocation2 + $0x130] sm:$0xff] %v870
        %875 = vst [vmem:[#allocation2 + $0x138] sm:$0xff] %v871
        %876 = vrot.lane.b32.xlu0 %v428, 8
        %v877 = vpop.permute.xlu0 %876
        %878 = vrot.lane.b32.xlu0 %v429, 8
        %v879 = vpop.permute.xlu0 %878
        %880 = vrot.lane.b32.xlu0 %v430, 8
        %v881 = vpop.permute.xlu0 %880
        %882 = vrot.lane.b32.xlu0 %v431, 8
        %v883 = vpop.permute.xlu0 %882
        %vm884 = vcmp.lt.s32.totalorder %v444, 8
        %v885 = vsel %vm884, %v881, %v883
        %v886 = vsel %vm884, %v879, %v881
        %v887 = vsel %vm884, %v877, %v879
        %v888 = vsel %vm884, %v883, %v877
        %s889 = scalar_lea.vmem [#allocation7], 34
        %v890 = vld [vmem:[%s889] ss:$8 sm:$0xf]
        %v892 = vlaneseq
        %v893 = vshrl.u32 %v892, 7
        %v894 = vsub.s32 0, %v893
        %v895 = vrot.slane %v890, %v894
        %v896 = vlaneseq
        %v897 = vshrl.u32 %v896, 7
        %v898 = vsub.s32 1, %v897
        %v899 = vrot.slane %v890, %v898
        %v900 = vlaneseq
        %v901 = vshrl.u32 %v900, 7
        %v902 = vsub.s32 2, %v901
        %v903 = vrot.slane %v890, %v902
        %v904 = vlaneseq
        %v905 = vshrl.u32 %v904, 7
        %v906 = vsub.s32 3, %v905
        %v907 = vrot.slane %v890, %v906
        %v912 = vmul.f32 %v888, %v895
        %v913 = vmul.f32 %v887, %v899
        %v914 = vmul.f32 %v886, %v903
        %v915 = vmul.f32 %v885, %v907
        %916 = vst [vmem:[#allocation2 + $0x140] sm:$0xff] %v912
        %917 = vst [vmem:[#allocation2 + $0x148] sm:$0xff] %v913
        %918 = vst [vmem:[#allocation2 + $0x150] sm:$0xff] %v914
        %919 = vst [vmem:[#allocation2 + $0x158] sm:$0xff] %v915
        %920 = vrot.lane.b32.xlu0 %v428, 7
        %v921 = vpop.permute.xlu0 %920
        %922 = vrot.lane.b32.xlu0 %v429, 7
        %v923 = vpop.permute.xlu0 %922
        %924 = vrot.lane.b32.xlu0 %v430, 7
        %v925 = vpop.permute.xlu0 %924
        %926 = vrot.lane.b32.xlu0 %v431, 7
        %v927 = vpop.permute.xlu0 %926
        %vm928 = vcmp.lt.s32.totalorder %v444, 7
        %v929 = vsel %vm928, %v925, %v927
        %v930 = vsel %vm928, %v923, %v925
        %v931 = vsel %vm928, %v921, %v923
        %v932 = vsel %vm928, %v927, %v921
        %s933 = scalar_lea.vmem [#allocation7], 35
        %v934 = vld [vmem:[%s933] ss:$8 sm:$0xf]
        %v936 = vlaneseq
        %v937 = vshrl.u32 %v936, 7
        %v938 = vsub.s32 0, %v937
        %v939 = vrot.slane %v934, %v938
        %v940 = vlaneseq
        %v941 = vshrl.u32 %v940, 7
        %v942 = vsub.s32 1, %v941
        %v943 = vrot.slane %v934, %v942
        %v944 = vlaneseq
        %v945 = vshrl.u32 %v944, 7
        %v946 = vsub.s32 2, %v945
        %v947 = vrot.slane %v934, %v946
        %v948 = vlaneseq
        %v949 = vshrl.u32 %v948, 7
        %v950 = vsub.s32 3, %v949
        %v951 = vrot.slane %v934, %v950
        %v956 = vmul.f32 %v932, %v939
        %v957 = vmul.f32 %v931, %v943
        %v958 = vmul.f32 %v930, %v947
        %v959 = vmul.f32 %v929, %v951
        %960 = vst [vmem:[#allocation2 + $0x160] sm:$0xff] %v956
        %961 = vst [vmem:[#allocation2 + $0x168] sm:$0xff] %v957
        %962 = vst [vmem:[#allocation2 + $0x170] sm:$0xff] %v958
        %963 = vst [vmem:[#allocation2 + $0x178] sm:$0xff] %v959
        %964 = vrot.lane.b32.xlu0 %v428, 1
        %v965 = vpop.permute.xlu0 %964
        %966 = vrot.lane.b32.xlu0 %v429, 1
        %v967 = vpop.permute.xlu0 %966
        %968 = vrot.lane.b32.xlu0 %v430, 1
        %v969 = vpop.permute.xlu0 %968
        %970 = vrot.lane.b32.xlu0 %v431, 1
        %v971 = vpop.permute.xlu0 %970
        %vm972 = vcmp.lt.s32.totalorder %v444, 1
        %v973 = vsel %vm972, %v969, %v971
        %v974 = vsel %vm972, %v967, %v969
        %v975 = vsel %vm972, %v965, %v967
        %v976 = vsel %vm972, %v971, %v965
        %s977 = scalar_lea.vmem [#allocation7], 36
        %v978 = vld [vmem:[%s977] ss:$8 sm:$0xf]
        %v980 = vlaneseq
        %v981 = vshrl.u32 %v980, 7
        %v982 = vsub.s32 0, %v981
        %v983 = vrot.slane %v978, %v982
        %v984 = vlaneseq
        %v985 = vshrl.u32 %v984, 7
        %v986 = vsub.s32 1, %v985
        %v987 = vrot.slane %v978, %v986
        %v988 = vlaneseq
        %v989 = vshrl.u32 %v988, 7
        %v990 = vsub.s32 2, %v989
        %v991 = vrot.slane %v978, %v990
        %v992 = vlaneseq
        %v993 = vshrl.u32 %v992, 7
        %v994 = vsub.s32 3, %v993
        %v995 = vrot.slane %v978, %v994
        %v1000 = vmul.f32 %v976, %v983
        %v1001 = vmul.f32 %v975, %v987
        %v1002 = vmul.f32 %v974, %v991
        %v1003 = vmul.f32 %v973, %v995
        %1004 = vst [vmem:[#allocation2 + $0x180] sm:$0xff] %v1000
        %1005 = vst [vmem:[#allocation2 + $0x188] sm:$0xff] %v1001
        %1006 = vst [vmem:[#allocation2 + $0x190] sm:$0xff] %v1002
        %1007 = vst [vmem:[#allocation2 + $0x198] sm:$0xff] %v1003
        %1008 = vst [vmem:[#allocation2 + $0x1a0] sm:$0xff] %v428
        %1009 = vst [vmem:[#allocation2 + $0x1a8] sm:$0xff] %v429
        %1010 = vst [vmem:[#allocation2 + $0x1b0] sm:$0xff] %v430
        %1011 = vst [vmem:[#allocation2 + $0x1b8] sm:$0xff] %v431
        %1012 = vrot.lane.b32.xlu0 %v428, 127
        %v1013 = vpop.permute.xlu0 %1012
        %1014 = vrot.lane.b32.xlu0 %v429, 127
        %v1015 = vpop.permute.xlu0 %1014
        %1016 = vrot.lane.b32.xlu0 %v430, 127
        %v1017 = vpop.permute.xlu0 %1016
        %1018 = vrot.lane.b32.xlu0 %v431, 127
        %v1019 = vpop.permute.xlu0 %1018
        %vm1020 = vcmp.lt.s32.totalorder %v444, 127
        %v1021 = vsel %vm1020, %v1017, %v1019
        %v1022 = vsel %vm1020, %v1015, %v1017
        %v1023 = vsel %vm1020, %v1013, %v1015
        %v1024 = vsel %vm1020, %v1019, %v1013
        %s1025 = scalar_lea.vmem [#allocation7], 38
        %v1026 = vld [vmem:[%s1025] ss:$8 sm:$0xf]
        %v1028 = vlaneseq
        %v1029 = vshrl.u32 %v1028, 7
        %v1030 = vsub.s32 0, %v1029
        %v1031 = vrot.slane %v1026, %v1030
        %v1032 = vlaneseq
        %v1033 = vshrl.u32 %v1032, 7
        %v1034 = vsub.s32 1, %v1033
        %v1035 = vrot.slane %v1026, %v1034
        %v1036 = vlaneseq
        %v1037 = vshrl.u32 %v1036, 7
        %v1038 = vsub.s32 2, %v1037
        %v1039 = vrot.slane %v1026, %v1038
        %v1040 = vlaneseq
        %v1041 = vshrl.u32 %v1040, 7
        %v1042 = vsub.s32 3, %v1041
        %v1043 = vrot.slane %v1026, %v1042
        %v1048 = vmul.f32 %v1023, %v1031
        %v1049 = vmul.f32 %v1022, %v1035
        %v1050 = vmul.f32 %v1021, %v1039
        %v1051 = vmul.f32 %v1024, %v1043
        %1052 = vst [vmem:[#allocation2 + $0x1c0] sm:$0xff] %v1048
        %1053 = vst [vmem:[#allocation2 + $0x1c8] sm:$0xff] %v1049
        %1054 = vst [vmem:[#allocation2 + $0x1d0] sm:$0xff] %v1050
        %1055 = vst [vmem:[#allocation2 + $0x1d8] sm:$0xff] %v1051
        %1056 = vrot.lane.b32.xlu0 %v428, 121
        %v1057 = vpop.permute.xlu0 %1056
        %1058 = vrot.lane.b32.xlu0 %v429, 121
        %v1059 = vpop.permute.xlu0 %1058
        %1060 = vrot.lane.b32.xlu0 %v430, 121
        %v1061 = vpop.permute.xlu0 %1060
        %1062 = vrot.lane.b32.xlu0 %v431, 121
        %v1063 = vpop.permute.xlu0 %1062
        %vm1064 = vcmp.lt.s32.totalorder %v444, 121
        %v1065 = vsel %vm1064, %v1061, %v1063
        %v1066 = vsel %vm1064, %v1059, %v1061
        %v1067 = vsel %vm1064, %v1057, %v1059
        %v1068 = vsel %vm1064, %v1063, %v1057
        %s1069 = scalar_lea.vmem [#allocation7], 39
        %v1070 = vld [vmem:[%s1069] ss:$8 sm:$0xf]
        %v1072 = vlaneseq
        %v1073 = vshrl.u32 %v1072, 7
        %v1074 = vsub.s32 0, %v1073
        %v1075 = vrot.slane %v1070, %v1074
        %v1076 = vlaneseq
        %v1077 = vshrl.u32 %v1076, 7
        %v1078 = vsub.s32 1, %v1077
        %v1079 = vrot.slane %v1070, %v1078
        %v1080 = vlaneseq
        %v1081 = vshrl.u32 %v1080, 7
        %v1082 = vsub.s32 2, %v1081
        %v1083 = vrot.slane %v1070, %v1082
        %v1084 = vlaneseq
        %v1085 = vshrl.u32 %v1084, 7
        %v1086 = vsub.s32 3, %v1085
        %v1087 = vrot.slane %v1070, %v1086
        %v1092 = vmul.f32 %v1067, %v1075
        %v1093 = vmul.f32 %v1066, %v1079
        %v1094 = vmul.f32 %v1065, %v1083
        %v1095 = vmul.f32 %v1068, %v1087
        %1096 = vst [vmem:[#allocation2 + $0x1e0] sm:$0xff] %v1092
        %1097 = vst [vmem:[#allocation2 + $0x1e8] sm:$0xff] %v1093
        %1098 = vst [vmem:[#allocation2 + $0x1f0] sm:$0xff] %v1094
        %1099 = vst [vmem:[#allocation2 + $0x1f8] sm:$0xff] %v1095
        %1100 = vrot.lane.b32.xlu0 %v428, 120
        %v1101 = vpop.permute.xlu0 %1100
        %1102 = vrot.lane.b32.xlu0 %v429, 120
        %v1103 = vpop.permute.xlu0 %1102
        %1104 = vrot.lane.b32.xlu0 %v430, 120
        %v1105 = vpop.permute.xlu0 %1104
        %1106 = vrot.lane.b32.xlu0 %v431, 120
        %v1107 = vpop.permute.xlu0 %1106
        %vm1108 = vcmp.lt.s32.totalorder %v444, 120
        %v1109 = vsel %vm1108, %v1105, %v1107
        %v1110 = vsel %vm1108, %v1103, %v1105
        %v1111 = vsel %vm1108, %v1101, %v1103
        %v1112 = vsel %vm1108, %v1107, %v1101
        %s1113 = scalar_lea.vmem [#allocation7], 64
        %v1114 = vld [vmem:[%s1113] ss:$8 sm:$0xf]
        %v1116 = vlaneseq
        %v1117 = vshrl.u32 %v1116, 7
        %v1118 = vsub.s32 0, %v1117
        %v1119 = vrot.slane %v1114, %v1118
        %v1120 = vlaneseq
        %v1121 = vshrl.u32 %v1120, 7
        %v1122 = vsub.s32 1, %v1121
        %v1123 = vrot.slane %v1114, %v1122
        %v1124 = vlaneseq
        %v1125 = vshrl.u32 %v1124, 7
        %v1126 = vsub.s32 2, %v1125
        %v1127 = vrot.slane %v1114, %v1126
        %v1128 = vlaneseq
        %v1129 = vshrl.u32 %v1128, 7
        %v1130 = vsub.s32 3, %v1129
        %v1131 = vrot.slane %v1114, %v1130
        %v1136 = vmul.f32 %v1111, %v1119
        %v1137 = vmul.f32 %v1110, %v1123
        %v1138 = vmul.f32 %v1109, %v1127
        %v1139 = vmul.f32 %v1112, %v1131
        %1140 = vst [vmem:[#allocation2 + $0x200] sm:$0xff] %v1136
        %1141 = vst [vmem:[#allocation2 + $0x208] sm:$0xff] %v1137
        %1142 = vst [vmem:[#allocation2 + $0x210] sm:$0xff] %v1138
        %1143 = vst [vmem:[#allocation2 + $0x218] sm:$0xff] %v1139
        %1144 = vrot.lane.b32.xlu0 %v428, 119
        %v1145 = vpop.permute.xlu0 %1144
        %1146 = vrot.lane.b32.xlu0 %v429, 119
        %v1147 = vpop.permute.xlu0 %1146
        %1148 = vrot.lane.b32.xlu0 %v430, 119
        %v1149 = vpop.permute.xlu0 %1148
        %1150 = vrot.lane.b32.xlu0 %v431, 119
        %v1151 = vpop.permute.xlu0 %1150
        %vm1152 = vcmp.lt.s32.totalorder %v444, 119
        %v1153 = vsel %vm1152, %v1149, %v1151
        %v1154 = vsel %vm1152, %v1147, %v1149
        %v1155 = vsel %vm1152, %v1145, %v1147
        %v1156 = vsel %vm1152, %v1151, %v1145
        %s1157 = scalar_lea.vmem [#allocation7], 65
        %v1158 = vld [vmem:[%s1157] ss:$8 sm:$0xf]
        %v1160 = vlaneseq
        %v1161 = vshrl.u32 %v1160, 7
        %v1162 = vsub.s32 0, %v1161
        %v1163 = vrot.slane %v1158, %v1162
        %v1164 = vlaneseq
        %v1165 = vshrl.u32 %v1164, 7
        %v1166 = vsub.s32 1, %v1165
        %v1167 = vrot.slane %v1158, %v1166
        %v1168 = vlaneseq
        %v1169 = vshrl.u32 %v1168, 7
        %v1170 = vsub.s32 2, %v1169
        %v1171 = vrot.slane %v1158, %v1170
        %v1172 = vlaneseq
        %v1173 = vshrl.u32 %v1172, 7
        %v1174 = vsub.s32 3, %v1173
        %v1175 = vrot.slane %v1158, %v1174
        %v1180 = vmul.f32 %v1155, %v1163
        %v1181 = vmul.f32 %v1154, %v1167
        %v1182 = vmul.f32 %v1153, %v1171
        %v1183 = vmul.f32 %v1156, %v1175
        %1184 = vst [vmem:[#allocation2 + $0x220] sm:$0xff] %v1180
        %1185 = vst [vmem:[#allocation2 + $0x228] sm:$0xff] %v1181
        %1186 = vst [vmem:[#allocation2 + $0x230] sm:$0xff] %v1182
        %1187 = vst [vmem:[#allocation2 + $0x238] sm:$0xff] %v1183
        %s1188 = scalar_lea.vmem [#allocation7], 66
        %v1189 = vld [vmem:[%s1188] ss:$8 sm:$0xf]
        %v1191 = vlaneseq
        %v1192 = vshrl.u32 %v1191, 7
        %v1193 = vsub.s32 0, %v1192
        %v1194 = vrot.slane %v1189, %v1193
        %v1195 = vlaneseq
        %v1196 = vshrl.u32 %v1195, 7
        %v1197 = vsub.s32 1, %v1196
        %v1198 = vrot.slane %v1189, %v1197
        %v1199 = vlaneseq
        %v1200 = vshrl.u32 %v1199, 7
        %v1201 = vsub.s32 2, %v1200
        %v1202 = vrot.slane %v1189, %v1201
        %v1203 = vlaneseq
        %v1204 = vshrl.u32 %v1203, 7
        %v1205 = vsub.s32 3, %v1204
        %v1206 = vrot.slane %v1189, %v1205
        %v1211 = vmul.f32 %v448, %v1194
        %v1212 = vmul.f32 %v447, %v1198
        %v1213 = vmul.f32 %v446, %v1202
        %v1214 = vmul.f32 %v449, %v1206
        %1215 = vst [vmem:[#allocation2 + $0x240] sm:$0xff] %v1211
        %1216 = vst [vmem:[#allocation2 + $0x248] sm:$0xff] %v1212
        %1217 = vst [vmem:[#allocation2 + $0x250] sm:$0xff] %v1213
        %1218 = vst [vmem:[#allocation2 + $0x258] sm:$0xff] %v1214
        %s1219 = scalar_lea.vmem [#allocation7], 67
        %v1220 = vld [vmem:[%s1219] ss:$8 sm:$0xf]
        %v1222 = vlaneseq
        %v1223 = vshrl.u32 %v1222, 7
        %v1224 = vsub.s32 0, %v1223
        %v1225 = vrot.slane %v1220, %v1224
        %v1226 = vlaneseq
        %v1227 = vshrl.u32 %v1226, 7
        %v1228 = vsub.s32 1, %v1227
        %v1229 = vrot.slane %v1220, %v1228
        %v1230 = vlaneseq
        %v1231 = vshrl.u32 %v1230, 7
        %v1232 = vsub.s32 2, %v1231
        %v1233 = vrot.slane %v1220, %v1232
        %v1234 = vlaneseq
        %v1235 = vshrl.u32 %v1234, 7
        %v1236 = vsub.s32 3, %v1235
        %v1237 = vrot.slane %v1220, %v1236
        %v1242 = vmul.f32 %v491, %v1225
        %v1243 = vmul.f32 %v490, %v1229
        %v1244 = vmul.f32 %v489, %v1233
        %v1245 = vmul.f32 %v492, %v1237
        %1246 = vst [vmem:[#allocation2 + $0x260] sm:$0xff] %v1242
        %1247 = vst [vmem:[#allocation2 + $0x268] sm:$0xff] %v1243
        %1248 = vst [vmem:[#allocation2 + $0x270] sm:$0xff] %v1244
        %1249 = vst [vmem:[#allocation2 + $0x278] sm:$0xff] %v1245
        %s1250 = scalar_lea.vmem [#allocation7], 68
        %v1251 = vld [vmem:[%s1250] ss:$8 sm:$0xf]
        %v1253 = vlaneseq
        %v1254 = vshrl.u32 %v1253, 7
        %v1255 = vsub.s32 0, %v1254
        %v1256 = vrot.slane %v1251, %v1255
        %v1257 = vlaneseq
        %v1258 = vshrl.u32 %v1257, 7
        %v1259 = vsub.s32 1, %v1258
        %v1260 = vrot.slane %v1251, %v1259
        %v1261 = vlaneseq
        %v1262 = vshrl.u32 %v1261, 7
        %v1263 = vsub.s32 2, %v1262
        %v1264 = vrot.slane %v1251, %v1263
        %v1265 = vlaneseq
        %v1266 = vshrl.u32 %v1265, 7
        %v1267 = vsub.s32 3, %v1266
        %v1268 = vrot.slane %v1251, %v1267
        %v1273 = vmul.f32 %v535, %v1256
        %v1274 = vmul.f32 %v534, %v1260
        %v1275 = vmul.f32 %v533, %v1264
        %v1276 = vmul.f32 %v536, %v1268
        %1277 = vst [vmem:[#allocation2 + $0x280] sm:$0xff] %v1273
        %1278 = vst [vmem:[#allocation2 + $0x288] sm:$0xff] %v1274
        %1279 = vst [vmem:[#allocation2 + $0x290] sm:$0xff] %v1275
        %1280 = vst [vmem:[#allocation2 + $0x298] sm:$0xff] %v1276
        %s1281 = scalar_lea.vmem [#allocation7], 69
        %v1282 = vld [vmem:[%s1281] ss:$8 sm:$0xf]
        %v1284 = vlaneseq
        %v1285 = vshrl.u32 %v1284, 7
        %v1286 = vsub.s32 0, %v1285
        %v1287 = vrot.slane %v1282, %v1286
        %v1288 = vlaneseq
        %v1289 = vshrl.u32 %v1288, 7
        %v1290 = vsub.s32 1, %v1289
        %v1291 = vrot.slane %v1282, %v1290
        %v1292 = vlaneseq
        %v1293 = vshrl.u32 %v1292, 7
        %v1294 = vsub.s32 2, %v1293
        %v1295 = vrot.slane %v1282, %v1294
        %v1296 = vlaneseq
        %v1297 = vshrl.u32 %v1296, 7
        %v1298 = vsub.s32 3, %v1297
        %v1299 = vrot.slane %v1282, %v1298
        %v1304 = vmul.f32 %v579, %v1287
        %v1305 = vmul.f32 %v578, %v1291
        %v1306 = vmul.f32 %v577, %v1295
        %v1307 = vmul.f32 %v580, %v1299
        %1308 = vst [vmem:[#allocation2 + $0x2a0] sm:$0xff] %v1304
        %1309 = vst [vmem:[#allocation2 + $0x2a8] sm:$0xff] %v1305
        %1310 = vst [vmem:[#allocation2 + $0x2b0] sm:$0xff] %v1306
        %1311 = vst [vmem:[#allocation2 + $0x2b8] sm:$0xff] %v1307
        %s1312 = scalar_lea.vmem [#allocation7], 70
        %v1313 = vld [vmem:[%s1312] ss:$8 sm:$0xf]
        %v1315 = vlaneseq
        %v1316 = vshrl.u32 %v1315, 7
        %v1317 = vsub.s32 0, %v1316
        %v1318 = vrot.slane %v1313, %v1317
        %v1319 = vlaneseq
        %v1320 = vshrl.u32 %v1319, 7
        %v1321 = vsub.s32 1, %v1320
        %v1322 = vrot.slane %v1313, %v1321
        %v1323 = vlaneseq
        %v1324 = vshrl.u32 %v1323, 7
        %v1325 = vsub.s32 2, %v1324
        %v1326 = vrot.slane %v1313, %v1325
        %v1327 = vlaneseq
        %v1328 = vshrl.u32 %v1327, 7
        %v1329 = vsub.s32 3, %v1328
        %v1330 = vrot.slane %v1313, %v1329
        %v1335 = vmul.f32 %v623, %v1318
        %v1336 = vmul.f32 %v622, %v1322
        %v1337 = vmul.f32 %v621, %v1326
        %v1338 = vmul.f32 %v624, %v1330
        %1339 = vst [vmem:[#allocation2 + $0x2c0] sm:$0xff] %v1335
        %1340 = vst [vmem:[#allocation2 + $0x2c8] sm:$0xff] %v1336
        %1341 = vst [vmem:[#allocation2 + $0x2d0] sm:$0xff] %v1337
        %1342 = vst [vmem:[#allocation2 + $0x2d8] sm:$0xff] %v1338
        %s1343 = scalar_lea.vmem [#allocation7], 71
        %v1344 = vld [vmem:[%s1343] ss:$8 sm:$0xf]
        %v1346 = vlaneseq
        %v1347 = vshrl.u32 %v1346, 7
        %v1348 = vsub.s32 0, %v1347
        %v1349 = vrot.slane %v1344, %v1348
        %v1350 = vlaneseq
        %v1351 = vshrl.u32 %v1350, 7
        %v1352 = vsub.s32 1, %v1351
        %v1353 = vrot.slane %v1344, %v1352
        %v1354 = vlaneseq
        %v1355 = vshrl.u32 %v1354, 7
        %v1356 = vsub.s32 2, %v1355
        %v1357 = vrot.slane %v1344, %v1356
        %v1358 = vlaneseq
        %v1359 = vshrl.u32 %v1358, 7
        %v1360 = vsub.s32 3, %v1359
        %v1361 = vrot.slane %v1344, %v1360
        %v1366 = vmul.f32 %v667, %v1349
        %v1367 = vmul.f32 %v666, %v1353
        %v1368 = vmul.f32 %v665, %v1357
        %v1369 = vmul.f32 %v668, %v1361
        %1370 = vst [vmem:[#allocation2 + $0x2e0] sm:$0xff] %v1366
        %1371 = vst [vmem:[#allocation2 + $0x2e8] sm:$0xff] %v1367
        %1372 = vst [vmem:[#allocation2 + $0x2f0] sm:$0xff] %v1368
        %1373 = vst [vmem:[#allocation2 + $0x2f8] sm:$0xff] %v1369
        %s1374 = scalar_lea.vmem [#allocation7], 96
        %v1375 = vld [vmem:[%s1374] ss:$8 sm:$0xf]
        %v1377 = vlaneseq
        %v1378 = vshrl.u32 %v1377, 7
        %v1379 = vsub.s32 0, %v1378
        %v1380 = vrot.slane %v1375, %v1379
        %v1381 = vlaneseq
        %v1382 = vshrl.u32 %v1381, 7
        %v1383 = vsub.s32 1, %v1382
        %v1384 = vrot.slane %v1375, %v1383
        %v1385 = vlaneseq
        %v1386 = vshrl.u32 %v1385, 7
        %v1387 = vsub.s32 2, %v1386
        %v1388 = vrot.slane %v1375, %v1387
        %v1389 = vlaneseq
        %v1390 = vshrl.u32 %v1389, 7
        %v1391 = vsub.s32 3, %v1390
        %v1392 = vrot.slane %v1375, %v1391
        %v1397 = vmul.f32 %v711, %v1380
        %v1398 = vmul.f32 %v710, %v1384
        %v1399 = vmul.f32 %v709, %v1388
        %v1400 = vmul.f32 %v712, %v1392
        %1401 = vst [vmem:[#allocation2 + $0x300] sm:$0xff] %v1397
        %1402 = vst [vmem:[#allocation2 + $0x308] sm:$0xff] %v1398
        %1403 = vst [vmem:[#allocation2 + $0x310] sm:$0xff] %v1399
        %1404 = vst [vmem:[#allocation2 + $0x318] sm:$0xff] %v1400
        %s1405 = scalar_lea.vmem [#allocation7], 97
        %v1406 = vld [vmem:[%s1405] ss:$8 sm:$0xf]
        %v1408 = vlaneseq
        %v1409 = vshrl.u32 %v1408, 7
        %v1410 = vsub.s32 0, %v1409
        %v1411 = vrot.slane %v1406, %v1410
        %v1412 = vlaneseq
        %v1413 = vshrl.u32 %v1412, 7
        %v1414 = vsub.s32 1, %v1413
        %v1415 = vrot.slane %v1406, %v1414
        %v1416 = vlaneseq
        %v1417 = vshrl.u32 %v1416, 7
        %v1418 = vsub.s32 2, %v1417
        %v1419 = vrot.slane %v1406, %v1418
        %v1420 = vlaneseq
        %v1421 = vshrl.u32 %v1420, 7
        %v1422 = vsub.s32 3, %v1421
        %v1423 = vrot.slane %v1406, %v1422
        %v1428 = vmul.f32 %v755, %v1411
        %v1429 = vmul.f32 %v754, %v1415
        %v1430 = vmul.f32 %v753, %v1419
        %v1431 = vmul.f32 %v756, %v1423
        %1432 = vst [vmem:[#allocation2 + $0x320] sm:$0xff] %v1428
        %1433 = vst [vmem:[#allocation2 + $0x328] sm:$0xff] %v1429
        %1434 = vst [vmem:[#allocation2 + $0x330] sm:$0xff] %v1430
        %1435 = vst [vmem:[#allocation2 + $0x338] sm:$0xff] %v1431
        %s1436 = scalar_lea.vmem [#allocation7], 98
        %v1437 = vld [vmem:[%s1436] ss:$8 sm:$0xf]
        %v1439 = vlaneseq
        %v1440 = vshrl.u32 %v1439, 7
        %v1441 = vsub.s32 0, %v1440
        %v1442 = vrot.slane %v1437, %v1441
        %v1443 = vlaneseq
        %v1444 = vshrl.u32 %v1443, 7
        %v1445 = vsub.s32 1, %v1444
        %v1446 = vrot.slane %v1437, %v1445
        %v1447 = vlaneseq
        %v1448 = vshrl.u32 %v1447, 7
        %v1449 = vsub.s32 2, %v1448
        %v1450 = vrot.slane %v1437, %v1449
        %v1451 = vlaneseq
        %v1452 = vshrl.u32 %v1451, 7
        %v1453 = vsub.s32 3, %v1452
        %v1454 = vrot.slane %v1437, %v1453
        %v1459 = vmul.f32 %v799, %v1442
        %v1460 = vmul.f32 %v798, %v1446
        %v1461 = vmul.f32 %v797, %v1450
        %v1462 = vmul.f32 %v800, %v1454
        %1463 = vst [vmem:[#allocation2 + $0x340] sm:$0xff] %v1459
        %1464 = vst [vmem:[#allocation2 + $0x348] sm:$0xff] %v1460
        %1465 = vst [vmem:[#allocation2 + $0x350] sm:$0xff] %v1461
        %1466 = vst [vmem:[#allocation2 + $0x358] sm:$0xff] %v1462
        %v1467 = vld [vmem:[#allocation2] sm:$0xff]
        %v1468 = vld [vmem:[#allocation2 + $0x8] sm:$0xff]
        %v1469 = vld [vmem:[#allocation2 + $0x10] sm:$0xff]
        %v1470 = vld [vmem:[#allocation2 + $0x18] sm:$0xff]
        %v1471 = vld [vmem:[#allocation2 + $0x20] sm:$0xff]
        %v1472 = vld [vmem:[#allocation2 + $0x28] sm:$0xff]
        %v1473 = vld [vmem:[#allocation2 + $0x30] sm:$0xff]
        %v1474 = vld [vmem:[#allocation2 + $0x38] sm:$0xff]
        %v1475 = vld [vmem:[#allocation2 + $0x40] sm:$0xff]
        %v1476 = vld [vmem:[#allocation2 + $0x48] sm:$0xff]
        %v1477 = vld [vmem:[#allocation2 + $0x50] sm:$0xff]
        %v1478 = vld [vmem:[#allocation2 + $0x58] sm:$0xff]
        %v1479 = vld [vmem:[#allocation2 + $0x60] sm:$0xff]
        %v1480 = vld [vmem:[#allocation2 + $0x68] sm:$0xff]
        %v1481 = vld [vmem:[#allocation2 + $0x70] sm:$0xff]
        %v1482 = vld [vmem:[#allocation2 + $0x78] sm:$0xff]
        %v1483 = vld [vmem:[#allocation2 + $0x80] sm:$0xff]
        %v1484 = vld [vmem:[#allocation2 + $0x88] sm:$0xff]
        %v1485 = vld [vmem:[#allocation2 + $0x90] sm:$0xff]
        %v1486 = vld [vmem:[#allocation2 + $0x98] sm:$0xff]
        %v1487 = vld [vmem:[#allocation2 + $0xa0] sm:$0xff]
        %v1488 = vld [vmem:[#allocation2 + $0xa8] sm:$0xff]
        %v1489 = vld [vmem:[#allocation2 + $0xb0] sm:$0xff]
        %v1490 = vld [vmem:[#allocation2 + $0xb8] sm:$0xff]
        %v1491 = vld [vmem:[#allocation2 + $0xc0] sm:$0xff]
        %v1492 = vld [vmem:[#allocation2 + $0xc8] sm:$0xff]
        %v1493 = vld [vmem:[#allocation2 + $0xd0] sm:$0xff]
        %v1494 = vld [vmem:[#allocation2 + $0xd8] sm:$0xff]
        %v1495 = vld [vmem:[#allocation2 + $0xe0] sm:$0xff]
        %v1496 = vld [vmem:[#allocation2 + $0xe8] sm:$0xff]
        %v1497 = vld [vmem:[#allocation2 + $0xf0] sm:$0xff]
        %v1498 = vld [vmem:[#allocation2 + $0xf8] sm:$0xff]
        %v1499 = vld [vmem:[#allocation2 + $0x100] sm:$0xff]
        %v1500 = vld [vmem:[#allocation2 + $0x108] sm:$0xff]
        %v1501 = vld [vmem:[#allocation2 + $0x110] sm:$0xff]
        %v1502 = vld [vmem:[#allocation2 + $0x118] sm:$0xff]
        %v1503 = vld [vmem:[#allocation2 + $0x120] sm:$0xff]
        %v1504 = vld [vmem:[#allocation2 + $0x128] sm:$0xff]
        %v1505 = vld [vmem:[#allocation2 + $0x130] sm:$0xff]
        %v1506 = vld [vmem:[#allocation2 + $0x138] sm:$0xff]
        %v1507 = vld [vmem:[#allocation2 + $0x140] sm:$0xff]
        %v1508 = vld [vmem:[#allocation2 + $0x148] sm:$0xff]
        %v1509 = vld [vmem:[#allocation2 + $0x150] sm:$0xff]
        %v1510 = vld [vmem:[#allocation2 + $0x158] sm:$0xff]
        %v1511 = vld [vmem:[#allocation2 + $0x160] sm:$0xff]
        %v1512 = vld [vmem:[#allocation2 + $0x168] sm:$0xff]
        %v1513 = vld [vmem:[#allocation2 + $0x170] sm:$0xff]
        %v1514 = vld [vmem:[#allocation2 + $0x178] sm:$0xff]
        %v1515 = vld [vmem:[#allocation2 + $0x180] sm:$0xff]
        %v1516 = vld [vmem:[#allocation2 + $0x188] sm:$0xff]
        %v1517 = vld [vmem:[#allocation2 + $0x190] sm:$0xff]
        %v1518 = vld [vmem:[#allocation2 + $0x198] sm:$0xff]
        %v1519 = vld [vmem:[#allocation2 + $0x1a0] sm:$0xff]
        %v1520 = vld [vmem:[#allocation2 + $0x1a8] sm:$0xff]
        %v1521 = vld [vmem:[#allocation2 + $0x1b0] sm:$0xff]
        %v1522 = vld [vmem:[#allocation2 + $0x1b8] sm:$0xff]
        %v1523 = vld [vmem:[#allocation2 + $0x1c0] sm:$0xff]
        %v1524 = vld [vmem:[#allocation2 + $0x1c8] sm:$0xff]
        %v1525 = vld [vmem:[#allocation2 + $0x1d0] sm:$0xff]
        %v1526 = vld [vmem:[#allocation2 + $0x1d8] sm:$0xff]
        %v1527 = vld [vmem:[#allocation2 + $0x1e0] sm:$0xff]
        %v1528 = vld [vmem:[#allocation2 + $0x1e8] sm:$0xff]
        %v1529 = vld [vmem:[#allocation2 + $0x1f0] sm:$0xff]
        %v1530 = vld [vmem:[#allocation2 + $0x1f8] sm:$0xff]
        %v1531 = vld [vmem:[#allocation2 + $0x200] sm:$0xff]
        %v1532 = vld [vmem:[#allocation2 + $0x208] sm:$0xff]
        %v1533 = vld [vmem:[#allocation2 + $0x210] sm:$0xff]
        %v1534 = vld [vmem:[#allocation2 + $0x218] sm:$0xff]
        %v1535 = vld [vmem:[#allocation2 + $0x220] sm:$0xff]
        %v1536 = vld [vmem:[#allocation2 + $0x228] sm:$0xff]
        %v1537 = vld [vmem:[#allocation2 + $0x230] sm:$0xff]
        %v1538 = vld [vmem:[#allocation2 + $0x238] sm:$0xff]
        %v1539 = vld [vmem:[#allocation2 + $0x240] sm:$0xff]
        %v1540 = vld [vmem:[#allocation2 + $0x248] sm:$0xff]
        %v1541 = vld [vmem:[#allocation2 + $0x250] sm:$0xff]
        %v1542 = vld [vmem:[#allocation2 + $0x258] sm:$0xff]
        %v1543 = vld [vmem:[#allocation2 + $0x260] sm:$0xff]
        %v1544 = vld [vmem:[#allocation2 + $0x268] sm:$0xff]
        %v1545 = vld [vmem:[#allocation2 + $0x270] sm:$0xff]
        %v1546 = vld [vmem:[#allocation2 + $0x278] sm:$0xff]
        %v1547 = vld [vmem:[#allocation2 + $0x280] sm:$0xff]
        %v1548 = vld [vmem:[#allocation2 + $0x288] sm:$0xff]
        %v1549 = vld [vmem:[#allocation2 + $0x290] sm:$0xff]
        %v1550 = vld [vmem:[#allocation2 + $0x298] sm:$0xff]
        %v1551 = vld [vmem:[#allocation2 + $0x2a0] sm:$0xff]
        %v1552 = vld [vmem:[#allocation2 + $0x2a8] sm:$0xff]
        %v1553 = vld [vmem:[#allocation2 + $0x2b0] sm:$0xff]
        %v1554 = vld [vmem:[#allocation2 + $0x2b8] sm:$0xff]
        %v1555 = vld [vmem:[#allocation2 + $0x2c0] sm:$0xff]
        %v1556 = vld [vmem:[#allocation2 + $0x2c8] sm:$0xff]
        %v1557 = vld [vmem:[#allocation2 + $0x2d0] sm:$0xff]
        %v1558 = vld [vmem:[#allocation2 + $0x2d8] sm:$0xff]
        %v1559 = vld [vmem:[#allocation2 + $0x2e0] sm:$0xff]
        %v1560 = vld [vmem:[#allocation2 + $0x2e8] sm:$0xff]
        %v1561 = vld [vmem:[#allocation2 + $0x2f0] sm:$0xff]
        %v1562 = vld [vmem:[#allocation2 + $0x2f8] sm:$0xff]
        %v1563 = vld [vmem:[#allocation2 + $0x300] sm:$0xff]
        %v1564 = vld [vmem:[#allocation2 + $0x308] sm:$0xff]
        %v1565 = vld [vmem:[#allocation2 + $0x310] sm:$0xff]
        %v1566 = vld [vmem:[#allocation2 + $0x318] sm:$0xff]
        %v1567 = vld [vmem:[#allocation2 + $0x320] sm:$0xff]
        %v1568 = vld [vmem:[#allocation2 + $0x328] sm:$0xff]
        %v1569 = vld [vmem:[#allocation2 + $0x330] sm:$0xff]
        %v1570 = vld [vmem:[#allocation2 + $0x338] sm:$0xff]
        %v1571 = vld [vmem:[#allocation2 + $0x340] sm:$0xff]
        %v1572 = vld [vmem:[#allocation2 + $0x348] sm:$0xff]
        %v1573 = vld [vmem:[#allocation2 + $0x350] sm:$0xff]
        %v1574 = vld [vmem:[#allocation2 + $0x358] sm:$0xff]
        %1576 = vset.pattern.permute.xlu0 0
        %1577 = vperm.xlu0 %1576, %v434
        %v1578 = vpop.permute.xlu0 %1577
        %vm1580 = vcmask 719872
        %v1582 = vsel %vm1580, %v433, 0
        %1584 = vmatprep.subr.mxu0 %v1528
        %1585 = vmatpush1.msra.mxu0 %v1527
        %1586 = vmatprep.subr.mxu0 %v1524
        %1587 = vmatpush1.msra.mxu0 %v1523
        %1588 = vmatprep.subr.mxu0 %v1520
        %1589 = vmatpush1.msra.mxu0 %v1519
        %1590 = vmatprep.subr.mxu0 %v1516
        %1591 = vmatpush1.msra.mxu0 %v1515
        %1592 = vmatprep.subr.mxu0 %v1512
        %1593 = vmatpush1.msra.mxu0 %v1511
        %1594 = vmatprep.subr.mxu0 %v1508
        %1595 = vmatpush1.msra.mxu0 %v1507
        %1596 = vmatprep.subr.mxu0 %v1504
        %1597 = vmatpush1.msra.mxu0 %v1503
        %1598 = vmatprep.subr.mxu0 %v1500
        %1599 = vmatpush1.msra.mxu0 %v1499
        %1600 = vmatprep.subr.mxu0 %v1496
        %1601 = vmatpush1.msra.mxu0 %v1495
        %1602 = vmatprep.subr.mxu0 %v1492
        %1603 = vmatpush1.msra.mxu0 %v1491
        %1604 = vmatprep.subr.mxu0 %v1488
        %1605 = vmatpush1.msra.mxu0 %v1487
        %1606 = vmatprep.subr.mxu0 %v1484
        %1607 = vmatpush1.msra.mxu0 %v1483
        %1608 = vmatprep.subr.mxu0 %v1480
        %1609 = vmatpush1.msra.mxu0 %v1479
        %1610 = vmatprep.subr.mxu0 %v1476
        %1611 = vmatpush1.msra.mxu0 %v1475
        %1612 = vmatprep.subr.mxu0 %v1472
        %1613 = vmatpush1.msra.mxu0 %v1471
        %1614 = vmatprep.subr.mxu0 %v1468
        %1615 = vmatpush1.msra.mxu0 %v1467
        %1616 = vmatprep.subr.mxu0 0.0
        %1617 = vmatpush2.msra.mxu0 0.0
        %1618 = vmatprep.subr.mxu0 0.0
        %1619 = vmatpush2.msra.mxu0 0.0
        %1620 = vmatprep.subr.mxu0 0.0
        %1621 = vmatpush2.msra.mxu0 0.0
        %1622 = vmatprep.subr.mxu0 0.0
        %1623 = vmatpush2.msra.mxu0 0.0
        %1624 = vmatprep.subr.mxu0 0.0
        %1625 = vmatpush2.msra.mxu0 0.0
        %1626 = vmatprep.subr.mxu0 %v1572
        %1627 = vmatpush2.msra.mxu0 %v1571
        %1628 = vmatprep.subr.mxu0 %v1568
        %1629 = vmatpush2.msra.mxu0 %v1567
        %1630 = vmatprep.subr.mxu0 %v1564
        %1631 = vmatpush2.msra.mxu0 %v1563
        %1632 = vmatprep.subr.mxu0 %v1560
        %1633 = vmatpush2.msra.mxu0 %v1559
        %1634 = vmatprep.subr.mxu0 %v1556
        %1635 = vmatpush2.msra.mxu0 %v1555
        %1636 = vmatprep.subr.mxu0 %v1552
        %1637 = vmatpush2.msra.mxu0 %v1551
        %1638 = vmatprep.subr.mxu0 %v1548
        %1639 = vmatpush2.msra.mxu0 %v1547
        %1640 = vmatprep.subr.mxu0 %v1544
        %1641 = vmatpush2.msra.mxu0 %v1543
        %1642 = vmatprep.subr.mxu0 %v1540
        %1643 = vmatpush2.msra.mxu0 %v1539
        %1644 = vmatprep.subr.mxu0 %v1536
        %1645 = vmatpush2.msra.mxu0 %v1535
        %1646 = vmatprep.subr.mxu0 %v1532
        %1647 = vmatpush2.msra.mxu0 %v1531
        %1648 = vmatprep.mubr.f32.mxu0 %v1582
        %1649 = vmatmul.mubr.f32.gmra.mxu0 %v432
        %v1650 = vpop.f32.mrf.mxu0
        %v1651 = vadd.f32 %v1578, %v1650
        %v1652 = vpop.f32.mrf.mxu0
        %v1653 = vadd.f32 %v1578, %v1652
        %1654 = vdwg.mxu0
        %1655 = vmatprep.subr.mxu0 %v1530
        %1656 = vmatpush1.msra.mxu0 %v1529
        %1657 = vmatprep.subr.mxu0 %v1526
        %1658 = vmatpush1.msra.mxu0 %v1525
        %1659 = vmatprep.subr.mxu0 %v1522
        %1660 = vmatpush1.msra.mxu0 %v1521
        %1661 = vmatprep.subr.mxu0 %v1518
        %1662 = vmatpush1.msra.mxu0 %v1517
        %1663 = vmatprep.subr.mxu0 %v1514
        %1664 = vmatpush1.msra.mxu0 %v1513
        %1665 = vmatprep.subr.mxu0 %v1510
        %1666 = vmatpush1.msra.mxu0 %v1509
        %1667 = vmatprep.subr.mxu0 %v1506
        %1668 = vmatpush1.msra.mxu0 %v1505
        %1669 = vmatprep.subr.mxu0 %v1502
        %1670 = vmatpush1.msra.mxu0 %v1501
        %1671 = vmatprep.subr.mxu0 %v1498
        %1672 = vmatpush1.msra.mxu0 %v1497
        %1673 = vmatprep.subr.mxu0 %v1494
        %1674 = vmatpush1.msra.mxu0 %v1493
        %1675 = vmatprep.subr.mxu0 %v1490
        %1676 = vmatpush1.msra.mxu0 %v1489
        %1677 = vmatprep.subr.mxu0 %v1486
        %1678 = vmatpush1.msra.mxu0 %v1485
        %1679 = vmatprep.subr.mxu0 %v1482
        %1680 = vmatpush1.msra.mxu0 %v1481
        %1681 = vmatprep.subr.mxu0 %v1478
        %1682 = vmatpush1.msra.mxu0 %v1477
        %1683 = vmatprep.subr.mxu0 %v1474
        %1684 = vmatpush1.msra.mxu0 %v1473
        %1685 = vmatprep.subr.mxu0 %v1470
        %1686 = vmatpush1.msra.mxu0 %v1469
        %1687 = vmatprep.subr.mxu0 0.0
        %1688 = vmatpush2.msra.mxu0 0.0
        %1689 = vmatprep.subr.mxu0 0.0
        %1690 = vmatpush2.msra.mxu0 0.0
        %1691 = vmatprep.subr.mxu0 0.0
        %1692 = vmatpush2.msra.mxu0 0.0
        %1693 = vmatprep.subr.mxu0 0.0
        %1694 = vmatpush2.msra.mxu0 0.0
        %1695 = vmatprep.subr.mxu0 0.0
        %1696 = vmatpush2.msra.mxu0 0.0
        %1697 = vmatprep.subr.mxu0 %v1574
        %1698 = vmatpush2.msra.mxu0 %v1573
        %1699 = vmatprep.subr.mxu0 %v1570
        %1700 = vmatpush2.msra.mxu0 %v1569
        %1701 = vmatprep.subr.mxu0 %v1566
        %1702 = vmatpush2.msra.mxu0 %v1565
        %1703 = vmatprep.subr.mxu0 %v1562
        %1704 = vmatpush2.msra.mxu0 %v1561
        %1705 = vmatprep.subr.mxu0 %v1558
        %1706 = vmatpush2.msra.mxu0 %v1557
        %1707 = vmatprep.subr.mxu0 %v1554
        %1708 = vmatpush2.msra.mxu0 %v1553
        %1709 = vmatprep.subr.mxu0 %v1550
        %1710 = vmatpush2.msra.mxu0 %v1549
        %1711 = vmatprep.subr.mxu0 %v1546
        %1712 = vmatpush2.msra.mxu0 %v1545
        %1713 = vmatprep.subr.mxu0 %v1542
        %1714 = vmatpush2.msra.mxu0 %v1541
        %1715 = vmatprep.subr.mxu0 %v1538
        %1716 = vmatpush2.msra.mxu0 %v1537
        %1717 = vmatprep.subr.mxu0 %v1534
        %1718 = vmatpush2.msra.mxu0 %v1533
        %1719 = vmatprep.mubr.f32.mxu0 %v1582
        %1720 = vmatmul.mubr.f32.gmra.mxu0 %v432
        %v1721 = vpop.f32.mrf.mxu0
        %v1722 = vadd.f32 %v1578, %v1721
        %v1723 = vpop.f32.mrf.mxu0
        %v1724 = vadd.f32 %v1578, %v1723
        %1725 = vdwg.mxu0
        %1726 = vrot.lane.b32.xlu0 %v1651, 73
        %v1727 = vpop.permute.xlu0 %1726
        %1728 = vrot.lane.b32.xlu0 %v1653, 73
        %v1729 = vpop.permute.xlu0 %1728
        %1730 = vrot.lane.b32.xlu0 %v1722, 73
        %v1731 = vpop.permute.xlu0 %1730
        %1732 = vrot.lane.b32.xlu0 %v1724, 73
        %v1733 = vpop.permute.xlu0 %1732
        %v1734 = vsel %vm445, %v1731, %v1733
        %v1735 = vsel %vm445, %v1729, %v1731
        %v1736 = vsel %vm445, %v1727, %v1729
        %v1737 = vsel %vm445, %v1733, %v1727
        %v1738 = vld [vmem:[#allocation7] ss:$8 sm:$0xf]
        %v1740 = vlaneseq
        %v1741 = vshrl.u32 %v1740, 7
        %v1742 = vsub.s32 0, %v1741
        %v1743 = vrot.slane %v1738, %v1742
        %v1744 = vlaneseq
        %v1745 = vshrl.u32 %v1744, 7
        %v1746 = vsub.s32 1, %v1745
        %v1747 = vrot.slane %v1738, %v1746
        %v1748 = vlaneseq
        %v1749 = vshrl.u32 %v1748, 7
        %v1750 = vsub.s32 2, %v1749
        %v1751 = vrot.slane %v1738, %v1750
        %v1752 = vlaneseq
        %v1753 = vshrl.u32 %v1752, 7
        %v1754 = vsub.s32 3, %v1753
        %v1755 = vrot.slane %v1738, %v1754
        %v1760 = vmul.f32 %v1737, %v1743
        %v1761 = vmul.f32 %v1736, %v1747
        %v1762 = vmul.f32 %v1735, %v1751
        %v1763 = vmul.f32 %v1734, %v1755
        %v1764 = vld [vmem:[%s6] sm:$0xff]
        %1766 = vset.pattern.permute.xlu0 0
        %1767 = vperm.xlu0 %1766, %v1764
        %v1768 = vpop.permute.xlu0 %1767
        %v1770 = vmul.f32 %v1760, %v1768
        %v1771 = vmul.f32 %v1761, %v1768
        %v1772 = vmul.f32 %v1762, %v1768
        %v1773 = vmul.f32 %v1763, %v1768
        %1774 = vrot.lane.b32.xlu0 %v1651, 72
        %v1775 = vpop.permute.xlu0 %1774
        %1776 = vrot.lane.b32.xlu0 %v1653, 72
        %v1777 = vpop.permute.xlu0 %1776
        %1778 = vrot.lane.b32.xlu0 %v1722, 72
        %v1779 = vpop.permute.xlu0 %1778
        %1780 = vrot.lane.b32.xlu0 %v1724, 72
        %v1781 = vpop.permute.xlu0 %1780
        %v1782 = vsel %vm488, %v1779, %v1781
        %v1783 = vsel %vm488, %v1777, %v1779
        %v1784 = vsel %vm488, %v1775, %v1777
        %v1785 = vsel %vm488, %v1781, %v1775
        %v1786 = vld [vmem:[%s493] ss:$8 sm:$0xf]
        %v1788 = vlaneseq
        %v1789 = vshrl.u32 %v1788, 7
        %v1790 = vsub.s32 0, %v1789
        %v1791 = vrot.slane %v1786, %v1790
        %v1792 = vlaneseq
        %v1793 = vshrl.u32 %v1792, 7
        %v1794 = vsub.s32 1, %v1793
        %v1795 = vrot.slane %v1786, %v1794
        %v1796 = vlaneseq
        %v1797 = vshrl.u32 %v1796, 7
        %v1798 = vsub.s32 2, %v1797
        %v1799 = vrot.slane %v1786, %v1798
        %v1800 = vlaneseq
        %v1801 = vshrl.u32 %v1800, 7
        %v1802 = vsub.s32 3, %v1801
        %v1803 = vrot.slane %v1786, %v1802
        %v1808 = vmul.f32 %v1785, %v1791
        %v1809 = vmul.f32 %v1784, %v1795
        %v1810 = vmul.f32 %v1783, %v1799
        %v1811 = vmul.f32 %v1782, %v1803
        %1812 = vset.pattern.permute.xlu0 1
        %1813 = vperm.xlu0 %1812, %v1764
        %v1814 = vpop.permute.xlu0 %1813
        %v1816 = vmul.f32 %v1808, %v1814
        %v1817 = vmul.f32 %v1809, %v1814
        %v1818 = vmul.f32 %v1810, %v1814
        %v1819 = vmul.f32 %v1811, %v1814
        %v1820 = vadd.f32 %v1770, %v1816
        %v1821 = vadd.f32 %v1771, %v1817
        %v1822 = vadd.f32 %v1772, %v1818
        %v1823 = vadd.f32 %v1773, %v1819
        %1824 = vrot.lane.b32.xlu0 %v1651, 71
        %v1825 = vpop.permute.xlu0 %1824
        %1826 = vrot.lane.b32.xlu0 %v1653, 71
        %v1827 = vpop.permute.xlu0 %1826
        %1828 = vrot.lane.b32.xlu0 %v1722, 71
        %v1829 = vpop.permute.xlu0 %1828
        %1830 = vrot.lane.b32.xlu0 %v1724, 71
        %v1831 = vpop.permute.xlu0 %1830
        %v1832 = vsel %vm532, %v1829, %v1831
        %v1833 = vsel %vm532, %v1827, %v1829
        %v1834 = vsel %vm532, %v1825, %v1827
        %v1835 = vsel %vm532, %v1831, %v1825
        %v1836 = vld [vmem:[%s537] ss:$8 sm:$0xf]
        %v1838 = vlaneseq
        %v1839 = vshrl.u32 %v1838, 7
        %v1840 = vsub.s32 0, %v1839
        %v1841 = vrot.slane %v1836, %v1840
        %v1842 = vlaneseq
        %v1843 = vshrl.u32 %v1842, 7
        %v1844 = vsub.s32 1, %v1843
        %v1845 = vrot.slane %v1836, %v1844
        %v1846 = vlaneseq
        %v1847 = vshrl.u32 %v1846, 7
        %v1848 = vsub.s32 2, %v1847
        %v1849 = vrot.slane %v1836, %v1848
        %v1850 = vlaneseq
        %v1851 = vshrl.u32 %v1850, 7
        %v1852 = vsub.s32 3, %v1851
        %v1853 = vrot.slane %v1836, %v1852
        %v1858 = vmul.f32 %v1835, %v1841
        %v1859 = vmul.f32 %v1834, %v1845
        %v1860 = vmul.f32 %v1833, %v1849
        %v1861 = vmul.f32 %v1832, %v1853
        %1862 = vset.pattern.permute.xlu0 2
        %1863 = vperm.xlu0 %1862, %v1764
        %v1864 = vpop.permute.xlu0 %1863
        %v1866 = vmul.f32 %v1858, %v1864
        %v1867 = vmul.f32 %v1859, %v1864
        %v1868 = vmul.f32 %v1860, %v1864
        %v1869 = vmul.f32 %v1861, %v1864
        %v1870 = vadd.f32 %v1820, %v1866
        %v1871 = vadd.f32 %v1821, %v1867
        %v1872 = vadd.f32 %v1822, %v1868
        %v1873 = vadd.f32 %v1823, %v1869
        %1874 = vrot.lane.b32.xlu0 %v1651, 65
        %v1875 = vpop.permute.xlu0 %1874
        %1876 = vrot.lane.b32.xlu0 %v1653, 65
        %v1877 = vpop.permute.xlu0 %1876
        %1878 = vrot.lane.b32.xlu0 %v1722, 65
        %v1879 = vpop.permute.xlu0 %1878
        %1880 = vrot.lane.b32.xlu0 %v1724, 65
        %v1881 = vpop.permute.xlu0 %1880
        %v1882 = vsel %vm576, %v1879, %v1881
        %v1883 = vsel %vm576, %v1877, %v1879
        %v1884 = vsel %vm576, %v1875, %v1877
        %v1885 = vsel %vm576, %v1881, %v1875
        %v1886 = vld [vmem:[%s581] ss:$8 sm:$0xf]
        %v1888 = vlaneseq
        %v1889 = vshrl.u32 %v1888, 7
        %v1890 = vsub.s32 0, %v1889
        %v1891 = vrot.slane %v1886, %v1890
        %v1892 = vlaneseq
        %v1893 = vshrl.u32 %v1892, 7
        %v1894 = vsub.s32 1, %v1893
        %v1895 = vrot.slane %v1886, %v1894
        %v1896 = vlaneseq
        %v1897 = vshrl.u32 %v1896, 7
        %v1898 = vsub.s32 2, %v1897
        %v1899 = vrot.slane %v1886, %v1898
        %v1900 = vlaneseq
        %v1901 = vshrl.u32 %v1900, 7
        %v1902 = vsub.s32 3, %v1901
        %v1903 = vrot.slane %v1886, %v1902
        %v1908 = vmul.f32 %v1885, %v1891
        %v1909 = vmul.f32 %v1884, %v1895
        %v1910 = vmul.f32 %v1883, %v1899
        %v1911 = vmul.f32 %v1882, %v1903
        %1912 = vset.pattern.permute.xlu0 3
        %1913 = vperm.xlu0 %1912, %v1764
        %v1914 = vpop.permute.xlu0 %1913
        %v1916 = vmul.f32 %v1908, %v1914
        %v1917 = vmul.f32 %v1909, %v1914
        %v1918 = vmul.f32 %v1910, %v1914
        %v1919 = vmul.f32 %v1911, %v1914
        %v1920 = vadd.f32 %v1870, %v1916
        %v1921 = vadd.f32 %v1871, %v1917
        %v1922 = vadd.f32 %v1872, %v1918
        %v1923 = vadd.f32 %v1873, %v1919
        %1924 = vrot.lane.b32.xlu0 %v1651, 64
        %v1925 = vpop.permute.xlu0 %1924
        %1926 = vrot.lane.b32.xlu0 %v1653, 64
        %v1927 = vpop.permute.xlu0 %1926
        %1928 = vrot.lane.b32.xlu0 %v1722, 64
        %v1929 = vpop.permute.xlu0 %1928
        %1930 = vrot.lane.b32.xlu0 %v1724, 64
        %v1931 = vpop.permute.xlu0 %1930
        %v1932 = vsel %vm620, %v1929, %v1931
        %v1933 = vsel %vm620, %v1927, %v1929
        %v1934 = vsel %vm620, %v1925, %v1927
        %v1935 = vsel %vm620, %v1931, %v1925
        %v1936 = vld [vmem:[%s625] ss:$8 sm:$0xf]
        %v1938 = vlaneseq
        %v1939 = vshrl.u32 %v1938, 7
        %v1940 = vsub.s32 0, %v1939
        %v1941 = vrot.slane %v1936, %v1940
        %v1942 = vlaneseq
        %v1943 = vshrl.u32 %v1942, 7
        %v1944 = vsub.s32 1, %v1943
        %v1945 = vrot.slane %v1936, %v1944
        %v1946 = vlaneseq
        %v1947 = vshrl.u32 %v1946, 7
        %v1948 = vsub.s32 2, %v1947
        %v1949 = vrot.slane %v1936, %v1948
        %v1950 = vlaneseq
        %v1951 = vshrl.u32 %v1950, 7
        %v1952 = vsub.s32 3, %v1951
        %v1953 = vrot.slane %v1936, %v1952
        %v1958 = vmul.f32 %v1935, %v1941
        %v1959 = vmul.f32 %v1934, %v1945
        %v1960 = vmul.f32 %v1933, %v1949
        %v1961 = vmul.f32 %v1932, %v1953
        %1962 = vset.pattern.permute.xlu0 4
        %1963 = vperm.xlu0 %1962, %v1764
        %v1964 = vpop.permute.xlu0 %1963
        %v1966 = vmul.f32 %v1958, %v1964
        %v1967 = vmul.f32 %v1959, %v1964
        %v1968 = vmul.f32 %v1960, %v1964
        %v1969 = vmul.f32 %v1961, %v1964
        %v1970 = vadd.f32 %v1920, %v1966
        %v1971 = vadd.f32 %v1921, %v1967
        %v1972 = vadd.f32 %v1922, %v1968
        %v1973 = vadd.f32 %v1923, %v1969
        %1974 = vrot.lane.b32.xlu0 %v1651, 63
        %v1975 = vpop.permute.xlu0 %1974
        %1976 = vrot.lane.b32.xlu0 %v1653, 63
        %v1977 = vpop.permute.xlu0 %1976
        %1978 = vrot.lane.b32.xlu0 %v1722, 63
        %v1979 = vpop.permute.xlu0 %1978
        %1980 = vrot.lane.b32.xlu0 %v1724, 63
        %v1981 = vpop.permute.xlu0 %1980
        %v1982 = vsel %vm664, %v1979, %v1981
        %v1983 = vsel %vm664, %v1977, %v1979
        %v1984 = vsel %vm664, %v1975, %v1977
        %v1985 = vsel %vm664, %v1981, %v1975
        %v1986 = vld [vmem:[%s669] ss:$8 sm:$0xf]
        %v1988 = vlaneseq
        %v1989 = vshrl.u32 %v1988, 7
        %v1990 = vsub.s32 0, %v1989
        %v1991 = vrot.slane %v1986, %v1990
        %v1992 = vlaneseq
        %v1993 = vshrl.u32 %v1992, 7
        %v1994 = vsub.s32 1, %v1993
        %v1995 = vrot.slane %v1986, %v1994
        %v1996 = vlaneseq
        %v1997 = vshrl.u32 %v1996, 7
        %v1998 = vsub.s32 2, %v1997
        %v1999 = vrot.slane %v1986, %v1998
        %v2000 = vlaneseq
        %v2001 = vshrl.u32 %v2000, 7
        %v2002 = vsub.s32 3, %v2001
        %v2003 = vrot.slane %v1986, %v2002
        %v2008 = vmul.f32 %v1985, %v1991
        %v2009 = vmul.f32 %v1984, %v1995
        %v2010 = vmul.f32 %v1983, %v1999
        %v2011 = vmul.f32 %v1982, %v2003
        %2012 = vset.pattern.permute.xlu0 5
        %2013 = vperm.xlu0 %2012, %v1764
        %v2014 = vpop.permute.xlu0 %2013
        %v2016 = vmul.f32 %v2008, %v2014
        %v2017 = vmul.f32 %v2009, %v2014
        %v2018 = vmul.f32 %v2010, %v2014
        %v2019 = vmul.f32 %v2011, %v2014
        %v2020 = vadd.f32 %v1970, %v2016
        %v2021 = vadd.f32 %v1971, %v2017
        %v2022 = vadd.f32 %v1972, %v2018
        %v2023 = vadd.f32 %v1973, %v2019
        %2024 = vrot.lane.b32.xlu0 %v1651, 57
        %v2025 = vpop.permute.xlu0 %2024
        %2026 = vrot.lane.b32.xlu0 %v1653, 57
        %v2027 = vpop.permute.xlu0 %2026
        %2028 = vrot.lane.b32.xlu0 %v1722, 57
        %v2029 = vpop.permute.xlu0 %2028
        %2030 = vrot.lane.b32.xlu0 %v1724, 57
        %v2031 = vpop.permute.xlu0 %2030
        %v2032 = vsel %vm708, %v2029, %v2031
        %v2033 = vsel %vm708, %v2027, %v2029
        %v2034 = vsel %vm708, %v2025, %v2027
        %v2035 = vsel %vm708, %v2031, %v2025
        %v2036 = vld [vmem:[%s713] ss:$8 sm:$0xf]
        %v2038 = vlaneseq
        %v2039 = vshrl.u32 %v2038, 7
        %v2040 = vsub.s32 0, %v2039
        %v2041 = vrot.slane %v2036, %v2040
        %v2042 = vlaneseq
        %v2043 = vshrl.u32 %v2042, 7
        %v2044 = vsub.s32 1, %v2043
        %v2045 = vrot.slane %v2036, %v2044
        %v2046 = vlaneseq
        %v2047 = vshrl.u32 %v2046, 7
        %v2048 = vsub.s32 2, %v2047
        %v2049 = vrot.slane %v2036, %v2048
        %v2050 = vlaneseq
        %v2051 = vshrl.u32 %v2050, 7
        %v2052 = vsub.s32 3, %v2051
        %v2053 = vrot.slane %v2036, %v2052
        %v2058 = vmul.f32 %v2035, %v2041
        %v2059 = vmul.f32 %v2034, %v2045
        %v2060 = vmul.f32 %v2033, %v2049
        %v2061 = vmul.f32 %v2032, %v2053
        %2062 = vset.pattern.permute.xlu0 6
        %2063 = vperm.xlu0 %2062, %v1764
        %v2064 = vpop.permute.xlu0 %2063
        %v2066 = vmul.f32 %v2058, %v2064
        %v2067 = vmul.f32 %v2059, %v2064
        %v2068 = vmul.f32 %v2060, %v2064
        %v2069 = vmul.f32 %v2061, %v2064
        %v2070 = vadd.f32 %v2020, %v2066
        %v2071 = vadd.f32 %v2021, %v2067
        %v2072 = vadd.f32 %v2022, %v2068
        %v2073 = vadd.f32 %v2023, %v2069
        %2074 = vrot.lane.b32.xlu0 %v1651, 56
        %v2075 = vpop.permute.xlu0 %2074
        %2076 = vrot.lane.b32.xlu0 %v1653, 56
        %v2077 = vpop.permute.xlu0 %2076
        %2078 = vrot.lane.b32.xlu0 %v1722, 56
        %v2079 = vpop.permute.xlu0 %2078
        %2080 = vrot.lane.b32.xlu0 %v1724, 56
        %v2081 = vpop.permute.xlu0 %2080
        %v2082 = vsel %vm752, %v2079, %v2081
        %v2083 = vsel %vm752, %v2077, %v2079
        %v2084 = vsel %vm752, %v2075, %v2077
        %v2085 = vsel %vm752, %v2081, %v2075
        %v2086 = vld [vmem:[%s757] ss:$8 sm:$0xf]
        %v2088 = vlaneseq
        %v2089 = vshrl.u32 %v2088, 7
        %v2090 = vsub.s32 0, %v2089
        %v2091 = vrot.slane %v2086, %v2090
        %v2092 = vlaneseq
        %v2093 = vshrl.u32 %v2092, 7
        %v2094 = vsub.s32 1, %v2093
        %v2095 = vrot.slane %v2086, %v2094
        %v2096 = vlaneseq
        %v2097 = vshrl.u32 %v2096, 7
        %v2098 = vsub.s32 2, %v2097
        %v2099 = vrot.slane %v2086, %v2098
        %v2100 = vlaneseq
        %v2101 = vshrl.u32 %v2100, 7
        %v2102 = vsub.s32 3, %v2101
        %v2103 = vrot.slane %v2086, %v2102
        %v2108 = vmul.f32 %v2085, %v2091
        %v2109 = vmul.f32 %v2084, %v2095
        %v2110 = vmul.f32 %v2083, %v2099
        %v2111 = vmul.f32 %v2082, %v2103
        %2112 = vset.pattern.permute.xlu0 7
        %2113 = vperm.xlu0 %2112, %v1764
        %v2114 = vpop.permute.xlu0 %2113
        %v2116 = vmul.f32 %v2108, %v2114
        %v2117 = vmul.f32 %v2109, %v2114
        %v2118 = vmul.f32 %v2110, %v2114
        %v2119 = vmul.f32 %v2111, %v2114
        %v2120 = vadd.f32 %v2070, %v2116
        %v2121 = vadd.f32 %v2071, %v2117
        %v2122 = vadd.f32 %v2072, %v2118
        %v2123 = vadd.f32 %v2073, %v2119
        %2124 = vrot.lane.b32.xlu0 %v1651, 55
        %v2125 = vpop.permute.xlu0 %2124
        %2126 = vrot.lane.b32.xlu0 %v1653, 55
        %v2127 = vpop.permute.xlu0 %2126
        %2128 = vrot.lane.b32.xlu0 %v1722, 55
        %v2129 = vpop.permute.xlu0 %2128
        %2130 = vrot.lane.b32.xlu0 %v1724, 55
        %v2131 = vpop.permute.xlu0 %2130
        %v2132 = vsel %vm796, %v2129, %v2131
        %v2133 = vsel %vm796, %v2127, %v2129
        %v2134 = vsel %vm796, %v2125, %v2127
        %v2135 = vsel %vm796, %v2131, %v2125
        %v2136 = vld [vmem:[%s801] ss:$8 sm:$0xf]
        %v2138 = vlaneseq
        %v2139 = vshrl.u32 %v2138, 7
        %v2140 = vsub.s32 0, %v2139
        %v2141 = vrot.slane %v2136, %v2140
        %v2142 = vlaneseq
        %v2143 = vshrl.u32 %v2142, 7
        %v2144 = vsub.s32 1, %v2143
        %v2145 = vrot.slane %v2136, %v2144
        %v2146 = vlaneseq
        %v2147 = vshrl.u32 %v2146, 7
        %v2148 = vsub.s32 2, %v2147
        %v2149 = vrot.slane %v2136, %v2148
        %v2150 = vlaneseq
        %v2151 = vshrl.u32 %v2150, 7
        %v2152 = vsub.s32 3, %v2151
        %v2153 = vrot.slane %v2136, %v2152
        %v2158 = vmul.f32 %v2135, %v2141
        %v2159 = vmul.f32 %v2134, %v2145
        %v2160 = vmul.f32 %v2133, %v2149
        %v2161 = vmul.f32 %v2132, %v2153
        %2162 = vset.pattern.permute.xlu0 8
        %2163 = vperm.xlu0 %2162, %v1764
        %v2164 = vpop.permute.xlu0 %2163
        %v2166 = vmul.f32 %v2158, %v2164
        %v2167 = vmul.f32 %v2159, %v2164
        %v2168 = vmul.f32 %v2160, %v2164
        %v2169 = vmul.f32 %v2161, %v2164
        %v2170 = vadd.f32 %v2120, %v2166
        %v2171 = vadd.f32 %v2121, %v2167
        %v2172 = vadd.f32 %v2122, %v2168
        %v2173 = vadd.f32 %v2123, %v2169
        %2174 = vrot.lane.b32.xlu0 %v1651, 9
        %v2175 = vpop.permute.xlu0 %2174
        %2176 = vrot.lane.b32.xlu0 %v1653, 9
        %v2177 = vpop.permute.xlu0 %2176
        %2178 = vrot.lane.b32.xlu0 %v1722, 9
        %v2179 = vpop.permute.xlu0 %2178
        %2180 = vrot.lane.b32.xlu0 %v1724, 9
        %v2181 = vpop.permute.xlu0 %2180
        %v2182 = vsel %vm840, %v2179, %v2181
        %v2183 = vsel %vm840, %v2177, %v2179
        %v2184 = vsel %vm840, %v2175, %v2177
        %v2185 = vsel %vm840, %v2181, %v2175
        %v2186 = vld [vmem:[%s845] ss:$8 sm:$0xf]
        %v2188 = vlaneseq
        %v2189 = vshrl.u32 %v2188, 7
        %v2190 = vsub.s32 0, %v2189
        %v2191 = vrot.slane %v2186, %v2190
        %v2192 = vlaneseq
        %v2193 = vshrl.u32 %v2192, 7
        %v2194 = vsub.s32 1, %v2193
        %v2195 = vrot.slane %v2186, %v2194
        %v2196 = vlaneseq
        %v2197 = vshrl.u32 %v2196, 7
        %v2198 = vsub.s32 2, %v2197
        %v2199 = vrot.slane %v2186, %v2198
        %v2200 = vlaneseq
        %v2201 = vshrl.u32 %v2200, 7
        %v2202 = vsub.s32 3, %v2201
        %v2203 = vrot.slane %v2186, %v2202
        %v2208 = vmul.f32 %v2185, %v2191
        %v2209 = vmul.f32 %v2184, %v2195
        %v2210 = vmul.f32 %v2183, %v2199
        %v2211 = vmul.f32 %v2182, %v2203
        %2212 = vset.pattern.permute.xlu0 9
        %2213 = vperm.xlu0 %2212, %v1764
        %v2214 = vpop.permute.xlu0 %2213
        %v2216 = vmul.f32 %v2208, %v2214
        %v2217 = vmul.f32 %v2209, %v2214
        %v2218 = vmul.f32 %v2210, %v2214
        %v2219 = vmul.f32 %v2211, %v2214
        %v2220 = vadd.f32 %v2170, %v2216
        %v2221 = vadd.f32 %v2171, %v2217
        %v2222 = vadd.f32 %v2172, %v2218
        %v2223 = vadd.f32 %v2173, %v2219
        %2224 = vrot.lane.b32.xlu0 %v1651, 8
        %v2225 = vpop.permute.xlu0 %2224
        %2226 = vrot.lane.b32.xlu0 %v1653, 8
        %v2227 = vpop.permute.xlu0 %2226
        %2228 = vrot.lane.b32.xlu0 %v1722, 8
        %v2229 = vpop.permute.xlu0 %2228
        %2230 = vrot.lane.b32.xlu0 %v1724, 8
        %v2231 = vpop.permute.xlu0 %2230
        %v2232 = vsel %vm884, %v2229, %v2231
        %v2233 = vsel %vm884, %v2227, %v2229
        %v2234 = vsel %vm884, %v2225, %v2227
        %v2235 = vsel %vm884, %v2231, %v2225
        %v2236 = vld [vmem:[%s889] ss:$8 sm:$0xf]
        %v2238 = vlaneseq
        %v2239 = vshrl.u32 %v2238, 7
        %v2240 = vsub.s32 0, %v2239
        %v2241 = vrot.slane %v2236, %v2240
        %v2242 = vlaneseq
        %v2243 = vshrl.u32 %v2242, 7
        %v2244 = vsub.s32 1, %v2243
        %v2245 = vrot.slane %v2236, %v2244
        %v2246 = vlaneseq
        %v2247 = vshrl.u32 %v2246, 7
        %v2248 = vsub.s32 2, %v2247
        %v2249 = vrot.slane %v2236, %v2248
        %v2250 = vlaneseq
        %v2251 = vshrl.u32 %v2250, 7
        %v2252 = vsub.s32 3, %v2251
        %v2253 = vrot.slane %v2236, %v2252
        %v2258 = vmul.f32 %v2235, %v2241
        %v2259 = vmul.f32 %v2234, %v2245
        %v2260 = vmul.f32 %v2233, %v2249
        %v2261 = vmul.f32 %v2232, %v2253
        %2262 = vset.pattern.permute.xlu0 10
        %2263 = vperm.xlu0 %2262, %v1764
        %v2264 = vpop.permute.xlu0 %2263
        %v2266 = vmul.f32 %v2258, %v2264
        %v2267 = vmul.f32 %v2259, %v2264
        %v2268 = vmul.f32 %v2260, %v2264
        %v2269 = vmul.f32 %v2261, %v2264
        %v2270 = vadd.f32 %v2220, %v2266
        %v2271 = vadd.f32 %v2221, %v2267
        %v2272 = vadd.f32 %v2222, %v2268
        %v2273 = vadd.f32 %v2223, %v2269
        %2274 = vrot.lane.b32.xlu0 %v1651, 7
        %v2275 = vpop.permute.xlu0 %2274
        %2276 = vrot.lane.b32.xlu0 %v1653, 7
        %v2277 = vpop.permute.xlu0 %2276
        %2278 = vrot.lane.b32.xlu0 %v1722, 7
        %v2279 = vpop.permute.xlu0 %2278
        %2280 = vrot.lane.b32.xlu0 %v1724, 7
        %v2281 = vpop.permute.xlu0 %2280
        %v2282 = vsel %vm928, %v2279, %v2281
        %v2283 = vsel %vm928, %v2277, %v2279
        %v2284 = vsel %vm928, %v2275, %v2277
        %v2285 = vsel %vm928, %v2281, %v2275
        %v2286 = vld [vmem:[%s933] ss:$8 sm:$0xf]
        %v2288 = vlaneseq
        %v2289 = vshrl.u32 %v2288, 7
        %v2290 = vsub.s32 0, %v2289
        %v2291 = vrot.slane %v2286, %v2290
        %v2292 = vlaneseq
        %v2293 = vshrl.u32 %v2292, 7
        %v2294 = vsub.s32 1, %v2293
        %v2295 = vrot.slane %v2286, %v2294
        %v2296 = vlaneseq
        %v2297 = vshrl.u32 %v2296, 7
        %v2298 = vsub.s32 2, %v2297
        %v2299 = vrot.slane %v2286, %v2298
        %v2300 = vlaneseq
        %v2301 = vshrl.u32 %v2300, 7
        %v2302 = vsub.s32 3, %v2301
        %v2303 = vrot.slane %v2286, %v2302
        %v2308 = vmul.f32 %v2285, %v2291
        %v2309 = vmul.f32 %v2284, %v2295
        %v2310 = vmul.f32 %v2283, %v2299
        %v2311 = vmul.f32 %v2282, %v2303
        %2312 = vset.pattern.permute.xlu0 11
        %2313 = vperm.xlu0 %2312, %v1764
        %v2314 = vpop.permute.xlu0 %2313
        %v2316 = vmul.f32 %v2308, %v2314
        %v2317 = vmul.f32 %v2309, %v2314
        %v2318 = vmul.f32 %v2310, %v2314
        %v2319 = vmul.f32 %v2311, %v2314
        %v2320 = vadd.f32 %v2270, %v2316
        %v2321 = vadd.f32 %v2271, %v2317
        %v2322 = vadd.f32 %v2272, %v2318
        %v2323 = vadd.f32 %v2273, %v2319
        %2324 = vrot.lane.b32.xlu0 %v1651, 1
        %v2325 = vpop.permute.xlu0 %2324
        %2326 = vrot.lane.b32.xlu0 %v1653, 1
        %v2327 = vpop.permute.xlu0 %2326
        %2328 = vrot.lane.b32.xlu0 %v1722, 1
        %v2329 = vpop.permute.xlu0 %2328
        %2330 = vrot.lane.b32.xlu0 %v1724, 1
        %v2331 = vpop.permute.xlu0 %2330
        %v2332 = vsel %vm972, %v2329, %v2331
        %v2333 = vsel %vm972, %v2327, %v2329
        %v2334 = vsel %vm972, %v2325, %v2327
        %v2335 = vsel %vm972, %v2331, %v2325
        %v2336 = vld [vmem:[%s977] ss:$8 sm:$0xf]
        %v2338 = vlaneseq
        %v2339 = vshrl.u32 %v2338, 7
        %v2340 = vsub.s32 0, %v2339
        %v2341 = vrot.slane %v2336, %v2340
        %v2342 = vlaneseq
        %v2343 = vshrl.u32 %v2342, 7
        %v2344 = vsub.s32 1, %v2343
        %v2345 = vrot.slane %v2336, %v2344
        %v2346 = vlaneseq
        %v2347 = vshrl.u32 %v2346, 7
        %v2348 = vsub.s32 2, %v2347
        %v2349 = vrot.slane %v2336, %v2348
        %v2350 = vlaneseq
        %v2351 = vshrl.u32 %v2350, 7
        %v2352 = vsub.s32 3, %v2351
        %v2353 = vrot.slane %v2336, %v2352
        %v2358 = vmul.f32 %v2335, %v2341
        %v2359 = vmul.f32 %v2334, %v2345
        %v2360 = vmul.f32 %v2333, %v2349
        %v2361 = vmul.f32 %v2332, %v2353
        %2362 = vset.pattern.permute.xlu0 12
        %2363 = vperm.xlu0 %2362, %v1764
        %v2364 = vpop.permute.xlu0 %2363
        %v2366 = vmul.f32 %v2358, %v2364
        %v2367 = vmul.f32 %v2359, %v2364
        %v2368 = vmul.f32 %v2360, %v2364
        %v2369 = vmul.f32 %v2361, %v2364
        %v2370 = vadd.f32 %v2320, %v2366
        %v2371 = vadd.f32 %v2321, %v2367
        %v2372 = vadd.f32 %v2322, %v2368
        %v2373 = vadd.f32 %v2323, %v2369
        %2374 = vset.pattern.permute.xlu0 13
        %2375 = vperm.xlu0 %2374, %v1764
        %v2376 = vpop.permute.xlu0 %2375
        %v2378 = vmul.f32 %v1651, %v2376
        %v2379 = vmul.f32 %v1653, %v2376
        %v2380 = vmul.f32 %v1722, %v2376
        %v2381 = vmul.f32 %v1724, %v2376
        %v2382 = vadd.f32 %v2370, %v2378
        %v2383 = vadd.f32 %v2371, %v2379
        %v2384 = vadd.f32 %v2372, %v2380
        %v2385 = vadd.f32 %v2373, %v2381
        %2386 = vrot.lane.b32.xlu0 %v1651, 127
        %v2387 = vpop.permute.xlu0 %2386
        %2388 = vrot.lane.b32.xlu0 %v1653, 127
        %v2389 = vpop.permute.xlu0 %2388
        %2390 = vrot.lane.b32.xlu0 %v1722, 127
        %v2391 = vpop.permute.xlu0 %2390
        %2392 = vrot.lane.b32.xlu0 %v1724, 127
        %v2393 = vpop.permute.xlu0 %2392
        %v2394 = vsel %vm1020, %v2391, %v2393
        %v2395 = vsel %vm1020, %v2389, %v2391
        %v2396 = vsel %vm1020, %v2387, %v2389
        %v2397 = vsel %vm1020, %v2393, %v2387
        %v2398 = vld [vmem:[%s1025] ss:$8 sm:$0xf]
        %v2400 = vlaneseq
        %v2401 = vshrl.u32 %v2400, 7
        %v2402 = vsub.s32 0, %v2401
        %v2403 = vrot.slane %v2398, %v2402
        %v2404 = vlaneseq
        %v2405 = vshrl.u32 %v2404, 7
        %v2406 = vsub.s32 1, %v2405
        %v2407 = vrot.slane %v2398, %v2406
        %v2408 = vlaneseq
        %v2409 = vshrl.u32 %v2408, 7
        %v2410 = vsub.s32 2, %v2409
        %v2411 = vrot.slane %v2398, %v2410
        %v2412 = vlaneseq
        %v2413 = vshrl.u32 %v2412, 7
        %v2414 = vsub.s32 3, %v2413
        %v2415 = vrot.slane %v2398, %v2414
        %v2420 = vmul.f32 %v2396, %v2403
        %v2421 = vmul.f32 %v2395, %v2407
        %v2422 = vmul.f32 %v2394, %v2411
        %v2423 = vmul.f32 %v2397, %v2415
        %2424 = vset.pattern.permute.xlu0 14
        %2425 = vperm.xlu0 %2424, %v1764
        %v2426 = vpop.permute.xlu0 %2425
        %v2428 = vmul.f32 %v2420, %v2426
        %v2429 = vmul.f32 %v2421, %v2426
        %v2430 = vmul.f32 %v2422, %v2426
        %v2431 = vmul.f32 %v2423, %v2426
        %v2432 = vadd.f32 %v2382, %v2428
        %v2433 = vadd.f32 %v2383, %v2429
        %v2434 = vadd.f32 %v2384, %v2430
        %v2435 = vadd.f32 %v2385, %v2431
        %2436 = vrot.lane.b32.xlu0 %v1651, 121
        %v2437 = vpop.permute.xlu0 %2436
        %2438 = vrot.lane.b32.xlu0 %v1653, 121
        %v2439 = vpop.permute.xlu0 %2438
        %2440 = vrot.lane.b32.xlu0 %v1722, 121
        %v2441 = vpop.permute.xlu0 %2440
        %2442 = vrot.lane.b32.xlu0 %v1724, 121
        %v2443 = vpop.permute.xlu0 %2442
        %v2444 = vsel %vm1064, %v2441, %v2443
        %v2445 = vsel %vm1064, %v2439, %v2441
        %v2446 = vsel %vm1064, %v2437, %v2439
        %v2447 = vsel %vm1064, %v2443, %v2437
        %v2448 = vld [vmem:[%s1069] ss:$8 sm:$0xf]
        %v2450 = vlaneseq
        %v2451 = vshrl.u32 %v2450, 7
        %v2452 = vsub.s32 0, %v2451
        %v2453 = vrot.slane %v2448, %v2452
        %v2454 = vlaneseq
        %v2455 = vshrl.u32 %v2454, 7
        %v2456 = vsub.s32 1, %v2455
        %v2457 = vrot.slane %v2448, %v2456
        %v2458 = vlaneseq
        %v2459 = vshrl.u32 %v2458, 7
        %v2460 = vsub.s32 2, %v2459
        %v2461 = vrot.slane %v2448, %v2460
        %v2462 = vlaneseq
        %v2463 = vshrl.u32 %v2462, 7
        %v2464 = vsub.s32 3, %v2463
        %v2465 = vrot.slane %v2448, %v2464
        %v2470 = vmul.f32 %v2446, %v2453
        %v2471 = vmul.f32 %v2445, %v2457
        %v2472 = vmul.f32 %v2444, %v2461
        %v2473 = vmul.f32 %v2447, %v2465
        %2474 = vset.pattern.permute.xlu0 15
        %2475 = vperm.xlu0 %2474, %v1764
        %v2476 = vpop.permute.xlu0 %2475
        %v2478 = vmul.f32 %v2470, %v2476
        %v2479 = vmul.f32 %v2471, %v2476
        %v2480 = vmul.f32 %v2472, %v2476
        %v2481 = vmul.f32 %v2473, %v2476
        %v2482 = vadd.f32 %v2432, %v2478
        %v2483 = vadd.f32 %v2433, %v2479
        %v2484 = vadd.f32 %v2434, %v2480
        %v2485 = vadd.f32 %v2435, %v2481
        %2486 = vrot.lane.b32.xlu0 %v1651, 120
        %v2487 = vpop.permute.xlu0 %2486
        %2488 = vrot.lane.b32.xlu0 %v1653, 120
        %v2489 = vpop.permute.xlu0 %2488
        %2490 = vrot.lane.b32.xlu0 %v1722, 120
        %v2491 = vpop.permute.xlu0 %2490
        %2492 = vrot.lane.b32.xlu0 %v1724, 120
        %v2493 = vpop.permute.xlu0 %2492
        %v2494 = vsel %vm1108, %v2491, %v2493
        %v2495 = vsel %vm1108, %v2489, %v2491
        %v2496 = vsel %vm1108, %v2487, %v2489
        %v2497 = vsel %vm1108, %v2493, %v2487
        %v2498 = vld [vmem:[%s1113] ss:$8 sm:$0xf]
        %v2500 = vlaneseq
        %v2501 = vshrl.u32 %v2500, 7
        %v2502 = vsub.s32 0, %v2501
        %v2503 = vrot.slane %v2498, %v2502
        %v2504 = vlaneseq
        %v2505 = vshrl.u32 %v2504, 7
        %v2506 = vsub.s32 1, %v2505
        %v2507 = vrot.slane %v2498, %v2506
        %v2508 = vlaneseq
        %v2509 = vshrl.u32 %v2508, 7
        %v2510 = vsub.s32 2, %v2509
        %v2511 = vrot.slane %v2498, %v2510
        %v2512 = vlaneseq
        %v2513 = vshrl.u32 %v2512, 7
        %v2514 = vsub.s32 3, %v2513
        %v2515 = vrot.slane %v2498, %v2514
        %v2520 = vmul.f32 %v2496, %v2503
        %v2521 = vmul.f32 %v2495, %v2507
        %v2522 = vmul.f32 %v2494, %v2511
        %v2523 = vmul.f32 %v2497, %v2515
        %2524 = vset.pattern.permute.xlu0 16
        %2525 = vperm.xlu0 %2524, %v1764
        %v2526 = vpop.permute.xlu0 %2525
        %v2528 = vmul.f32 %v2520, %v2526
        %v2529 = vmul.f32 %v2521, %v2526
        %v2530 = vmul.f32 %v2522, %v2526
        %v2531 = vmul.f32 %v2523, %v2526
        %v2532 = vadd.f32 %v2482, %v2528
        %v2533 = vadd.f32 %v2483, %v2529
        %v2534 = vadd.f32 %v2484, %v2530
        %v2535 = vadd.f32 %v2485, %v2531
        %2536 = vrot.lane.b32.xlu0 %v1651, 119
        %v2537 = vpop.permute.xlu0 %2536
        %2538 = vrot.lane.b32.xlu0 %v1653, 119
        %v2539 = vpop.permute.xlu0 %2538
        %2540 = vrot.lane.b32.xlu0 %v1722, 119
        %v2541 = vpop.permute.xlu0 %2540
        %2542 = vrot.lane.b32.xlu0 %v1724, 119
        %v2543 = vpop.permute.xlu0 %2542
        %v2544 = vsel %vm1152, %v2541, %v2543
        %v2545 = vsel %vm1152, %v2539, %v2541
        %v2546 = vsel %vm1152, %v2537, %v2539
        %v2547 = vsel %vm1152, %v2543, %v2537
        %v2548 = vld [vmem:[%s1157] ss:$8 sm:$0xf]
        %v2550 = vlaneseq
        %v2551 = vshrl.u32 %v2550, 7
        %v2552 = vsub.s32 0, %v2551
        %v2553 = vrot.slane %v2548, %v2552
        %v2554 = vlaneseq
        %v2555 = vshrl.u32 %v2554, 7
        %v2556 = vsub.s32 1, %v2555
        %v2557 = vrot.slane %v2548, %v2556
        %v2558 = vlaneseq
        %v2559 = vshrl.u32 %v2558, 7
        %v2560 = vsub.s32 2, %v2559
        %v2561 = vrot.slane %v2548, %v2560
        %v2562 = vlaneseq
        %v2563 = vshrl.u32 %v2562, 7
        %v2564 = vsub.s32 3, %v2563
        %v2565 = vrot.slane %v2548, %v2564
        %v2570 = vmul.f32 %v2546, %v2553
        %v2571 = vmul.f32 %v2545, %v2557
        %v2572 = vmul.f32 %v2544, %v2561
        %v2573 = vmul.f32 %v2547, %v2565
        %2574 = vset.pattern.permute.xlu0 17
        %2575 = vperm.xlu0 %2574, %v1764
        %v2576 = vpop.permute.xlu0 %2575
        %v2578 = vmul.f32 %v2570, %v2576
        %v2579 = vmul.f32 %v2571, %v2576
        %v2580 = vmul.f32 %v2572, %v2576
        %v2581 = vmul.f32 %v2573, %v2576
        %v2582 = vadd.f32 %v2532, %v2578
        %v2583 = vadd.f32 %v2533, %v2579
        %v2584 = vadd.f32 %v2534, %v2580
        %v2585 = vadd.f32 %v2535, %v2581
        %v2586 = vld [vmem:[%s1188] ss:$8 sm:$0xf]
        %v2588 = vlaneseq
        %v2589 = vshrl.u32 %v2588, 7
        %v2590 = vsub.s32 0, %v2589
        %v2591 = vrot.slane %v2586, %v2590
        %v2592 = vlaneseq
        %v2593 = vshrl.u32 %v2592, 7
        %v2594 = vsub.s32 1, %v2593
        %v2595 = vrot.slane %v2586, %v2594
        %v2596 = vlaneseq
        %v2597 = vshrl.u32 %v2596, 7
        %v2598 = vsub.s32 2, %v2597
        %v2599 = vrot.slane %v2586, %v2598
        %v2600 = vlaneseq
        %v2601 = vshrl.u32 %v2600, 7
        %v2602 = vsub.s32 3, %v2601
        %v2603 = vrot.slane %v2586, %v2602
        %v2608 = vmul.f32 %v1736, %v2591
        %v2609 = vmul.f32 %v1735, %v2595
        %v2610 = vmul.f32 %v1734, %v2599
        %v2611 = vmul.f32 %v1737, %v2603
        %2612 = vset.pattern.permute.xlu0 18
        %2613 = vperm.xlu0 %2612, %v1764
        %v2614 = vpop.permute.xlu0 %2613
        %v2616 = vmul.f32 %v2608, %v2614
        %v2617 = vmul.f32 %v2609, %v2614
        %v2618 = vmul.f32 %v2610, %v2614
        %v2619 = vmul.f32 %v2611, %v2614
        %v2620 = vadd.f32 %v2582, %v2616
        %v2621 = vadd.f32 %v2583, %v2617
        %v2622 = vadd.f32 %v2584, %v2618
        %v2623 = vadd.f32 %v2585, %v2619
        %v2624 = vld [vmem:[%s1219] ss:$8 sm:$0xf]
        %v2626 = vlaneseq
        %v2627 = vshrl.u32 %v2626, 7
        %v2628 = vsub.s32 0, %v2627
        %v2629 = vrot.slane %v2624, %v2628
        %v2630 = vlaneseq
        %v2631 = vshrl.u32 %v2630, 7
        %v2632 = vsub.s32 1, %v2631
        %v2633 = vrot.slane %v2624, %v2632
        %v2634 = vlaneseq
        %v2635 = vshrl.u32 %v2634, 7
        %v2636 = vsub.s32 2, %v2635
        %v2637 = vrot.slane %v2624, %v2636
        %v2638 = vlaneseq
        %v2639 = vshrl.u32 %v2638, 7
        %v2640 = vsub.s32 3, %v2639
        %v2641 = vrot.slane %v2624, %v2640
        %v2646 = vmul.f32 %v1784, %v2629
        %v2647 = vmul.f32 %v1783, %v2633
        %v2648 = vmul.f32 %v1782, %v2637
        %v2649 = vmul.f32 %v1785, %v2641
        %2650 = vset.pattern.permute.xlu0 19
        %2651 = vperm.xlu0 %2650, %v1764
        %v2652 = vpop.permute.xlu0 %2651
        %v2654 = vmul.f32 %v2646, %v2652
        %v2655 = vmul.f32 %v2647, %v2652
        %v2656 = vmul.f32 %v2648, %v2652
        %v2657 = vmul.f32 %v2649, %v2652
        %v2658 = vadd.f32 %v2620, %v2654
        %v2659 = vadd.f32 %v2621, %v2655
        %v2660 = vadd.f32 %v2622, %v2656
        %v2661 = vadd.f32 %v2623, %v2657
        %v2662 = vld [vmem:[%s1250] ss:$8 sm:$0xf]
        %v2664 = vlaneseq
        %v2665 = vshrl.u32 %v2664, 7
        %v2666 = vsub.s32 0, %v2665
        %v2667 = vrot.slane %v2662, %v2666
        %v2668 = vlaneseq
        %v2669 = vshrl.u32 %v2668, 7
        %v2670 = vsub.s32 1, %v2669
        %v2671 = vrot.slane %v2662, %v2670
        %v2672 = vlaneseq
        %v2673 = vshrl.u32 %v2672, 7
        %v2674 = vsub.s32 2, %v2673
        %v2675 = vrot.slane %v2662, %v2674
        %v2676 = vlaneseq
        %v2677 = vshrl.u32 %v2676, 7
        %v2678 = vsub.s32 3, %v2677
        %v2679 = vrot.slane %v2662, %v2678
        %v2684 = vmul.f32 %v1834, %v2667
        %v2685 = vmul.f32 %v1833, %v2671
        %v2686 = vmul.f32 %v1832, %v2675
        %v2687 = vmul.f32 %v1835, %v2679
        %2688 = vset.pattern.permute.xlu0 20
        %2689 = vperm.xlu0 %2688, %v1764
        %v2690 = vpop.permute.xlu0 %2689
        %v2692 = vmul.f32 %v2684, %v2690
        %v2693 = vmul.f32 %v2685, %v2690
        %v2694 = vmul.f32 %v2686, %v2690
        %v2695 = vmul.f32 %v2687, %v2690
        %v2696 = vadd.f32 %v2658, %v2692
        %v2697 = vadd.f32 %v2659, %v2693
        %v2698 = vadd.f32 %v2660, %v2694
        %v2699 = vadd.f32 %v2661, %v2695
        %v2700 = vld [vmem:[%s1281] ss:$8 sm:$0xf]
        %v2702 = vlaneseq
        %v2703 = vshrl.u32 %v2702, 7
        %v2704 = vsub.s32 0, %v2703
        %v2705 = vrot.slane %v2700, %v2704
        %v2706 = vlaneseq
        %v2707 = vshrl.u32 %v2706, 7
        %v2708 = vsub.s32 1, %v2707
        %v2709 = vrot.slane %v2700, %v2708
        %v2710 = vlaneseq
        %v2711 = vshrl.u32 %v2710, 7
        %v2712 = vsub.s32 2, %v2711
        %v2713 = vrot.slane %v2700, %v2712
        %v2714 = vlaneseq
        %v2715 = vshrl.u32 %v2714, 7
        %v2716 = vsub.s32 3, %v2715
        %v2717 = vrot.slane %v2700, %v2716
        %v2722 = vmul.f32 %v1884, %v2705
        %v2723 = vmul.f32 %v1883, %v2709
        %v2724 = vmul.f32 %v1882, %v2713
        %v2725 = vmul.f32 %v1885, %v2717
        %2726 = vset.pattern.permute.xlu0 21
        %2727 = vperm.xlu0 %2726, %v1764
        %v2728 = vpop.permute.xlu0 %2727
        %v2730 = vmul.f32 %v2722, %v2728
        %v2731 = vmul.f32 %v2723, %v2728
        %v2732 = vmul.f32 %v2724, %v2728
        %v2733 = vmul.f32 %v2725, %v2728
        %v2734 = vadd.f32 %v2696, %v2730
        %v2735 = vadd.f32 %v2697, %v2731
        %v2736 = vadd.f32 %v2698, %v2732
        %v2737 = vadd.f32 %v2699, %v2733
        %v2738 = vld [vmem:[%s1312] ss:$8 sm:$0xf]
        %v2740 = vlaneseq
        %v2741 = vshrl.u32 %v2740, 7
        %v2742 = vsub.s32 0, %v2741
        %v2743 = vrot.slane %v2738, %v2742
        %v2744 = vlaneseq
        %v2745 = vshrl.u32 %v2744, 7
        %v2746 = vsub.s32 1, %v2745
        %v2747 = vrot.slane %v2738, %v2746
        %v2748 = vlaneseq
        %v2749 = vshrl.u32 %v2748, 7
        %v2750 = vsub.s32 2, %v2749
        %v2751 = vrot.slane %v2738, %v2750
        %v2752 = vlaneseq
        %v2753 = vshrl.u32 %v2752, 7
        %v2754 = vsub.s32 3, %v2753
        %v2755 = vrot.slane %v2738, %v2754
        %v2760 = vmul.f32 %v1934, %v2743
        %v2761 = vmul.f32 %v1933, %v2747
        %v2762 = vmul.f32 %v1932, %v2751
        %v2763 = vmul.f32 %v1935, %v2755
        %2764 = vset.pattern.permute.xlu0 22
        %2765 = vperm.xlu0 %2764, %v1764
        %v2766 = vpop.permute.xlu0 %2765
        %v2768 = vmul.f32 %v2760, %v2766
        %v2769 = vmul.f32 %v2761, %v2766
        %v2770 = vmul.f32 %v2762, %v2766
        %v2771 = vmul.f32 %v2763, %v2766
        %v2772 = vadd.f32 %v2734, %v2768
        %v2773 = vadd.f32 %v2735, %v2769
        %v2774 = vadd.f32 %v2736, %v2770
        %v2775 = vadd.f32 %v2737, %v2771
        %v2776 = vld [vmem:[%s1343] ss:$8 sm:$0xf]
        %v2778 = vlaneseq
        %v2779 = vshrl.u32 %v2778, 7
        %v2780 = vsub.s32 0, %v2779
        %v2781 = vrot.slane %v2776, %v2780
        %v2782 = vlaneseq
        %v2783 = vshrl.u32 %v2782, 7
        %v2784 = vsub.s32 1, %v2783
        %v2785 = vrot.slane %v2776, %v2784
        %v2786 = vlaneseq
        %v2787 = vshrl.u32 %v2786, 7
        %v2788 = vsub.s32 2, %v2787
        %v2789 = vrot.slane %v2776, %v2788
        %v2790 = vlaneseq
        %v2791 = vshrl.u32 %v2790, 7
        %v2792 = vsub.s32 3, %v2791
        %v2793 = vrot.slane %v2776, %v2792
        %v2798 = vmul.f32 %v1984, %v2781
        %v2799 = vmul.f32 %v1983, %v2785
        %v2800 = vmul.f32 %v1982, %v2789
        %v2801 = vmul.f32 %v1985, %v2793
        %2802 = vset.pattern.permute.xlu0 23
        %2803 = vperm.xlu0 %2802, %v1764
        %v2804 = vpop.permute.xlu0 %2803
        %v2806 = vmul.f32 %v2798, %v2804
        %v2807 = vmul.f32 %v2799, %v2804
        %v2808 = vmul.f32 %v2800, %v2804
        %v2809 = vmul.f32 %v2801, %v2804
        %v2810 = vadd.f32 %v2772, %v2806
        %v2811 = vadd.f32 %v2773, %v2807
        %v2812 = vadd.f32 %v2774, %v2808
        %v2813 = vadd.f32 %v2775, %v2809
        %v2814 = vld [vmem:[%s1374] ss:$8 sm:$0xf]
        %v2816 = vlaneseq
        %v2817 = vshrl.u32 %v2816, 7
        %v2818 = vsub.s32 0, %v2817
        %v2819 = vrot.slane %v2814, %v2818
        %v2820 = vlaneseq
        %v2821 = vshrl.u32 %v2820, 7
        %v2822 = vsub.s32 1, %v2821
        %v2823 = vrot.slane %v2814, %v2822
        %v2824 = vlaneseq
        %v2825 = vshrl.u32 %v2824, 7
        %v2826 = vsub.s32 2, %v2825
        %v2827 = vrot.slane %v2814, %v2826
        %v2828 = vlaneseq
        %v2829 = vshrl.u32 %v2828, 7
        %v2830 = vsub.s32 3, %v2829
        %v2831 = vrot.slane %v2814, %v2830
        %v2836 = vmul.f32 %v2034, %v2819
        %v2837 = vmul.f32 %v2033, %v2823
        %v2838 = vmul.f32 %v2032, %v2827
        %v2839 = vmul.f32 %v2035, %v2831
        %2840 = vset.pattern.permute.xlu0 24
        %2841 = vperm.xlu0 %2840, %v1764
        %v2842 = vpop.permute.xlu0 %2841
        %v2844 = vmul.f32 %v2836, %v2842
        %v2845 = vmul.f32 %v2837, %v2842
        %v2846 = vmul.f32 %v2838, %v2842
        %v2847 = vmul.f32 %v2839, %v2842
        %v2848 = vadd.f32 %v2810, %v2844
        %v2849 = vadd.f32 %v2811, %v2845
        %v2850 = vadd.f32 %v2812, %v2846
        %v2851 = vadd.f32 %v2813, %v2847
        %v2852 = vld [vmem:[%s1405] ss:$8 sm:$0xf]
        %v2854 = vlaneseq
        %v2855 = vshrl.u32 %v2854, 7
        %v2856 = vsub.s32 0, %v2855
        %v2857 = vrot.slane %v2852, %v2856
        %v2858 = vlaneseq
        %v2859 = vshrl.u32 %v2858, 7
        %v2860 = vsub.s32 1, %v2859
        %v2861 = vrot.slane %v2852, %v2860
        %v2862 = vlaneseq
        %v2863 = vshrl.u32 %v2862, 7
        %v2864 = vsub.s32 2, %v2863
        %v2865 = vrot.slane %v2852, %v2864
        %v2866 = vlaneseq
        %v2867 = vshrl.u32 %v2866, 7
        %v2868 = vsub.s32 3, %v2867
        %v2869 = vrot.slane %v2852, %v2868
        %v2874 = vmul.f32 %v2084, %v2857
        %v2875 = vmul.f32 %v2083, %v2861
        %v2876 = vmul.f32 %v2082, %v2865
        %v2877 = vmul.f32 %v2085, %v2869
        %2878 = vset.pattern.permute.xlu0 25
        %2879 = vperm.xlu0 %2878, %v1764
        %v2880 = vpop.permute.xlu0 %2879
        %v2882 = vmul.f32 %v2874, %v2880
        %v2883 = vmul.f32 %v2875, %v2880
        %v2884 = vmul.f32 %v2876, %v2880
        %v2885 = vmul.f32 %v2877, %v2880
        %v2886 = vadd.f32 %v2848, %v2882
        %v2887 = vadd.f32 %v2849, %v2883
        %v2888 = vadd.f32 %v2850, %v2884
        %v2889 = vadd.f32 %v2851, %v2885
        %v2890 = vld [vmem:[%s1436] ss:$8 sm:$0xf]
        %v2892 = vlaneseq
        %v2893 = vshrl.u32 %v2892, 7
        %v2894 = vsub.s32 0, %v2893
        %v2895 = vrot.slane %v2890, %v2894
        %v2896 = vlaneseq
        %v2897 = vshrl.u32 %v2896, 7
        %v2898 = vsub.s32 1, %v2897
        %v2899 = vrot.slane %v2890, %v2898
        %v2900 = vlaneseq
        %v2901 = vshrl.u32 %v2900, 7
        %v2902 = vsub.s32 2, %v2901
        %v2903 = vrot.slane %v2890, %v2902
        %v2904 = vlaneseq
        %v2905 = vshrl.u32 %v2904, 7
        %v2906 = vsub.s32 3, %v2905
        %v2907 = vrot.slane %v2890, %v2906
        %v2912 = vmul.f32 %v2134, %v2895
        %v2913 = vmul.f32 %v2133, %v2899
        %v2914 = vmul.f32 %v2132, %v2903
        %v2915 = vmul.f32 %v2135, %v2907
        %2916 = vset.pattern.permute.xlu0 26
        %2917 = vperm.xlu0 %2916, %v1764
        %v2918 = vpop.permute.xlu0 %2917
        %v2920 = vmul.f32 %v2912, %v2918
        %v2921 = vmul.f32 %v2913, %v2918
        %v2922 = vmul.f32 %v2914, %v2918
        %v2923 = vmul.f32 %v2915, %v2918
        %v2924 = vadd.f32 %v2886, %v2920
        %v2925 = vadd.f32 %v2887, %v2921
        %v2926 = vadd.f32 %v2888, %v2922
        %v2927 = vadd.f32 %v2889, %v2923
        %v2928 = vld [vmem:[%s362] sm:$0xff]
        %v2929 = vld [vmem:[%s362 + $0x8] sm:$0xff]
        %v2930 = vld [vmem:[%s362 + $0x10] sm:$0xff]
        %v2931 = vld [vmem:[%s362 + $0x18] sm:$0xff]
        %2932 = vrot.lane.b32.xlu0 %v2928, 73
        %v2933 = vpop.permute.xlu0 %2932
        %2934 = vrot.lane.b32.xlu0 %v2929, 73
        %v2935 = vpop.permute.xlu0 %2934
        %2936 = vrot.lane.b32.xlu0 %v2930, 73
        %v2937 = vpop.permute.xlu0 %2936
        %2938 = vrot.lane.b32.xlu0 %v2931, 73
        %v2939 = vpop.permute.xlu0 %2938
        %v2940 = vsel %vm445, %v2937, %v2939
        %v2941 = vsel %vm445, %v2935, %v2937
        %v2942 = vsel %vm445, %v2933, %v2935
        %v2943 = vsel %vm445, %v2939, %v2933
        %v2944 = vmul.f32 %v2943, %v1743
        %v2945 = vmul.f32 %v2942, %v1747
        %v2946 = vmul.f32 %v2941, %v1751
        %v2947 = vmul.f32 %v2940, %v1755
        %v2948 = vld [vmem:[#allocation8] sm:$0xff]
        %2950 = vset.pattern.permute.xlu0 0
        %2951 = vperm.xlu0 %2950, %v2948
        %v2952 = vpop.permute.xlu0 %2951
        %v2954 = vmul.f32 %v2944, %v2952
        %v2955 = vmul.f32 %v2945, %v2952
        %v2956 = vmul.f32 %v2946, %v2952
        %v2957 = vmul.f32 %v2947, %v2952
        %2958 = vrot.lane.b32.xlu0 %v2928, 72
        %v2959 = vpop.permute.xlu0 %2958
        %2960 = vrot.lane.b32.xlu0 %v2929, 72
        %v2961 = vpop.permute.xlu0 %2960
        %2962 = vrot.lane.b32.xlu0 %v2930, 72
        %v2963 = vpop.permute.xlu0 %2962
        %2964 = vrot.lane.b32.xlu0 %v2931, 72
        %v2965 = vpop.permute.xlu0 %2964
        %v2966 = vsel %vm488, %v2963, %v2965
        %v2967 = vsel %vm488, %v2961, %v2963
        %v2968 = vsel %vm488, %v2959, %v2961
        %v2969 = vsel %vm488, %v2965, %v2959
        %v2970 = vmul.f32 %v2969, %v1791
        %v2971 = vmul.f32 %v2968, %v1795
        %v2972 = vmul.f32 %v2967, %v1799
        %v2973 = vmul.f32 %v2966, %v1803
        %2974 = vset.pattern.permute.xlu0 1
        %2975 = vperm.xlu0 %2974, %v2948
        %v2976 = vpop.permute.xlu0 %2975
        %v2978 = vmul.f32 %v2970, %v2976
        %v2979 = vmul.f32 %v2971, %v2976
        %v2980 = vmul.f32 %v2972, %v2976
        %v2981 = vmul.f32 %v2973, %v2976
        %v2982 = vadd.f32 %v2954, %v2978
        %v2983 = vadd.f32 %v2955, %v2979
        %v2984 = vadd.f32 %v2956, %v2980
        %v2985 = vadd.f32 %v2957, %v2981
        %2986 = vrot.lane.b32.xlu0 %v2928, 71
        %v2987 = vpop.permute.xlu0 %2986
        %2988 = vrot.lane.b32.xlu0 %v2929, 71
        %v2989 = vpop.permute.xlu0 %2988
        %2990 = vrot.lane.b32.xlu0 %v2930, 71
        %v2991 = vpop.permute.xlu0 %2990
        %2992 = vrot.lane.b32.xlu0 %v2931, 71
        %v2993 = vpop.permute.xlu0 %2992
        %v2994 = vsel %vm532, %v2991, %v2993
        %v2995 = vsel %vm532, %v2989, %v2991
        %v2996 = vsel %vm532, %v2987, %v2989
        %v2997 = vsel %vm532, %v2993, %v2987
        %v2998 = vmul.f32 %v2997, %v1841
        %v2999 = vmul.f32 %v2996, %v1845
        %v3000 = vmul.f32 %v2995, %v1849
        %v3001 = vmul.f32 %v2994, %v1853
        %3002 = vset.pattern.permute.xlu0 2
        %3003 = vperm.xlu0 %3002, %v2948
        %v3004 = vpop.permute.xlu0 %3003
        %v3006 = vmul.f32 %v2998, %v3004
        %v3007 = vmul.f32 %v2999, %v3004
        %v3008 = vmul.f32 %v3000, %v3004
        %v3009 = vmul.f32 %v3001, %v3004
        %v3010 = vadd.f32 %v2982, %v3006
        %v3011 = vadd.f32 %v2983, %v3007
        %v3012 = vadd.f32 %v2984, %v3008
        %v3013 = vadd.f32 %v2985, %v3009
        %3014 = vrot.lane.b32.xlu0 %v2928, 65
        %v3015 = vpop.permute.xlu0 %3014
        %3016 = vrot.lane.b32.xlu0 %v2929, 65
        %v3017 = vpop.permute.xlu0 %3016
        %3018 = vrot.lane.b32.xlu0 %v2930, 65
        %v3019 = vpop.permute.xlu0 %3018
        %3020 = vrot.lane.b32.xlu0 %v2931, 65
        %v3021 = vpop.permute.xlu0 %3020
        %v3022 = vsel %vm576, %v3019, %v3021
        %v3023 = vsel %vm576, %v3017, %v3019
        %v3024 = vsel %vm576, %v3015, %v3017
        %v3025 = vsel %vm576, %v3021, %v3015
        %v3026 = vmul.f32 %v3025, %v1891
        %v3027 = vmul.f32 %v3024, %v1895
        %v3028 = vmul.f32 %v3023, %v1899
        %v3029 = vmul.f32 %v3022, %v1903
        %3030 = vset.pattern.permute.xlu0 3
        %3031 = vperm.xlu0 %3030, %v2948
        %v3032 = vpop.permute.xlu0 %3031
        %v3034 = vmul.f32 %v3026, %v3032
        %v3035 = vmul.f32 %v3027, %v3032
        %v3036 = vmul.f32 %v3028, %v3032
        %v3037 = vmul.f32 %v3029, %v3032
        %v3038 = vadd.f32 %v3010, %v3034
        %v3039 = vadd.f32 %v3011, %v3035
        %v3040 = vadd.f32 %v3012, %v3036
        %v3041 = vadd.f32 %v3013, %v3037
        %3042 = vrot.lane.b32.xlu0 %v2928, 64
        %v3043 = vpop.permute.xlu0 %3042
        %3044 = vrot.lane.b32.xlu0 %v2929, 64
        %v3045 = vpop.permute.xlu0 %3044
        %3046 = vrot.lane.b32.xlu0 %v2930, 64
        %v3047 = vpop.permute.xlu0 %3046
        %3048 = vrot.lane.b32.xlu0 %v2931, 64
        %v3049 = vpop.permute.xlu0 %3048
        %v3050 = vsel %vm620, %v3047, %v3049
        %v3051 = vsel %vm620, %v3045, %v3047
        %v3052 = vsel %vm620, %v3043, %v3045
        %v3053 = vsel %vm620, %v3049, %v3043
        %v3054 = vmul.f32 %v3053, %v1941
        %v3055 = vmul.f32 %v3052, %v1945
        %v3056 = vmul.f32 %v3051, %v1949
        %v3057 = vmul.f32 %v3050, %v1953
        %3058 = vset.pattern.permute.xlu0 4
        %3059 = vperm.xlu0 %3058, %v2948
        %v3060 = vpop.permute.xlu0 %3059
        %v3062 = vmul.f32 %v3054, %v3060
        %v3063 = vmul.f32 %v3055, %v3060
        %v3064 = vmul.f32 %v3056, %v3060
        %v3065 = vmul.f32 %v3057, %v3060
        %v3066 = vadd.f32 %v3038, %v3062
        %v3067 = vadd.f32 %v3039, %v3063
        %v3068 = vadd.f32 %v3040, %v3064
        %v3069 = vadd.f32 %v3041, %v3065
        %3070 = vrot.lane.b32.xlu0 %v2928, 63
        %v3071 = vpop.permute.xlu0 %3070
        %3072 = vrot.lane.b32.xlu0 %v2929, 63
        %v3073 = vpop.permute.xlu0 %3072
        %3074 = vrot.lane.b32.xlu0 %v2930, 63
        %v3075 = vpop.permute.xlu0 %3074
        %3076 = vrot.lane.b32.xlu0 %v2931, 63
        %v3077 = vpop.permute.xlu0 %3076
        %v3078 = vsel %vm664, %v3075, %v3077
        %v3079 = vsel %vm664, %v3073, %v3075
        %v3080 = vsel %vm664, %v3071, %v3073
        %v3081 = vsel %vm664, %v3077, %v3071
        %v3082 = vmul.f32 %v3081, %v1991
        %v3083 = vmul.f32 %v3080, %v1995
        %v3084 = vmul.f32 %v3079, %v1999
        %v3085 = vmul.f32 %v3078, %v2003
        %3086 = vset.pattern.permute.xlu0 5
        %3087 = vperm.xlu0 %3086, %v2948
        %v3088 = vpop.permute.xlu0 %3087
        %v3090 = vmul.f32 %v3082, %v3088
        %v3091 = vmul.f32 %v3083, %v3088
        %v3092 = vmul.f32 %v3084, %v3088
        %v3093 = vmul.f32 %v3085, %v3088
        %v3094 = vadd.f32 %v3066, %v3090
        %v3095 = vadd.f32 %v3067, %v3091
        %v3096 = vadd.f32 %v3068, %v3092
        %v3097 = vadd.f32 %v3069, %v3093
        %3098 = vrot.lane.b32.xlu0 %v2928, 57
        %v3099 = vpop.permute.xlu0 %3098
        %3100 = vrot.lane.b32.xlu0 %v2929, 57
        %v3101 = vpop.permute.xlu0 %3100
        %3102 = vrot.lane.b32.xlu0 %v2930, 57
        %v3103 = vpop.permute.xlu0 %3102
        %3104 = vrot.lane.b32.xlu0 %v2931, 57
        %v3105 = vpop.permute.xlu0 %3104
        %v3106 = vsel %vm708, %v3103, %v3105
        %v3107 = vsel %vm708, %v3101, %v3103
        %v3108 = vsel %vm708, %v3099, %v3101
        %v3109 = vsel %vm708, %v3105, %v3099
        %v3110 = vmul.f32 %v3109, %v2041
        %v3111 = vmul.f32 %v3108, %v2045
        %v3112 = vmul.f32 %v3107, %v2049
        %v3113 = vmul.f32 %v3106, %v2053
        %3114 = vset.pattern.permute.xlu0 6
        %3115 = vperm.xlu0 %3114, %v2948
        %v3116 = vpop.permute.xlu0 %3115
        %v3118 = vmul.f32 %v3110, %v3116
        %v3119 = vmul.f32 %v3111, %v3116
        %v3120 = vmul.f32 %v3112, %v3116
        %v3121 = vmul.f32 %v3113, %v3116
        %v3122 = vadd.f32 %v3094, %v3118
        %v3123 = vadd.f32 %v3095, %v3119
        %v3124 = vadd.f32 %v3096, %v3120
        %v3125 = vadd.f32 %v3097, %v3121
        %3126 = vrot.lane.b32.xlu0 %v2928, 56
        %v3127 = vpop.permute.xlu0 %3126
        %3128 = vrot.lane.b32.xlu0 %v2929, 56
        %v3129 = vpop.permute.xlu0 %3128
        %3130 = vrot.lane.b32.xlu0 %v2930, 56
        %v3131 = vpop.permute.xlu0 %3130
        %3132 = vrot.lane.b32.xlu0 %v2931, 56
        %v3133 = vpop.permute.xlu0 %3132
        %v3134 = vsel %vm752, %v3131, %v3133
        %v3135 = vsel %vm752, %v3129, %v3131
        %v3136 = vsel %vm752, %v3127, %v3129
        %v3137 = vsel %vm752, %v3133, %v3127
        %v3138 = vmul.f32 %v3137, %v2091
        %v3139 = vmul.f32 %v3136, %v2095
        %v3140 = vmul.f32 %v3135, %v2099
        %v3141 = vmul.f32 %v3134, %v2103
        %3142 = vset.pattern.permute.xlu0 7
        %3143 = vperm.xlu0 %3142, %v2948
        %v3144 = vpop.permute.xlu0 %3143
        %v3146 = vmul.f32 %v3138, %v3144
        %v3147 = vmul.f32 %v3139, %v3144
        %v3148 = vmul.f32 %v3140, %v3144
        %v3149 = vmul.f32 %v3141, %v3144
        %v3150 = vadd.f32 %v3122, %v3146
        %v3151 = vadd.f32 %v3123, %v3147
        %v3152 = vadd.f32 %v3124, %v3148
        %v3153 = vadd.f32 %v3125, %v3149
        %3154 = vrot.lane.b32.xlu0 %v2928, 55
        %v3155 = vpop.permute.xlu0 %3154
        %3156 = vrot.lane.b32.xlu0 %v2929, 55
        %v3157 = vpop.permute.xlu0 %3156
        %3158 = vrot.lane.b32.xlu0 %v2930, 55
        %v3159 = vpop.permute.xlu0 %3158
        %3160 = vrot.lane.b32.xlu0 %v2931, 55
        %v3161 = vpop.permute.xlu0 %3160
        %v3162 = vsel %vm796, %v3159, %v3161
        %v3163 = vsel %vm796, %v3157, %v3159
        %v3164 = vsel %vm796, %v3155, %v3157
        %v3165 = vsel %vm796, %v3161, %v3155
        %v3166 = vmul.f32 %v3165, %v2141
        %v3167 = vmul.f32 %v3164, %v2145
        %v3168 = vmul.f32 %v3163, %v2149
        %v3169 = vmul.f32 %v3162, %v2153
        %3170 = vset.pattern.permute.xlu0 8
        %3171 = vperm.xlu0 %3170, %v2948
        %v3172 = vpop.permute.xlu0 %3171
        %v3174 = vmul.f32 %v3166, %v3172
        %v3175 = vmul.f32 %v3167, %v3172
        %v3176 = vmul.f32 %v3168, %v3172
        %v3177 = vmul.f32 %v3169, %v3172
        %v3178 = vadd.f32 %v3150, %v3174
        %v3179 = vadd.f32 %v3151, %v3175
        %v3180 = vadd.f32 %v3152, %v3176
        %v3181 = vadd.f32 %v3153, %v3177
        %3182 = vrot.lane.b32.xlu0 %v2928, 9
        %v3183 = vpop.permute.xlu0 %3182
        %3184 = vrot.lane.b32.xlu0 %v2929, 9
        %v3185 = vpop.permute.xlu0 %3184
        %3186 = vrot.lane.b32.xlu0 %v2930, 9
        %v3187 = vpop.permute.xlu0 %3186
        %3188 = vrot.lane.b32.xlu0 %v2931, 9
        %v3189 = vpop.permute.xlu0 %3188
        %v3190 = vsel %vm840, %v3187, %v3189
        %v3191 = vsel %vm840, %v3185, %v3187
        %v3192 = vsel %vm840, %v3183, %v3185
        %v3193 = vsel %vm840, %v3189, %v3183
        %v3194 = vmul.f32 %v3193, %v2191
        %v3195 = vmul.f32 %v3192, %v2195
        %v3196 = vmul.f32 %v3191, %v2199
        %v3197 = vmul.f32 %v3190, %v2203
        %3198 = vset.pattern.permute.xlu0 9
        %3199 = vperm.xlu0 %3198, %v2948
        %v3200 = vpop.permute.xlu0 %3199
        %v3202 = vmul.f32 %v3194, %v3200
        %v3203 = vmul.f32 %v3195, %v3200
        %v3204 = vmul.f32 %v3196, %v3200
        %v3205 = vmul.f32 %v3197, %v3200
        %v3206 = vadd.f32 %v3178, %v3202
        %v3207 = vadd.f32 %v3179, %v3203
        %v3208 = vadd.f32 %v3180, %v3204
        %v3209 = vadd.f32 %v3181, %v3205
        %3210 = vrot.lane.b32.xlu0 %v2928, 8
        %v3211 = vpop.permute.xlu0 %3210
        %3212 = vrot.lane.b32.xlu0 %v2929, 8
        %v3213 = vpop.permute.xlu0 %3212
        %3214 = vrot.lane.b32.xlu0 %v2930, 8
        %v3215 = vpop.permute.xlu0 %3214
        %3216 = vrot.lane.b32.xlu0 %v2931, 8
        %v3217 = vpop.permute.xlu0 %3216
        %v3218 = vsel %vm884, %v3215, %v3217
        %v3219 = vsel %vm884, %v3213, %v3215
        %v3220 = vsel %vm884, %v3211, %v3213
        %v3221 = vsel %vm884, %v3217, %v3211
        %v3222 = vmul.f32 %v3221, %v2241
        %v3223 = vmul.f32 %v3220, %v2245
        %v3224 = vmul.f32 %v3219, %v2249
        %v3225 = vmul.f32 %v3218, %v2253
        %3226 = vset.pattern.permute.xlu0 10
        %3227 = vperm.xlu0 %3226, %v2948
        %v3228 = vpop.permute.xlu0 %3227
        %v3230 = vmul.f32 %v3222, %v3228
        %v3231 = vmul.f32 %v3223, %v3228
        %v3232 = vmul.f32 %v3224, %v3228
        %v3233 = vmul.f32 %v3225, %v3228
        %v3234 = vadd.f32 %v3206, %v3230
        %v3235 = vadd.f32 %v3207, %v3231
        %v3236 = vadd.f32 %v3208, %v3232
        %v3237 = vadd.f32 %v3209, %v3233
        %3238 = vrot.lane.b32.xlu0 %v2928, 7
        %v3239 = vpop.permute.xlu0 %3238
        %3240 = vrot.lane.b32.xlu0 %v2929, 7
        %v3241 = vpop.permute.xlu0 %3240
        %3242 = vrot.lane.b32.xlu0 %v2930, 7
        %v3243 = vpop.permute.xlu0 %3242
        %3244 = vrot.lane.b32.xlu0 %v2931, 7
        %v3245 = vpop.permute.xlu0 %3244
        %v3246 = vsel %vm928, %v3243, %v3245
        %v3247 = vsel %vm928, %v3241, %v3243
        %v3248 = vsel %vm928, %v3239, %v3241
        %v3249 = vsel %vm928, %v3245, %v3239
        %v3250 = vmul.f32 %v3249, %v2291
        %v3251 = vmul.f32 %v3248, %v2295
        %v3252 = vmul.f32 %v3247, %v2299
        %v3253 = vmul.f32 %v3246, %v2303
        %3254 = vset.pattern.permute.xlu0 11
        %3255 = vperm.xlu0 %3254, %v2948
        %v3256 = vpop.permute.xlu0 %3255
        %v3258 = vmul.f32 %v3250, %v3256
        %v3259 = vmul.f32 %v3251, %v3256
        %v3260 = vmul.f32 %v3252, %v3256
        %v3261 = vmul.f32 %v3253, %v3256
        %v3262 = vadd.f32 %v3234, %v3258
        %v3263 = vadd.f32 %v3235, %v3259
        %v3264 = vadd.f32 %v3236, %v3260
        %v3265 = vadd.f32 %v3237, %v3261
        %3266 = vrot.lane.b32.xlu0 %v2928, 1
        %v3267 = vpop.permute.xlu0 %3266
        %3268 = vrot.lane.b32.xlu0 %v2929, 1
        %v3269 = vpop.permute.xlu0 %3268
        %3270 = vrot.lane.b32.xlu0 %v2930, 1
        %v3271 = vpop.permute.xlu0 %3270
        %3272 = vrot.lane.b32.xlu0 %v2931, 1
        %v3273 = vpop.permute.xlu0 %3272
        %v3274 = vsel %vm972, %v3271, %v3273
        %v3275 = vsel %vm972, %v3269, %v3271
        %v3276 = vsel %vm972, %v3267, %v3269
        %v3277 = vsel %vm972, %v3273, %v3267
        %v3278 = vmul.f32 %v3277, %v2341
        %v3279 = vmul.f32 %v3276, %v2345
        %v3280 = vmul.f32 %v3275, %v2349
        %v3281 = vmul.f32 %v3274, %v2353
        %3282 = vset.pattern.permute.xlu0 12
        %3283 = vperm.xlu0 %3282, %v2948
        %v3284 = vpop.permute.xlu0 %3283
        %v3286 = vmul.f32 %v3278, %v3284
        %v3287 = vmul.f32 %v3279, %v3284
        %v3288 = vmul.f32 %v3280, %v3284
        %v3289 = vmul.f32 %v3281, %v3284
        %v3290 = vadd.f32 %v3262, %v3286
        %v3291 = vadd.f32 %v3263, %v3287
        %v3292 = vadd.f32 %v3264, %v3288
        %v3293 = vadd.f32 %v3265, %v3289
        %3294 = vset.pattern.permute.xlu0 13
        %3295 = vperm.xlu0 %3294, %v2948
        %v3296 = vpop.permute.xlu0 %3295
        %v3298 = vmul.f32 %v2928, %v3296
        %v3299 = vmul.f32 %v2929, %v3296
        %v3300 = vmul.f32 %v2930, %v3296
        %v3301 = vmul.f32 %v2931, %v3296
        %v3302 = vadd.f32 %v3290, %v3298
        %v3303 = vadd.f32 %v3291, %v3299
        %v3304 = vadd.f32 %v3292, %v3300
        %v3305 = vadd.f32 %v3293, %v3301
        %3306 = vrot.lane.b32.xlu0 %v2928, 127
        %v3307 = vpop.permute.xlu0 %3306
        %3308 = vrot.lane.b32.xlu0 %v2929, 127
        %v3309 = vpop.permute.xlu0 %3308
        %3310 = vrot.lane.b32.xlu0 %v2930, 127
        %v3311 = vpop.permute.xlu0 %3310
        %3312 = vrot.lane.b32.xlu0 %v2931, 127
        %v3313 = vpop.permute.xlu0 %3312
        %v3314 = vsel %vm1020, %v3311, %v3313
        %v3315 = vsel %vm1020, %v3309, %v3311
        %v3316 = vsel %vm1020, %v3307, %v3309
        %v3317 = vsel %vm1020, %v3313, %v3307
        %v3318 = vmul.f32 %v3316, %v2403
        %v3319 = vmul.f32 %v3315, %v2407
        %v3320 = vmul.f32 %v3314, %v2411
        %v3321 = vmul.f32 %v3317, %v2415
        %3322 = vset.pattern.permute.xlu0 14
        %3323 = vperm.xlu0 %3322, %v2948
        %v3324 = vpop.permute.xlu0 %3323
        %v3326 = vmul.f32 %v3318, %v3324
        %v3327 = vmul.f32 %v3319, %v3324
        %v3328 = vmul.f32 %v3320, %v3324
        %v3329 = vmul.f32 %v3321, %v3324
        %v3330 = vadd.f32 %v3302, %v3326
        %v3331 = vadd.f32 %v3303, %v3327
        %v3332 = vadd.f32 %v3304, %v3328
        %v3333 = vadd.f32 %v3305, %v3329
        %3334 = vrot.lane.b32.xlu0 %v2928, 121
        %v3335 = vpop.permute.xlu0 %3334
        %3336 = vrot.lane.b32.xlu0 %v2929, 121
        %v3337 = vpop.permute.xlu0 %3336
        %3338 = vrot.lane.b32.xlu0 %v2930, 121
        %v3339 = vpop.permute.xlu0 %3338
        %3340 = vrot.lane.b32.xlu0 %v2931, 121
        %v3341 = vpop.permute.xlu0 %3340
        %v3342 = vsel %vm1064, %v3339, %v3341
        %v3343 = vsel %vm1064, %v3337, %v3339
        %v3344 = vsel %vm1064, %v3335, %v3337
        %v3345 = vsel %vm1064, %v3341, %v3335
        %v3346 = vmul.f32 %v3344, %v2453
        %v3347 = vmul.f32 %v3343, %v2457
        %v3348 = vmul.f32 %v3342, %v2461
        %v3349 = vmul.f32 %v3345, %v2465
        %3350 = vset.pattern.permute.xlu0 15
        %3351 = vperm.xlu0 %3350, %v2948
        %v3352 = vpop.permute.xlu0 %3351
        %v3354 = vmul.f32 %v3346, %v3352
        %v3355 = vmul.f32 %v3347, %v3352
        %v3356 = vmul.f32 %v3348, %v3352
        %v3357 = vmul.f32 %v3349, %v3352
        %v3358 = vadd.f32 %v3330, %v3354
        %v3359 = vadd.f32 %v3331, %v3355
        %v3360 = vadd.f32 %v3332, %v3356
        %v3361 = vadd.f32 %v3333, %v3357
        %3362 = vrot.lane.b32.xlu0 %v2928, 120
        %v3363 = vpop.permute.xlu0 %3362
        %3364 = vrot.lane.b32.xlu0 %v2929, 120
        %v3365 = vpop.permute.xlu0 %3364
        %3366 = vrot.lane.b32.xlu0 %v2930, 120
        %v3367 = vpop.permute.xlu0 %3366
        %3368 = vrot.lane.b32.xlu0 %v2931, 120
        %v3369 = vpop.permute.xlu0 %3368
        %v3370 = vsel %vm1108, %v3367, %v3369
        %v3371 = vsel %vm1108, %v3365, %v3367
        %v3372 = vsel %vm1108, %v3363, %v3365
        %v3373 = vsel %vm1108, %v3369, %v3363
        %v3374 = vmul.f32 %v3372, %v2503
        %v3375 = vmul.f32 %v3371, %v2507
        %v3376 = vmul.f32 %v3370, %v2511
        %v3377 = vmul.f32 %v3373, %v2515
        %3378 = vset.pattern.permute.xlu0 16
        %3379 = vperm.xlu0 %3378, %v2948
        %v3380 = vpop.permute.xlu0 %3379
        %v3382 = vmul.f32 %v3374, %v3380
        %v3383 = vmul.f32 %v3375, %v3380
        %v3384 = vmul.f32 %v3376, %v3380
        %v3385 = vmul.f32 %v3377, %v3380
        %v3386 = vadd.f32 %v3358, %v3382
        %v3387 = vadd.f32 %v3359, %v3383
        %v3388 = vadd.f32 %v3360, %v3384
        %v3389 = vadd.f32 %v3361, %v3385
        %3390 = vrot.lane.b32.xlu0 %v2928, 119
        %v3391 = vpop.permute.xlu0 %3390
        %3392 = vrot.lane.b32.xlu0 %v2929, 119
        %v3393 = vpop.permute.xlu0 %3392
        %3394 = vrot.lane.b32.xlu0 %v2930, 119
        %v3395 = vpop.permute.xlu0 %3394
        %3396 = vrot.lane.b32.xlu0 %v2931, 119
        %v3397 = vpop.permute.xlu0 %3396
        %v3398 = vsel %vm1152, %v3395, %v3397
        %v3399 = vsel %vm1152, %v3393, %v3395
        %v3400 = vsel %vm1152, %v3391, %v3393
        %v3401 = vsel %vm1152, %v3397, %v3391
        %v3402 = vmul.f32 %v3400, %v2553
        %v3403 = vmul.f32 %v3399, %v2557
        %v3404 = vmul.f32 %v3398, %v2561
        %v3405 = vmul.f32 %v3401, %v2565
        %3406 = vset.pattern.permute.xlu0 17
        %3407 = vperm.xlu0 %3406, %v2948
        %v3408 = vpop.permute.xlu0 %3407
        %v3410 = vmul.f32 %v3402, %v3408
        %v3411 = vmul.f32 %v3403, %v3408
        %v3412 = vmul.f32 %v3404, %v3408
        %v3413 = vmul.f32 %v3405, %v3408
        %v3414 = vadd.f32 %v3386, %v3410
        %v3415 = vadd.f32 %v3387, %v3411
        %v3416 = vadd.f32 %v3388, %v3412
        %v3417 = vadd.f32 %v3389, %v3413
        %v3418 = vmul.f32 %v2942, %v2591
        %v3419 = vmul.f32 %v2941, %v2595
        %v3420 = vmul.f32 %v2940, %v2599
        %v3421 = vmul.f32 %v2943, %v2603
        %3422 = vset.pattern.permute.xlu0 18
        %3423 = vperm.xlu0 %3422, %v2948
        %v3424 = vpop.permute.xlu0 %3423
        %v3426 = vmul.f32 %v3418, %v3424
        %v3427 = vmul.f32 %v3419, %v3424
        %v3428 = vmul.f32 %v3420, %v3424
        %v3429 = vmul.f32 %v3421, %v3424
        %v3430 = vadd.f32 %v3414, %v3426
        %v3431 = vadd.f32 %v3415, %v3427
        %v3432 = vadd.f32 %v3416, %v3428
        %v3433 = vadd.f32 %v3417, %v3429
        %v3434 = vmul.f32 %v2968, %v2629
        %v3435 = vmul.f32 %v2967, %v2633
        %v3436 = vmul.f32 %v2966, %v2637
        %v3437 = vmul.f32 %v2969, %v2641
        %3438 = vset.pattern.permute.xlu0 19
        %3439 = vperm.xlu0 %3438, %v2948
        %v3440 = vpop.permute.xlu0 %3439
        %v3442 = vmul.f32 %v3434, %v3440
        %v3443 = vmul.f32 %v3435, %v3440
        %v3444 = vmul.f32 %v3436, %v3440
        %v3445 = vmul.f32 %v3437, %v3440
        %v3446 = vadd.f32 %v3430, %v3442
        %v3447 = vadd.f32 %v3431, %v3443
        %v3448 = vadd.f32 %v3432, %v3444
        %v3449 = vadd.f32 %v3433, %v3445
        %v3450 = vmul.f32 %v2996, %v2667
        %v3451 = vmul.f32 %v2995, %v2671
        %v3452 = vmul.f32 %v2994, %v2675
        %v3453 = vmul.f32 %v2997, %v2679
        %3454 = vset.pattern.permute.xlu0 20
        %3455 = vperm.xlu0 %3454, %v2948
        %v3456 = vpop.permute.xlu0 %3455
        %v3458 = vmul.f32 %v3450, %v3456
        %v3459 = vmul.f32 %v3451, %v3456
        %v3460 = vmul.f32 %v3452, %v3456
        %v3461 = vmul.f32 %v3453, %v3456
        %v3462 = vadd.f32 %v3446, %v3458
        %v3463 = vadd.f32 %v3447, %v3459
        %v3464 = vadd.f32 %v3448, %v3460
        %v3465 = vadd.f32 %v3449, %v3461
        %v3466 = vmul.f32 %v3024, %v2705
        %v3467 = vmul.f32 %v3023, %v2709
        %v3468 = vmul.f32 %v3022, %v2713
        %v3469 = vmul.f32 %v3025, %v2717
        %3470 = vset.pattern.permute.xlu0 21
        %3471 = vperm.xlu0 %3470, %v2948
        %v3472 = vpop.permute.xlu0 %3471
        %v3474 = vmul.f32 %v3466, %v3472
        %v3475 = vmul.f32 %v3467, %v3472
        %v3476 = vmul.f32 %v3468, %v3472
        %v3477 = vmul.f32 %v3469, %v3472
        %v3478 = vadd.f32 %v3462, %v3474
        %v3479 = vadd.f32 %v3463, %v3475
        %v3480 = vadd.f32 %v3464, %v3476
        %v3481 = vadd.f32 %v3465, %v3477
        %v3482 = vmul.f32 %v3052, %v2743
        %v3483 = vmul.f32 %v3051, %v2747
        %v3484 = vmul.f32 %v3050, %v2751
        %v3485 = vmul.f32 %v3053, %v2755
        %3486 = vset.pattern.permute.xlu0 22
        %3487 = vperm.xlu0 %3486, %v2948
        %v3488 = vpop.permute.xlu0 %3487
        %v3490 = vmul.f32 %v3482, %v3488
        %v3491 = vmul.f32 %v3483, %v3488
        %v3492 = vmul.f32 %v3484, %v3488
        %v3493 = vmul.f32 %v3485, %v3488
        %v3494 = vadd.f32 %v3478, %v3490
        %v3495 = vadd.f32 %v3479, %v3491
        %v3496 = vadd.f32 %v3480, %v3492
        %v3497 = vadd.f32 %v3481, %v3493
        %v3498 = vmul.f32 %v3080, %v2781
        %v3499 = vmul.f32 %v3079, %v2785
        %v3500 = vmul.f32 %v3078, %v2789
        %v3501 = vmul.f32 %v3081, %v2793
        %3502 = vset.pattern.permute.xlu0 23
        %3503 = vperm.xlu0 %3502, %v2948
        %v3504 = vpop.permute.xlu0 %3503
        %v3506 = vmul.f32 %v3498, %v3504
        %v3507 = vmul.f32 %v3499, %v3504
        %v3508 = vmul.f32 %v3500, %v3504
        %v3509 = vmul.f32 %v3501, %v3504
        %v3510 = vadd.f32 %v3494, %v3506
        %v3511 = vadd.f32 %v3495, %v3507
        %v3512 = vadd.f32 %v3496, %v3508
        %v3513 = vadd.f32 %v3497, %v3509
        %v3514 = vmul.f32 %v3108, %v2819
        %v3515 = vmul.f32 %v3107, %v2823
        %v3516 = vmul.f32 %v3106, %v2827
        %v3517 = vmul.f32 %v3109, %v2831
        %3518 = vset.pattern.permute.xlu0 24
        %3519 = vperm.xlu0 %3518, %v2948
        %v3520 = vpop.permute.xlu0 %3519
        %v3522 = vmul.f32 %v3514, %v3520
        %v3523 = vmul.f32 %v3515, %v3520
        %v3524 = vmul.f32 %v3516, %v3520
        %v3525 = vmul.f32 %v3517, %v3520
        %v3526 = vadd.f32 %v3510, %v3522
        %v3527 = vadd.f32 %v3511, %v3523
        %v3528 = vadd.f32 %v3512, %v3524
        %v3529 = vadd.f32 %v3513, %v3525
        %v3530 = vmul.f32 %v3136, %v2857
        %v3531 = vmul.f32 %v3135, %v2861
        %v3532 = vmul.f32 %v3134, %v2865
        %v3533 = vmul.f32 %v3137, %v2869
        %3534 = vset.pattern.permute.xlu0 25
        %3535 = vperm.xlu0 %3534, %v2948
        %v3536 = vpop.permute.xlu0 %3535
        %v3538 = vmul.f32 %v3530, %v3536
        %v3539 = vmul.f32 %v3531, %v3536
        %v3540 = vmul.f32 %v3532, %v3536
        %v3541 = vmul.f32 %v3533, %v3536
        %v3542 = vadd.f32 %v3526, %v3538
        %v3543 = vadd.f32 %v3527, %v3539
        %v3544 = vadd.f32 %v3528, %v3540
        %v3545 = vadd.f32 %v3529, %v3541
        %v3546 = vmul.f32 %v3164, %v2895
        %v3547 = vmul.f32 %v3163, %v2899
        %v3548 = vmul.f32 %v3162, %v2903
        %v3549 = vmul.f32 %v3165, %v2907
        %3550 = vset.pattern.permute.xlu0 26
        %3551 = vperm.xlu0 %3550, %v2948
        %v3552 = vpop.permute.xlu0 %3551
        %v3554 = vmul.f32 %v3546, %v3552
        %v3555 = vmul.f32 %v3547, %v3552
        %v3556 = vmul.f32 %v3548, %v3552
        %v3557 = vmul.f32 %v3549, %v3552
        %v3558 = vadd.f32 %v3542, %v3554
        %v3559 = vadd.f32 %v3543, %v3555
        %v3560 = vadd.f32 %v3544, %v3556
        %v3561 = vadd.f32 %v3545, %v3557
        %v3562 = vmul.f32 %v2924, %v2924
        %v3563 = vmul.f32 %v2925, %v2925
        %v3564 = vmul.f32 %v2926, %v2926
        %v3565 = vmul.f32 %v2927, %v2927
        %v3566 = vmul.f32 %v3558, %v3562
        %v3567 = vmul.f32 %v3559, %v3563
        %v3568 = vmul.f32 %v3560, %v3564
        %v3569 = vmul.f32 %v3561, %v3565
        %v3570 = vld [vmem:[#allocation10] sm:$0x77]
        %v3571 = vld [vmem:[%s8] sm:$0x7]
        %3572 = vrot.lane.b32.xlu0 %v3566, 73
        %v3573 = vpop.permute.xlu0 %3572
        %3574 = vrot.lane.b32.xlu0 %v3567, 73
        %v3575 = vpop.permute.xlu0 %3574
        %3576 = vrot.lane.b32.xlu0 %v3568, 73
        %v3577 = vpop.permute.xlu0 %3576
        %3578 = vrot.lane.b32.xlu0 %v3569, 73
        %v3579 = vpop.permute.xlu0 %3578
        %v3580 = vsel %vm445, %v3577, %v3579
        %v3581 = vsel %vm445, %v3575, %v3577
        %v3582 = vsel %vm445, %v3573, %v3575
        %v3583 = vsel %vm445, %v3579, %v3573
        %v3584 = vmul.f32 %v3583, %v1743
        %v3585 = vmul.f32 %v3582, %v1747
        %v3586 = vmul.f32 %v3581, %v1751
        %v3587 = vmul.f32 %v3580, %v1755
        %3588 = vst [vmem:[#allocation2] sm:$0xff] %v3584
        %3589 = vst [vmem:[#allocation2 + $0x8] sm:$0xff] %v3585
        %3590 = vst [vmem:[#allocation2 + $0x10] sm:$0xff] %v3586
        %3591 = vst [vmem:[#allocation2 + $0x18] sm:$0xff] %v3587
        %3592 = vrot.lane.b32.xlu0 %v3566, 72
        %v3593 = vpop.permute.xlu0 %3592
        %3594 = vrot.lane.b32.xlu0 %v3567, 72
        %v3595 = vpop.permute.xlu0 %3594
        %3596 = vrot.lane.b32.xlu0 %v3568, 72
        %v3597 = vpop.permute.xlu0 %3596
        %3598 = vrot.lane.b32.xlu0 %v3569, 72
        %v3599 = vpop.permute.xlu0 %3598
        %v3600 = vsel %vm488, %v3597, %v3599
        %v3601 = vsel %vm488, %v3595, %v3597
        %v3602 = vsel %vm488, %v3593, %v3595
        %v3603 = vsel %vm488, %v3599, %v3593
        %v3604 = vld [vmem:[%s493] ss:$8 sm:$0xf]
        %v3606 = vlaneseq
        %v3607 = vshrl.u32 %v3606, 7
        %v3608 = vsub.s32 0, %v3607
        %v3609 = vrot.slane %v3604, %v3608
        %v3610 = vlaneseq
        %v3611 = vshrl.u32 %v3610, 7
        %v3612 = vsub.s32 1, %v3611
        %v3613 = vrot.slane %v3604, %v3612
        %v3614 = vlaneseq
        %v3615 = vshrl.u32 %v3614, 7
        %v3616 = vsub.s32 2, %v3615
        %v3617 = vrot.slane %v3604, %v3616
        %v3618 = vlaneseq
        %v3619 = vshrl.u32 %v3618, 7
        %v3620 = vsub.s32 3, %v3619
        %v3621 = vrot.slane %v3604, %v3620
        %v3626 = vmul.f32 %v3603, %v3609
        %v3627 = vmul.f32 %v3602, %v3613
        %v3628 = vmul.f32 %v3601, %v3617
        %v3629 = vmul.f32 %v3600, %v3621
        %3630 = vst [vmem:[#allocation2 + $0x20] sm:$0xff] %v3626
        %3631 = vst [vmem:[#allocation2 + $0x28] sm:$0xff] %v3627
        %3632 = vst [vmem:[#allocation2 + $0x30] sm:$0xff] %v3628
        %3633 = vst [vmem:[#allocation2 + $0x38] sm:$0xff] %v3629
        %3634 = vrot.lane.b32.xlu0 %v3566, 71
        %v3635 = vpop.permute.xlu0 %3634
        %3636 = vrot.lane.b32.xlu0 %v3567, 71
        %v3637 = vpop.permute.xlu0 %3636
        %3638 = vrot.lane.b32.xlu0 %v3568, 71
        %v3639 = vpop.permute.xlu0 %3638
        %3640 = vrot.lane.b32.xlu0 %v3569, 71
        %v3641 = vpop.permute.xlu0 %3640
        %v3642 = vsel %vm532, %v3639, %v3641
        %v3643 = vsel %vm532, %v3637, %v3639
        %v3644 = vsel %vm532, %v3635, %v3637
        %v3645 = vsel %vm532, %v3641, %v3635
        %v3646 = vld [vmem:[%s537] ss:$8 sm:$0xf]
        %v3648 = vlaneseq
        %v3649 = vshrl.u32 %v3648, 7
        %v3650 = vsub.s32 0, %v3649
        %v3651 = vrot.slane %v3646, %v3650
        %v3652 = vlaneseq
        %v3653 = vshrl.u32 %v3652, 7
        %v3654 = vsub.s32 1, %v3653
        %v3655 = vrot.slane %v3646, %v3654
        %v3656 = vlaneseq
        %v3657 = vshrl.u32 %v3656, 7
        %v3658 = vsub.s32 2, %v3657
        %v3659 = vrot.slane %v3646, %v3658
        %v3660 = vlaneseq
        %v3661 = vshrl.u32 %v3660, 7
        %v3662 = vsub.s32 3, %v3661
        %v3663 = vrot.slane %v3646, %v3662
        %v3668 = vmul.f32 %v3645, %v3651
        %v3669 = vmul.f32 %v3644, %v3655
        %v3670 = vmul.f32 %v3643, %v3659
        %v3671 = vmul.f32 %v3642, %v3663
        %3672 = vst [vmem:[#allocation2 + $0x40] sm:$0xff] %v3668
        %3673 = vst [vmem:[#allocation2 + $0x48] sm:$0xff] %v3669
        %3674 = vst [vmem:[#allocation2 + $0x50] sm:$0xff] %v3670
        %3675 = vst [vmem:[#allocation2 + $0x58] sm:$0xff] %v3671
        %3676 = vrot.lane.b32.xlu0 %v3566, 65
        %v3677 = vpop.permute.xlu0 %3676
        %3678 = vrot.lane.b32.xlu0 %v3567, 65
        %v3679 = vpop.permute.xlu0 %3678
        %3680 = vrot.lane.b32.xlu0 %v3568, 65
        %v3681 = vpop.permute.xlu0 %3680
        %3682 = vrot.lane.b32.xlu0 %v3569, 65
        %v3683 = vpop.permute.xlu0 %3682
        %v3684 = vsel %vm576, %v3681, %v3683
        %v3685 = vsel %vm576, %v3679, %v3681
        %v3686 = vsel %vm576, %v3677, %v3679
        %v3687 = vsel %vm576, %v3683, %v3677
        %v3688 = vld [vmem:[%s581] ss:$8 sm:$0xf]
        %v3690 = vlaneseq
        %v3691 = vshrl.u32 %v3690, 7
        %v3692 = vsub.s32 0, %v3691
        %v3693 = vrot.slane %v3688, %v3692
        %v3694 = vlaneseq
        %v3695 = vshrl.u32 %v3694, 7
        %v3696 = vsub.s32 1, %v3695
        %v3697 = vrot.slane %v3688, %v3696
        %v3698 = vlaneseq
        %v3699 = vshrl.u32 %v3698, 7
        %v3700 = vsub.s32 2, %v3699
        %v3701 = vrot.slane %v3688, %v3700
        %v3702 = vlaneseq
        %v3703 = vshrl.u32 %v3702, 7
        %v3704 = vsub.s32 3, %v3703
        %v3705 = vrot.slane %v3688, %v3704
        %v3710 = vmul.f32 %v3687, %v3693
        %v3711 = vmul.f32 %v3686, %v3697
        %v3712 = vmul.f32 %v3685, %v3701
        %v3713 = vmul.f32 %v3684, %v3705
        %3714 = vst [vmem:[#allocation2 + $0x60] sm:$0xff] %v3710
        %3715 = vst [vmem:[#allocation2 + $0x68] sm:$0xff] %v3711
        %3716 = vst [vmem:[#allocation2 + $0x70] sm:$0xff] %v3712
        %3717 = vst [vmem:[#allocation2 + $0x78] sm:$0xff] %v3713
        %3718 = vrot.lane.b32.xlu0 %v3566, 64
        %v3719 = vpop.permute.xlu0 %3718
        %3720 = vrot.lane.b32.xlu0 %v3567, 64
        %v3721 = vpop.permute.xlu0 %3720
        %3722 = vrot.lane.b32.xlu0 %v3568, 64
        %v3723 = vpop.permute.xlu0 %3722
        %3724 = vrot.lane.b32.xlu0 %v3569, 64
        %v3725 = vpop.permute.xlu0 %3724
        %v3726 = vsel %vm620, %v3723, %v3725
        %v3727 = vsel %vm620, %v3721, %v3723
        %v3728 = vsel %vm620, %v3719, %v3721
        %v3729 = vsel %vm620, %v3725, %v3719
        %v3730 = vld [vmem:[%s625] ss:$8 sm:$0xf]
        %v3732 = vlaneseq
        %v3733 = vshrl.u32 %v3732, 7
        %v3734 = vsub.s32 0, %v3733
        %v3735 = vrot.slane %v3730, %v3734
        %v3736 = vlaneseq
        %v3737 = vshrl.u32 %v3736, 7
        %v3738 = vsub.s32 1, %v3737
        %v3739 = vrot.slane %v3730, %v3738
        %v3740 = vlaneseq
        %v3741 = vshrl.u32 %v3740, 7
        %v3742 = vsub.s32 2, %v3741
        %v3743 = vrot.slane %v3730, %v3742
        %v3744 = vlaneseq
        %v3745 = vshrl.u32 %v3744, 7
        %v3746 = vsub.s32 3, %v3745
        %v3747 = vrot.slane %v3730, %v3746
        %v3752 = vmul.f32 %v3729, %v3735
        %v3753 = vmul.f32 %v3728, %v3739
        %v3754 = vmul.f32 %v3727, %v3743
        %v3755 = vmul.f32 %v3726, %v3747
        %3756 = vst [vmem:[#allocation2 + $0x80] sm:$0xff] %v3752
        %3757 = vst [vmem:[#allocation2 + $0x88] sm:$0xff] %v3753
        %3758 = vst [vmem:[#allocation2 + $0x90] sm:$0xff] %v3754
        %3759 = vst [vmem:[#allocation2 + $0x98] sm:$0xff] %v3755
        %3760 = vrot.lane.b32.xlu0 %v3566, 63
        %v3761 = vpop.permute.xlu0 %3760
        %3762 = vrot.lane.b32.xlu0 %v3567, 63
        %v3763 = vpop.permute.xlu0 %3762
        %3764 = vrot.lane.b32.xlu0 %v3568, 63
        %v3765 = vpop.permute.xlu0 %3764
        %3766 = vrot.lane.b32.xlu0 %v3569, 63
        %v3767 = vpop.permute.xlu0 %3766
        %v3768 = vsel %vm664, %v3765, %v3767
        %v3769 = vsel %vm664, %v3763, %v3765
        %v3770 = vsel %vm664, %v3761, %v3763
        %v3771 = vsel %vm664, %v3767, %v3761
        %v3772 = vld [vmem:[%s669] ss:$8 sm:$0xf]
        %v3774 = vlaneseq
        %v3775 = vshrl.u32 %v3774, 7
        %v3776 = vsub.s32 0, %v3775
        %v3777 = vrot.slane %v3772, %v3776
        %v3778 = vlaneseq
        %v3779 = vshrl.u32 %v3778, 7
        %v3780 = vsub.s32 1, %v3779
        %v3781 = vrot.slane %v3772, %v3780
        %v3782 = vlaneseq
        %v3783 = vshrl.u32 %v3782, 7
        %v3784 = vsub.s32 2, %v3783
        %v3785 = vrot.slane %v3772, %v3784
        %v3786 = vlaneseq
        %v3787 = vshrl.u32 %v3786, 7
        %v3788 = vsub.s32 3, %v3787
        %v3789 = vrot.slane %v3772, %v3788
        %v3794 = vmul.f32 %v3771, %v3777
        %v3795 = vmul.f32 %v3770, %v3781
        %v3796 = vmul.f32 %v3769, %v3785
        %v3797 = vmul.f32 %v3768, %v3789
        %3798 = vst [vmem:[#allocation2 + $0xa0] sm:$0xff] %v3794
        %3799 = vst [vmem:[#allocation2 + $0xa8] sm:$0xff] %v3795
        %3800 = vst [vmem:[#allocation2 + $0xb0] sm:$0xff] %v3796
        %3801 = vst [vmem:[#allocation2 + $0xb8] sm:$0xff] %v3797
        %3802 = vrot.lane.b32.xlu0 %v3566, 57
        %v3803 = vpop.permute.xlu0 %3802
        %3804 = vrot.lane.b32.xlu0 %v3567, 57
        %v3805 = vpop.permute.xlu0 %3804
        %3806 = vrot.lane.b32.xlu0 %v3568, 57
        %v3807 = vpop.permute.xlu0 %3806
        %3808 = vrot.lane.b32.xlu0 %v3569, 57
        %v3809 = vpop.permute.xlu0 %3808
        %v3810 = vsel %vm708, %v3807, %v3809
        %v3811 = vsel %vm708, %v3805, %v3807
        %v3812 = vsel %vm708, %v3803, %v3805
        %v3813 = vsel %vm708, %v3809, %v3803
        %v3814 = vld [vmem:[%s713] ss:$8 sm:$0xf]
        %v3816 = vlaneseq
        %v3817 = vshrl.u32 %v3816, 7
        %v3818 = vsub.s32 0, %v3817
        %v3819 = vrot.slane %v3814, %v3818
        %v3820 = vlaneseq
        %v3821 = vshrl.u32 %v3820, 7
        %v3822 = vsub.s32 1, %v3821
        %v3823 = vrot.slane %v3814, %v3822
        %v3824 = vlaneseq
        %v3825 = vshrl.u32 %v3824, 7
        %v3826 = vsub.s32 2, %v3825
        %v3827 = vrot.slane %v3814, %v3826
        %v3828 = vlaneseq
        %v3829 = vshrl.u32 %v3828, 7
        %v3830 = vsub.s32 3, %v3829
        %v3831 = vrot.slane %v3814, %v3830
        %v3836 = vmul.f32 %v3813, %v3819
        %v3837 = vmul.f32 %v3812, %v3823
        %v3838 = vmul.f32 %v3811, %v3827
        %v3839 = vmul.f32 %v3810, %v3831
        %3840 = vst [vmem:[#allocation2 + $0xc0] sm:$0xff] %v3836
        %3841 = vst [vmem:[#allocation2 + $0xc8] sm:$0xff] %v3837
        %3842 = vst [vmem:[#allocation2 + $0xd0] sm:$0xff] %v3838
        %3843 = vst [vmem:[#allocation2 + $0xd8] sm:$0xff] %v3839
        %3844 = vrot.lane.b32.xlu0 %v3566, 56
        %v3845 = vpop.permute.xlu0 %3844
        %3846 = vrot.lane.b32.xlu0 %v3567, 56
        %v3847 = vpop.permute.xlu0 %3846
        %3848 = vrot.lane.b32.xlu0 %v3568, 56
        %v3849 = vpop.permute.xlu0 %3848
        %3850 = vrot.lane.b32.xlu0 %v3569, 56
        %v3851 = vpop.permute.xlu0 %3850
        %v3852 = vsel %vm752, %v3849, %v3851
        %v3853 = vsel %vm752, %v3847, %v3849
        %v3854 = vsel %vm752, %v3845, %v3847
        %v3855 = vsel %vm752, %v3851, %v3845
        %v3856 = vld [vmem:[%s757] ss:$8 sm:$0xf]
        %v3858 = vlaneseq
        %v3859 = vshrl.u32 %v3858, 7
        %v3860 = vsub.s32 0, %v3859
        %v3861 = vrot.slane %v3856, %v3860
        %v3862 = vlaneseq
        %v3863 = vshrl.u32 %v3862, 7
        %v3864 = vsub.s32 1, %v3863
        %v3865 = vrot.slane %v3856, %v3864
        %v3866 = vlaneseq
        %v3867 = vshrl.u32 %v3866, 7
        %v3868 = vsub.s32 2, %v3867
        %v3869 = vrot.slane %v3856, %v3868
        %v3870 = vlaneseq
        %v3871 = vshrl.u32 %v3870, 7
        %v3872 = vsub.s32 3, %v3871
        %v3873 = vrot.slane %v3856, %v3872
        %v3878 = vmul.f32 %v3855, %v3861
        %v3879 = vmul.f32 %v3854, %v3865
        %v3880 = vmul.f32 %v3853, %v3869
        %v3881 = vmul.f32 %v3852, %v3873
        %3882 = vst [vmem:[#allocation2 + $0xe0] sm:$0xff] %v3878
        %3883 = vst [vmem:[#allocation2 + $0xe8] sm:$0xff] %v3879
        %3884 = vst [vmem:[#allocation2 + $0xf0] sm:$0xff] %v3880
        %3885 = vst [vmem:[#allocation2 + $0xf8] sm:$0xff] %v3881
        %3886 = vrot.lane.b32.xlu0 %v3566, 55
        %v3887 = vpop.permute.xlu0 %3886
        %3888 = vrot.lane.b32.xlu0 %v3567, 55
        %v3889 = vpop.permute.xlu0 %3888
        %3890 = vrot.lane.b32.xlu0 %v3568, 55
        %v3891 = vpop.permute.xlu0 %3890
        %3892 = vrot.lane.b32.xlu0 %v3569, 55
        %v3893 = vpop.permute.xlu0 %3892
        %v3894 = vsel %vm796, %v3891, %v3893
        %v3895 = vsel %vm796, %v3889, %v3891
        %v3896 = vsel %vm796, %v3887, %v3889
        %v3897 = vsel %vm796, %v3893, %v3887
        %v3898 = vld [vmem:[%s801] ss:$8 sm:$0xf]
        %v3900 = vlaneseq
        %v3901 = vshrl.u32 %v3900, 7
        %v3902 = vsub.s32 0, %v3901
        %v3903 = vrot.slane %v3898, %v3902
        %v3904 = vlaneseq
        %v3905 = vshrl.u32 %v3904, 7
        %v3906 = vsub.s32 1, %v3905
        %v3907 = vrot.slane %v3898, %v3906
        %v3908 = vlaneseq
        %v3909 = vshrl.u32 %v3908, 7
        %v3910 = vsub.s32 2, %v3909
        %v3911 = vrot.slane %v3898, %v3910
        %v3912 = vlaneseq
        %v3913 = vshrl.u32 %v3912, 7
        %v3914 = vsub.s32 3, %v3913
        %v3915 = vrot.slane %v3898, %v3914
        %v3920 = vmul.f32 %v3897, %v3903
        %v3921 = vmul.f32 %v3896, %v3907
        %v3922 = vmul.f32 %v3895, %v3911
        %v3923 = vmul.f32 %v3894, %v3915
        %3924 = vst [vmem:[#allocation2 + $0x100] sm:$0xff] %v3920
        %3925 = vst [vmem:[#allocation2 + $0x108] sm:$0xff] %v3921
        %3926 = vst [vmem:[#allocation2 + $0x110] sm:$0xff] %v3922
        %3927 = vst [vmem:[#allocation2 + $0x118] sm:$0xff] %v3923
        %3928 = vrot.lane.b32.xlu0 %v3566, 9
        %v3929 = vpop.permute.xlu0 %3928
        %3930 = vrot.lane.b32.xlu0 %v3567, 9
        %v3931 = vpop.permute.xlu0 %3930
        %3932 = vrot.lane.b32.xlu0 %v3568, 9
        %v3933 = vpop.permute.xlu0 %3932
        %3934 = vrot.lane.b32.xlu0 %v3569, 9
        %v3935 = vpop.permute.xlu0 %3934
        %v3936 = vsel %vm840, %v3933, %v3935
        %v3937 = vsel %vm840, %v3931, %v3933
        %v3938 = vsel %vm840, %v3929, %v3931
        %v3939 = vsel %vm840, %v3935, %v3929
        %v3940 = vld [vmem:[%s845] ss:$8 sm:$0xf]
        %v3942 = vlaneseq
        %v3943 = vshrl.u32 %v3942, 7
        %v3944 = vsub.s32 0, %v3943
        %v3945 = vrot.slane %v3940, %v3944
        %v3946 = vlaneseq
        %v3947 = vshrl.u32 %v3946, 7
        %v3948 = vsub.s32 1, %v3947
        %v3949 = vrot.slane %v3940, %v3948
        %v3950 = vlaneseq
        %v3951 = vshrl.u32 %v3950, 7
        %v3952 = vsub.s32 2, %v3951
        %v3953 = vrot.slane %v3940, %v3952
        %v3954 = vlaneseq
        %v3955 = vshrl.u32 %v3954, 7
        %v3956 = vsub.s32 3, %v3955
        %v3957 = vrot.slane %v3940, %v3956
        %v3962 = vmul.f32 %v3939, %v3945
        %v3963 = vmul.f32 %v3938, %v3949
        %v3964 = vmul.f32 %v3937, %v3953
        %v3965 = vmul.f32 %v3936, %v3957
        %3966 = vst [vmem:[#allocation2 + $0x120] sm:$0xff] %v3962
        %3967 = vst [vmem:[#allocation2 + $0x128] sm:$0xff] %v3963
        %3968 = vst [vmem:[#allocation2 + $0x130] sm:$0xff] %v3964
        %3969 = vst [vmem:[#allocation2 + $0x138] sm:$0xff] %v3965
        %3970 = vrot.lane.b32.xlu0 %v3566, 8
        %v3971 = vpop.permute.xlu0 %3970
        %3972 = vrot.lane.b32.xlu0 %v3567, 8
        %v3973 = vpop.permute.xlu0 %3972
        %3974 = vrot.lane.b32.xlu0 %v3568, 8
        %v3975 = vpop.permute.xlu0 %3974
        %3976 = vrot.lane.b32.xlu0 %v3569, 8
        %v3977 = vpop.permute.xlu0 %3976
        %v3978 = vsel %vm884, %v3975, %v3977
        %v3979 = vsel %vm884, %v3973, %v3975
        %v3980 = vsel %vm884, %v3971, %v3973
        %v3981 = vsel %vm884, %v3977, %v3971
        %v3982 = vld [vmem:[%s889] ss:$8 sm:$0xf]
        %v3984 = vlaneseq
        %v3985 = vshrl.u32 %v3984, 7
        %v3986 = vsub.s32 0, %v3985
        %v3987 = vrot.slane %v3982, %v3986
        %v3988 = vlaneseq
        %v3989 = vshrl.u32 %v3988, 7
        %v3990 = vsub.s32 1, %v3989
        %v3991 = vrot.slane %v3982, %v3990
        %v3992 = vlaneseq
        %v3993 = vshrl.u32 %v3992, 7
        %v3994 = vsub.s32 2, %v3993
        %v3995 = vrot.slane %v3982, %v3994
        %v3996 = vlaneseq
        %v3997 = vshrl.u32 %v3996, 7
        %v3998 = vsub.s32 3, %v3997
        %v3999 = vrot.slane %v3982, %v3998
        %v4004 = vmul.f32 %v3981, %v3987
        %v4005 = vmul.f32 %v3980, %v3991
        %v4006 = vmul.f32 %v3979, %v3995
        %v4007 = vmul.f32 %v3978, %v3999
        %4008 = vst [vmem:[#allocation2 + $0x140] sm:$0xff] %v4004
        %4009 = vst [vmem:[#allocation2 + $0x148] sm:$0xff] %v4005
        %4010 = vst [vmem:[#allocation2 + $0x150] sm:$0xff] %v4006
        %4011 = vst [vmem:[#allocation2 + $0x158] sm:$0xff] %v4007
        %4012 = vrot.lane.b32.xlu0 %v3566, 7
        %v4013 = vpop.permute.xlu0 %4012
        %4014 = vrot.lane.b32.xlu0 %v3567, 7
        %v4015 = vpop.permute.xlu0 %4014
        %4016 = vrot.lane.b32.xlu0 %v3568, 7
        %v4017 = vpop.permute.xlu0 %4016
        %4018 = vrot.lane.b32.xlu0 %v3569, 7
        %v4019 = vpop.permute.xlu0 %4018
        %v4020 = vsel %vm928, %v4017, %v4019
        %v4021 = vsel %vm928, %v4015, %v4017
        %v4022 = vsel %vm928, %v4013, %v4015
        %v4023 = vsel %vm928, %v4019, %v4013
        %v4024 = vld [vmem:[%s933] ss:$8 sm:$0xf]
        %v4026 = vlaneseq
        %v4027 = vshrl.u32 %v4026, 7
        %v4028 = vsub.s32 0, %v4027
        %v4029 = vrot.slane %v4024, %v4028
        %v4030 = vlaneseq
        %v4031 = vshrl.u32 %v4030, 7
        %v4032 = vsub.s32 1, %v4031
        %v4033 = vrot.slane %v4024, %v4032
        %v4034 = vlaneseq
        %v4035 = vshrl.u32 %v4034, 7
        %v4036 = vsub.s32 2, %v4035
        %v4037 = vrot.slane %v4024, %v4036
        %v4038 = vlaneseq
        %v4039 = vshrl.u32 %v4038, 7
        %v4040 = vsub.s32 3, %v4039
        %v4041 = vrot.slane %v4024, %v4040
        %v4046 = vmul.f32 %v4023, %v4029
        %v4047 = vmul.f32 %v4022, %v4033
        %v4048 = vmul.f32 %v4021, %v4037
        %v4049 = vmul.f32 %v4020, %v4041
        %4050 = vst [vmem:[#allocation2 + $0x160] sm:$0xff] %v4046
        %4051 = vst [vmem:[#allocation2 + $0x168] sm:$0xff] %v4047
        %4052 = vst [vmem:[#allocation2 + $0x170] sm:$0xff] %v4048
        %4053 = vst [vmem:[#allocation2 + $0x178] sm:$0xff] %v4049
        %4054 = vrot.lane.b32.xlu0 %v3566, 1
        %v4055 = vpop.permute.xlu0 %4054
        %4056 = vrot.lane.b32.xlu0 %v3567, 1
        %v4057 = vpop.permute.xlu0 %4056
        %4058 = vrot.lane.b32.xlu0 %v3568, 1
        %v4059 = vpop.permute.xlu0 %4058
        %4060 = vrot.lane.b32.xlu0 %v3569, 1
        %v4061 = vpop.permute.xlu0 %4060
        %v4062 = vsel %vm972, %v4059, %v4061
        %v4063 = vsel %vm972, %v4057, %v4059
        %v4064 = vsel %vm972, %v4055, %v4057
        %v4065 = vsel %vm972, %v4061, %v4055
        %v4066 = vld [vmem:[%s977] ss:$8 sm:$0xf]
        %v4068 = vlaneseq
        %v4069 = vshrl.u32 %v4068, 7
        %v4070 = vsub.s32 0, %v4069
        %v4071 = vrot.slane %v4066, %v4070
        %v4072 = vlaneseq
        %v4073 = vshrl.u32 %v4072, 7
        %v4074 = vsub.s32 1, %v4073
        %v4075 = vrot.slane %v4066, %v4074
        %v4076 = vlaneseq
        %v4077 = vshrl.u32 %v4076, 7
        %v4078 = vsub.s32 2, %v4077
        %v4079 = vrot.slane %v4066, %v4078
        %v4080 = vlaneseq
        %v4081 = vshrl.u32 %v4080, 7
        %v4082 = vsub.s32 3, %v4081
        %v4083 = vrot.slane %v4066, %v4082
        %v4088 = vmul.f32 %v4065, %v4071
        %v4089 = vmul.f32 %v4064, %v4075
        %v4090 = vmul.f32 %v4063, %v4079
        %v4091 = vmul.f32 %v4062, %v4083
        %4092 = vst [vmem:[#allocation2 + $0x180] sm:$0xff] %v4088
        %4093 = vst [vmem:[#allocation2 + $0x188] sm:$0xff] %v4089
        %4094 = vst [vmem:[#allocation2 + $0x190] sm:$0xff] %v4090
        %4095 = vst [vmem:[#allocation2 + $0x198] sm:$0xff] %v4091
        %4096 = vst [vmem:[#allocation2 + $0x1a0] sm:$0xff] %v3566
        %4097 = vst [vmem:[#allocation2 + $0x1a8] sm:$0xff] %v3567
        %4098 = vst [vmem:[#allocation2 + $0x1b0] sm:$0xff] %v3568
        %4099 = vst [vmem:[#allocation2 + $0x1b8] sm:$0xff] %v3569
        %4100 = vrot.lane.b32.xlu0 %v3566, 127
        %v4101 = vpop.permute.xlu0 %4100
        %4102 = vrot.lane.b32.xlu0 %v3567, 127
        %v4103 = vpop.permute.xlu0 %4102
        %4104 = vrot.lane.b32.xlu0 %v3568, 127
        %v4105 = vpop.permute.xlu0 %4104
        %4106 = vrot.lane.b32.xlu0 %v3569, 127
        %v4107 = vpop.permute.xlu0 %4106
        %v4108 = vsel %vm1020, %v4105, %v4107
        %v4109 = vsel %vm1020, %v4103, %v4105
        %v4110 = vsel %vm1020, %v4101, %v4103
        %v4111 = vsel %vm1020, %v4107, %v4101
        %v4112 = vld [vmem:[%s1025] ss:$8 sm:$0xf]
        %v4114 = vlaneseq
        %v4115 = vshrl.u32 %v4114, 7
        %v4116 = vsub.s32 0, %v4115
        %v4117 = vrot.slane %v4112, %v4116
        %v4118 = vlaneseq
        %v4119 = vshrl.u32 %v4118, 7
        %v4120 = vsub.s32 1, %v4119
        %v4121 = vrot.slane %v4112, %v4120
        %v4122 = vlaneseq
        %v4123 = vshrl.u32 %v4122, 7
        %v4124 = vsub.s32 2, %v4123
        %v4125 = vrot.slane %v4112, %v4124
        %v4126 = vlaneseq
        %v4127 = vshrl.u32 %v4126, 7
        %v4128 = vsub.s32 3, %v4127
        %v4129 = vrot.slane %v4112, %v4128
        %v4134 = vmul.f32 %v4110, %v4117
        %v4135 = vmul.f32 %v4109, %v4121
        %v4136 = vmul.f32 %v4108, %v4125
        %v4137 = vmul.f32 %v4111, %v4129
        %4138 = vst [vmem:[#allocation2 + $0x1c0] sm:$0xff] %v4134
        %4139 = vst [vmem:[#allocation2 + $0x1c8] sm:$0xff] %v4135
        %4140 = vst [vmem:[#allocation2 + $0x1d0] sm:$0xff] %v4136
        %4141 = vst [vmem:[#allocation2 + $0x1d8] sm:$0xff] %v4137
        %4142 = vrot.lane.b32.xlu0 %v3566, 121
        %v4143 = vpop.permute.xlu0 %4142
        %4144 = vrot.lane.b32.xlu0 %v3567, 121
        %v4145 = vpop.permute.xlu0 %4144
        %4146 = vrot.lane.b32.xlu0 %v3568, 121
        %v4147 = vpop.permute.xlu0 %4146
        %4148 = vrot.lane.b32.xlu0 %v3569, 121
        %v4149 = vpop.permute.xlu0 %4148
        %v4150 = vsel %vm1064, %v4147, %v4149
        %v4151 = vsel %vm1064, %v4145, %v4147
        %v4152 = vsel %vm1064, %v4143, %v4145
        %v4153 = vsel %vm1064, %v4149, %v4143
        %v4154 = vld [vmem:[%s1069] ss:$8 sm:$0xf]
        %v4156 = vlaneseq
        %v4157 = vshrl.u32 %v4156, 7
        %v4158 = vsub.s32 0, %v4157
        %v4159 = vrot.slane %v4154, %v4158
        %v4160 = vlaneseq
        %v4161 = vshrl.u32 %v4160, 7
        %v4162 = vsub.s32 1, %v4161
        %v4163 = vrot.slane %v4154, %v4162
        %v4164 = vlaneseq
        %v4165 = vshrl.u32 %v4164, 7
        %v4166 = vsub.s32 2, %v4165
        %v4167 = vrot.slane %v4154, %v4166
        %v4168 = vlaneseq
        %v4169 = vshrl.u32 %v4168, 7
        %v4170 = vsub.s32 3, %v4169
        %v4171 = vrot.slane %v4154, %v4170
        %v4176 = vmul.f32 %v4152, %v4159
        %v4177 = vmul.f32 %v4151, %v4163
        %v4178 = vmul.f32 %v4150, %v4167
        %v4179 = vmul.f32 %v4153, %v4171
        %4180 = vst [vmem:[#allocation2 + $0x1e0] sm:$0xff] %v4176
        %4181 = vst [vmem:[#allocation2 + $0x1e8] sm:$0xff] %v4177
        %4182 = vst [vmem:[#allocation2 + $0x1f0] sm:$0xff] %v4178
        %4183 = vst [vmem:[#allocation2 + $0x1f8] sm:$0xff] %v4179
        %4184 = vrot.lane.b32.xlu0 %v3566, 120
        %v4185 = vpop.permute.xlu0 %4184
        %4186 = vrot.lane.b32.xlu0 %v3567, 120
        %v4187 = vpop.permute.xlu0 %4186
        %4188 = vrot.lane.b32.xlu0 %v3568, 120
        %v4189 = vpop.permute.xlu0 %4188
        %4190 = vrot.lane.b32.xlu0 %v3569, 120
        %v4191 = vpop.permute.xlu0 %4190
        %v4192 = vsel %vm1108, %v4189, %v4191
        %v4193 = vsel %vm1108, %v4187, %v4189
        %v4194 = vsel %vm1108, %v4185, %v4187
        %v4195 = vsel %vm1108, %v4191, %v4185
        %v4196 = vld [vmem:[%s1113] ss:$8 sm:$0xf]
        %v4198 = vlaneseq
        %v4199 = vshrl.u32 %v4198, 7
        %v4200 = vsub.s32 0, %v4199
        %v4201 = vrot.slane %v4196, %v4200
        %v4202 = vlaneseq
        %v4203 = vshrl.u32 %v4202, 7
        %v4204 = vsub.s32 1, %v4203
        %v4205 = vrot.slane %v4196, %v4204
        %v4206 = vlaneseq
        %v4207 = vshrl.u32 %v4206, 7
        %v4208 = vsub.s32 2, %v4207
        %v4209 = vrot.slane %v4196, %v4208
        %v4210 = vlaneseq
        %v4211 = vshrl.u32 %v4210, 7
        %v4212 = vsub.s32 3, %v4211
        %v4213 = vrot.slane %v4196, %v4212
        %v4218 = vmul.f32 %v4194, %v4201
        %v4219 = vmul.f32 %v4193, %v4205
        %v4220 = vmul.f32 %v4192, %v4209
        %v4221 = vmul.f32 %v4195, %v4213
        %4222 = vst [vmem:[#allocation2 + $0x200] sm:$0xff] %v4218
        %4223 = vst [vmem:[#allocation2 + $0x208] sm:$0xff] %v4219
        %4224 = vst [vmem:[#allocation2 + $0x210] sm:$0xff] %v4220
        %4225 = vst [vmem:[#allocation2 + $0x218] sm:$0xff] %v4221
        %4226 = vrot.lane.b32.xlu0 %v3566, 119
        %v4227 = vpop.permute.xlu0 %4226
        %4228 = vrot.lane.b32.xlu0 %v3567, 119
        %v4229 = vpop.permute.xlu0 %4228
        %4230 = vrot.lane.b32.xlu0 %v3568, 119
        %v4231 = vpop.permute.xlu0 %4230
        %4232 = vrot.lane.b32.xlu0 %v3569, 119
        %v4233 = vpop.permute.xlu0 %4232
        %v4234 = vsel %vm1152, %v4231, %v4233
        %v4235 = vsel %vm1152, %v4229, %v4231
        %v4236 = vsel %vm1152, %v4227, %v4229
        %v4237 = vsel %vm1152, %v4233, %v4227
        %v4238 = vld [vmem:[%s1157] ss:$8 sm:$0xf]
        %v4240 = vlaneseq
        %v4241 = vshrl.u32 %v4240, 7
        %v4242 = vsub.s32 0, %v4241
        %v4243 = vrot.slane %v4238, %v4242
        %v4244 = vlaneseq
        %v4245 = vshrl.u32 %v4244, 7
        %v4246 = vsub.s32 1, %v4245
        %v4247 = vrot.slane %v4238, %v4246
        %v4248 = vlaneseq
        %v4249 = vshrl.u32 %v4248, 7
        %v4250 = vsub.s32 2, %v4249
        %v4251 = vrot.slane %v4238, %v4250
        %v4252 = vlaneseq
        %v4253 = vshrl.u32 %v4252, 7
        %v4254 = vsub.s32 3, %v4253
        %v4255 = vrot.slane %v4238, %v4254
        %v4260 = vmul.f32 %v4236, %v4243
        %v4261 = vmul.f32 %v4235, %v4247
        %v4262 = vmul.f32 %v4234, %v4251
        %v4263 = vmul.f32 %v4237, %v4255
        %4264 = vst [vmem:[#allocation2 + $0x220] sm:$0xff] %v4260
        %4265 = vst [vmem:[#allocation2 + $0x228] sm:$0xff] %v4261
        %4266 = vst [vmem:[#allocation2 + $0x230] sm:$0xff] %v4262
        %4267 = vst [vmem:[#allocation2 + $0x238] sm:$0xff] %v4263
        %v4268 = vld [vmem:[%s1188] ss:$8 sm:$0xf]
        %v4270 = vlaneseq
        %v4271 = vshrl.u32 %v4270, 7
        %v4272 = vsub.s32 0, %v4271
        %v4273 = vrot.slane %v4268, %v4272
        %v4274 = vlaneseq
        %v4275 = vshrl.u32 %v4274, 7
        %v4276 = vsub.s32 1, %v4275
        %v4277 = vrot.slane %v4268, %v4276
        %v4278 = vlaneseq
        %v4279 = vshrl.u32 %v4278, 7
        %v4280 = vsub.s32 2, %v4279
        %v4281 = vrot.slane %v4268, %v4280
        %v4282 = vlaneseq
        %v4283 = vshrl.u32 %v4282, 7
        %v4284 = vsub.s32 3, %v4283
        %v4285 = vrot.slane %v4268, %v4284
        %v4290 = vmul.f32 %v3582, %v4273
        %v4291 = vmul.f32 %v3581, %v4277
        %v4292 = vmul.f32 %v3580, %v4281
        %v4293 = vmul.f32 %v3583, %v4285
        %4294 = vst [vmem:[#allocation2 + $0x240] sm:$0xff] %v4290
        %4295 = vst [vmem:[#allocation2 + $0x248] sm:$0xff] %v4291
        %4296 = vst [vmem:[#allocation2 + $0x250] sm:$0xff] %v4292
        %4297 = vst [vmem:[#allocation2 + $0x258] sm:$0xff] %v4293
        %v4298 = vld [vmem:[%s1219] ss:$8 sm:$0xf]
        %v4300 = vlaneseq
        %v4301 = vshrl.u32 %v4300, 7
        %v4302 = vsub.s32 0, %v4301
        %v4303 = vrot.slane %v4298, %v4302
        %v4304 = vlaneseq
        %v4305 = vshrl.u32 %v4304, 7
        %v4306 = vsub.s32 1, %v4305
        %v4307 = vrot.slane %v4298, %v4306
        %v4308 = vlaneseq
        %v4309 = vshrl.u32 %v4308, 7
        %v4310 = vsub.s32 2, %v4309
        %v4311 = vrot.slane %v4298, %v4310
        %v4312 = vlaneseq
        %v4313 = vshrl.u32 %v4312, 7
        %v4314 = vsub.s32 3, %v4313
        %v4315 = vrot.slane %v4298, %v4314
        %v4320 = vmul.f32 %v3602, %v4303
        %v4321 = vmul.f32 %v3601, %v4307
        %v4322 = vmul.f32 %v3600, %v4311
        %v4323 = vmul.f32 %v3603, %v4315
        %4324 = vst [vmem:[#allocation2 + $0x260] sm:$0xff] %v4320
        %4325 = vst [vmem:[#allocation2 + $0x268] sm:$0xff] %v4321
        %4326 = vst [vmem:[#allocation2 + $0x270] sm:$0xff] %v4322
        %4327 = vst [vmem:[#allocation2 + $0x278] sm:$0xff] %v4323
        %v4328 = vld [vmem:[%s1250] ss:$8 sm:$0xf]
        %v4330 = vlaneseq
        %v4331 = vshrl.u32 %v4330, 7
        %v4332 = vsub.s32 0, %v4331
        %v4333 = vrot.slane %v4328, %v4332
        %v4334 = vlaneseq
        %v4335 = vshrl.u32 %v4334, 7
        %v4336 = vsub.s32 1, %v4335
        %v4337 = vrot.slane %v4328, %v4336
        %v4338 = vlaneseq
        %v4339 = vshrl.u32 %v4338, 7
        %v4340 = vsub.s32 2, %v4339
        %v4341 = vrot.slane %v4328, %v4340
        %v4342 = vlaneseq
        %v4343 = vshrl.u32 %v4342, 7
        %v4344 = vsub.s32 3, %v4343
        %v4345 = vrot.slane %v4328, %v4344
        %v4350 = vmul.f32 %v3644, %v4333
        %v4351 = vmul.f32 %v3643, %v4337
        %v4352 = vmul.f32 %v3642, %v4341
        %v4353 = vmul.f32 %v3645, %v4345
        %4354 = vst [vmem:[#allocation2 + $0x280] sm:$0xff] %v4350
        %4355 = vst [vmem:[#allocation2 + $0x288] sm:$0xff] %v4351
        %4356 = vst [vmem:[#allocation2 + $0x290] sm:$0xff] %v4352
        %4357 = vst [vmem:[#allocation2 + $0x298] sm:$0xff] %v4353
        %v4358 = vld [vmem:[%s1281] ss:$8 sm:$0xf]
        %v4360 = vlaneseq
        %v4361 = vshrl.u32 %v4360, 7
        %v4362 = vsub.s32 0, %v4361
        %v4363 = vrot.slane %v4358, %v4362
        %v4364 = vlaneseq
        %v4365 = vshrl.u32 %v4364, 7
        %v4366 = vsub.s32 1, %v4365
        %v4367 = vrot.slane %v4358, %v4366
        %v4368 = vlaneseq
        %v4369 = vshrl.u32 %v4368, 7
        %v4370 = vsub.s32 2, %v4369
        %v4371 = vrot.slane %v4358, %v4370
        %v4372 = vlaneseq
        %v4373 = vshrl.u32 %v4372, 7
        %v4374 = vsub.s32 3, %v4373
        %v4375 = vrot.slane %v4358, %v4374
        %v4380 = vmul.f32 %v3686, %v4363
        %v4381 = vmul.f32 %v3685, %v4367
        %v4382 = vmul.f32 %v3684, %v4371
        %v4383 = vmul.f32 %v3687, %v4375
        %4384 = vst [vmem:[#allocation2 + $0x2a0] sm:$0xff] %v4380
        %4385 = vst [vmem:[#allocation2 + $0x2a8] sm:$0xff] %v4381
        %4386 = vst [vmem:[#allocation2 + $0x2b0] sm:$0xff] %v4382
        %4387 = vst [vmem:[#allocation2 + $0x2b8] sm:$0xff] %v4383
        %v4388 = vld [vmem:[%s1312] ss:$8 sm:$0xf]
        %v4390 = vlaneseq
        %v4391 = vshrl.u32 %v4390, 7
        %v4392 = vsub.s32 0, %v4391
        %v4393 = vrot.slane %v4388, %v4392
        %v4394 = vlaneseq
        %v4395 = vshrl.u32 %v4394, 7
        %v4396 = vsub.s32 1, %v4395
        %v4397 = vrot.slane %v4388, %v4396
        %v4398 = vlaneseq
        %v4399 = vshrl.u32 %v4398, 7
        %v4400 = vsub.s32 2, %v4399
        %v4401 = vrot.slane %v4388, %v4400
        %v4402 = vlaneseq
        %v4403 = vshrl.u32 %v4402, 7
        %v4404 = vsub.s32 3, %v4403
        %v4405 = vrot.slane %v4388, %v4404
        %v4410 = vmul.f32 %v3728, %v4393
        %v4411 = vmul.f32 %v3727, %v4397
        %v4412 = vmul.f32 %v3726, %v4401
        %v4413 = vmul.f32 %v3729, %v4405
        %4414 = vst [vmem:[#allocation2 + $0x2c0] sm:$0xff] %v4410
        %4415 = vst [vmem:[#allocation2 + $0x2c8] sm:$0xff] %v4411
        %4416 = vst [vmem:[#allocation2 + $0x2d0] sm:$0xff] %v4412
        %4417 = vst [vmem:[#allocation2 + $0x2d8] sm:$0xff] %v4413
        %v4418 = vld [vmem:[%s1343] ss:$8 sm:$0xf]
        %v4420 = vlaneseq
        %v4421 = vshrl.u32 %v4420, 7
        %v4422 = vsub.s32 0, %v4421
        %v4423 = vrot.slane %v4418, %v4422
        %v4424 = vlaneseq
        %v4425 = vshrl.u32 %v4424, 7
        %v4426 = vsub.s32 1, %v4425
        %v4427 = vrot.slane %v4418, %v4426
        %v4428 = vlaneseq
        %v4429 = vshrl.u32 %v4428, 7
        %v4430 = vsub.s32 2, %v4429
        %v4431 = vrot.slane %v4418, %v4430
        %v4432 = vlaneseq
        %v4433 = vshrl.u32 %v4432, 7
        %v4434 = vsub.s32 3, %v4433
        %v4435 = vrot.slane %v4418, %v4434
        %v4440 = vmul.f32 %v3770, %v4423
        %v4441 = vmul.f32 %v3769, %v4427
        %v4442 = vmul.f32 %v3768, %v4431
        %v4443 = vmul.f32 %v3771, %v4435
        %4444 = vst [vmem:[#allocation2 + $0x2e0] sm:$0xff] %v4440
        %4445 = vst [vmem:[#allocation2 + $0x2e8] sm:$0xff] %v4441
        %4446 = vst [vmem:[#allocation2 + $0x2f0] sm:$0xff] %v4442
        %4447 = vst [vmem:[#allocation2 + $0x2f8] sm:$0xff] %v4443
        %v4448 = vld [vmem:[%s1374] ss:$8 sm:$0xf]
        %v4450 = vlaneseq
        %v4451 = vshrl.u32 %v4450, 7
        %v4452 = vsub.s32 0, %v4451
        %v4453 = vrot.slane %v4448, %v4452
        %v4454 = vlaneseq
        %v4455 = vshrl.u32 %v4454, 7
        %v4456 = vsub.s32 1, %v4455
        %v4457 = vrot.slane %v4448, %v4456
        %v4458 = vlaneseq
        %v4459 = vshrl.u32 %v4458, 7
        %v4460 = vsub.s32 2, %v4459
        %v4461 = vrot.slane %v4448, %v4460
        %v4462 = vlaneseq
        %v4463 = vshrl.u32 %v4462, 7
        %v4464 = vsub.s32 3, %v4463
        %v4465 = vrot.slane %v4448, %v4464
        %v4470 = vmul.f32 %v3812, %v4453
        %v4471 = vmul.f32 %v3811, %v4457
        %v4472 = vmul.f32 %v3810, %v4461
        %v4473 = vmul.f32 %v3813, %v4465
        %4474 = vst [vmem:[#allocation2 + $0x300] sm:$0xff] %v4470
        %4475 = vst [vmem:[#allocation2 + $0x308] sm:$0xff] %v4471
        %4476 = vst [vmem:[#allocation2 + $0x310] sm:$0xff] %v4472
        %4477 = vst [vmem:[#allocation2 + $0x318] sm:$0xff] %v4473
        %v4478 = vld [vmem:[%s1405] ss:$8 sm:$0xf]
        %v4480 = vlaneseq
        %v4481 = vshrl.u32 %v4480, 7
        %v4482 = vsub.s32 0, %v4481
        %v4483 = vrot.slane %v4478, %v4482
        %v4484 = vlaneseq
        %v4485 = vshrl.u32 %v4484, 7
        %v4486 = vsub.s32 1, %v4485
        %v4487 = vrot.slane %v4478, %v4486
        %v4488 = vlaneseq
        %v4489 = vshrl.u32 %v4488, 7
        %v4490 = vsub.s32 2, %v4489
        %v4491 = vrot.slane %v4478, %v4490
        %v4492 = vlaneseq
        %v4493 = vshrl.u32 %v4492, 7
        %v4494 = vsub.s32 3, %v4493
        %v4495 = vrot.slane %v4478, %v4494
        %v4500 = vmul.f32 %v3854, %v4483
        %v4501 = vmul.f32 %v3853, %v4487
        %v4502 = vmul.f32 %v3852, %v4491
        %v4503 = vmul.f32 %v3855, %v4495
        %4504 = vst [vmem:[#allocation2 + $0x320] sm:$0xff] %v4500
        %4505 = vst [vmem:[#allocation2 + $0x328] sm:$0xff] %v4501
        %4506 = vst [vmem:[#allocation2 + $0x330] sm:$0xff] %v4502
        %4507 = vst [vmem:[#allocation2 + $0x338] sm:$0xff] %v4503
        %v4508 = vld [vmem:[%s1436] ss:$8 sm:$0xf]
        %v4510 = vlaneseq
        %v4511 = vshrl.u32 %v4510, 7
        %v4512 = vsub.s32 0, %v4511
        %v4513 = vrot.slane %v4508, %v4512
        %v4514 = vlaneseq
        %v4515 = vshrl.u32 %v4514, 7
        %v4516 = vsub.s32 1, %v4515
        %v4517 = vrot.slane %v4508, %v4516
        %v4518 = vlaneseq
        %v4519 = vshrl.u32 %v4518, 7
        %v4520 = vsub.s32 2, %v4519
        %v4521 = vrot.slane %v4508, %v4520
        %v4522 = vlaneseq
        %v4523 = vshrl.u32 %v4522, 7
        %v4524 = vsub.s32 3, %v4523
        %v4525 = vrot.slane %v4508, %v4524
        %v4530 = vmul.f32 %v3896, %v4513
        %v4531 = vmul.f32 %v3895, %v4517
        %v4532 = vmul.f32 %v3894, %v4521
        %v4533 = vmul.f32 %v3897, %v4525
        %4534 = vst [vmem:[#allocation2 + $0x340] sm:$0xff] %v4530
        %4535 = vst [vmem:[#allocation2 + $0x348] sm:$0xff] %v4531
        %4536 = vst [vmem:[#allocation2 + $0x350] sm:$0xff] %v4532
        %4537 = vst [vmem:[#allocation2 + $0x358] sm:$0xff] %v4533
        %v4538 = vld [vmem:[#allocation2] sm:$0xff]
        %v4539 = vld [vmem:[#allocation2 + $0x8] sm:$0xff]
        %v4540 = vld [vmem:[#allocation2 + $0x10] sm:$0xff]
        %v4541 = vld [vmem:[#allocation2 + $0x18] sm:$0xff]
        %v4542 = vld [vmem:[#allocation2 + $0x20] sm:$0xff]
        %v4543 = vld [vmem:[#allocation2 + $0x28] sm:$0xff]
        %v4544 = vld [vmem:[#allocation2 + $0x30] sm:$0xff]
        %v4545 = vld [vmem:[#allocation2 + $0x38] sm:$0xff]
        %v4546 = vld [vmem:[#allocation2 + $0x40] sm:$0xff]
        %v4547 = vld [vmem:[#allocation2 + $0x48] sm:$0xff]
        %v4548 = vld [vmem:[#allocation2 + $0x50] sm:$0xff]
        %v4549 = vld [vmem:[#allocation2 + $0x58] sm:$0xff]
        %v4550 = vld [vmem:[#allocation2 + $0x60] sm:$0xff]
        %v4551 = vld [vmem:[#allocation2 + $0x68] sm:$0xff]
        %v4552 = vld [vmem:[#allocation2 + $0x70] sm:$0xff]
        %v4553 = vld [vmem:[#allocation2 + $0x78] sm:$0xff]
        %v4554 = vld [vmem:[#allocation2 + $0x80] sm:$0xff]
        %v4555 = vld [vmem:[#allocation2 + $0x88] sm:$0xff]
        %v4556 = vld [vmem:[#allocation2 + $0x90] sm:$0xff]
        %v4557 = vld [vmem:[#allocation2 + $0x98] sm:$0xff]
        %v4558 = vld [vmem:[#allocation2 + $0xa0] sm:$0xff]
        %v4559 = vld [vmem:[#allocation2 + $0xa8] sm:$0xff]
        %v4560 = vld [vmem:[#allocation2 + $0xb0] sm:$0xff]
        %v4561 = vld [vmem:[#allocation2 + $0xb8] sm:$0xff]
        %v4562 = vld [vmem:[#allocation2 + $0xc0] sm:$0xff]
        %v4563 = vld [vmem:[#allocation2 + $0xc8] sm:$0xff]
        %v4564 = vld [vmem:[#allocation2 + $0xd0] sm:$0xff]
        %v4565 = vld [vmem:[#allocation2 + $0xd8] sm:$0xff]
        %v4566 = vld [vmem:[#allocation2 + $0xe0] sm:$0xff]
        %v4567 = vld [vmem:[#allocation2 + $0xe8] sm:$0xff]
        %v4568 = vld [vmem:[#allocation2 + $0xf0] sm:$0xff]
        %v4569 = vld [vmem:[#allocation2 + $0xf8] sm:$0xff]
        %v4570 = vld [vmem:[#allocation2 + $0x100] sm:$0xff]
        %v4571 = vld [vmem:[#allocation2 + $0x108] sm:$0xff]
        %v4572 = vld [vmem:[#allocation2 + $0x110] sm:$0xff]
        %v4573 = vld [vmem:[#allocation2 + $0x118] sm:$0xff]
        %v4574 = vld [vmem:[#allocation2 + $0x120] sm:$0xff]
        %v4575 = vld [vmem:[#allocation2 + $0x128] sm:$0xff]
        %v4576 = vld [vmem:[#allocation2 + $0x130] sm:$0xff]
        %v4577 = vld [vmem:[#allocation2 + $0x138] sm:$0xff]
        %v4578 = vld [vmem:[#allocation2 + $0x140] sm:$0xff]
        %v4579 = vld [vmem:[#allocation2 + $0x148] sm:$0xff]
        %v4580 = vld [vmem:[#allocation2 + $0x150] sm:$0xff]
        %v4581 = vld [vmem:[#allocation2 + $0x158] sm:$0xff]
        %v4582 = vld [vmem:[#allocation2 + $0x160] sm:$0xff]
        %v4583 = vld [vmem:[#allocation2 + $0x168] sm:$0xff]
        %v4584 = vld [vmem:[#allocation2 + $0x170] sm:$0xff]
        %v4585 = vld [vmem:[#allocation2 + $0x178] sm:$0xff]
        %v4586 = vld [vmem:[#allocation2 + $0x180] sm:$0xff]
        %v4587 = vld [vmem:[#allocation2 + $0x188] sm:$0xff]
        %v4588 = vld [vmem:[#allocation2 + $0x190] sm:$0xff]
        %v4589 = vld [vmem:[#allocation2 + $0x198] sm:$0xff]
        %v4590 = vld [vmem:[#allocation2 + $0x1a0] sm:$0xff]
        %v4591 = vld [vmem:[#allocation2 + $0x1a8] sm:$0xff]
        %v4592 = vld [vmem:[#allocation2 + $0x1b0] sm:$0xff]
        %v4593 = vld [vmem:[#allocation2 + $0x1b8] sm:$0xff]
        %v4594 = vld [vmem:[#allocation2 + $0x1c0] sm:$0xff]
        %v4595 = vld [vmem:[#allocation2 + $0x1c8] sm:$0xff]
        %v4596 = vld [vmem:[#allocation2 + $0x1d0] sm:$0xff]
        %v4597 = vld [vmem:[#allocation2 + $0x1d8] sm:$0xff]
        %v4598 = vld [vmem:[#allocation2 + $0x1e0] sm:$0xff]
        %v4599 = vld [vmem:[#allocation2 + $0x1e8] sm:$0xff]
        %v4600 = vld [vmem:[#allocation2 + $0x1f0] sm:$0xff]
        %v4601 = vld [vmem:[#allocation2 + $0x1f8] sm:$0xff]
        %v4602 = vld [vmem:[#allocation2 + $0x200] sm:$0xff]
        %v4603 = vld [vmem:[#allocation2 + $0x208] sm:$0xff]
        %v4604 = vld [vmem:[#allocation2 + $0x210] sm:$0xff]
        %v4605 = vld [vmem:[#allocation2 + $0x218] sm:$0xff]
        %v4606 = vld [vmem:[#allocation2 + $0x220] sm:$0xff]
        %v4607 = vld [vmem:[#allocation2 + $0x228] sm:$0xff]
        %v4608 = vld [vmem:[#allocation2 + $0x230] sm:$0xff]
        %v4609 = vld [vmem:[#allocation2 + $0x238] sm:$0xff]
        %v4610 = vld [vmem:[#allocation2 + $0x240] sm:$0xff]
        %v4611 = vld [vmem:[#allocation2 + $0x248] sm:$0xff]
        %v4612 = vld [vmem:[#allocation2 + $0x250] sm:$0xff]
        %v4613 = vld [vmem:[#allocation2 + $0x258] sm:$0xff]
        %v4614 = vld [vmem:[#allocation2 + $0x260] sm:$0xff]
        %v4615 = vld [vmem:[#allocation2 + $0x268] sm:$0xff]
        %v4616 = vld [vmem:[#allocation2 + $0x270] sm:$0xff]
        %v4617 = vld [vmem:[#allocation2 + $0x278] sm:$0xff]
        %v4618 = vld [vmem:[#allocation2 + $0x280] sm:$0xff]
        %v4619 = vld [vmem:[#allocation2 + $0x288] sm:$0xff]
        %v4620 = vld [vmem:[#allocation2 + $0x290] sm:$0xff]
        %v4621 = vld [vmem:[#allocation2 + $0x298] sm:$0xff]
        %v4622 = vld [vmem:[#allocation2 + $0x2a0] sm:$0xff]
        %v4623 = vld [vmem:[#allocation2 + $0x2a8] sm:$0xff]
        %v4624 = vld [vmem:[#allocation2 + $0x2b0] sm:$0xff]
        %v4625 = vld [vmem:[#allocation2 + $0x2b8] sm:$0xff]
        %v4626 = vld [vmem:[#allocation2 + $0x2c0] sm:$0xff]
        %v4627 = vld [vmem:[#allocation2 + $0x2c8] sm:$0xff]
        %v4628 = vld [vmem:[#allocation2 + $0x2d0] sm:$0xff]
        %v4629 = vld [vmem:[#allocation2 + $0x2d8] sm:$0xff]
        %v4630 = vld [vmem:[#allocation2 + $0x2e0] sm:$0xff]
        %v4631 = vld [vmem:[#allocation2 + $0x2e8] sm:$0xff]
        %v4632 = vld [vmem:[#allocation2 + $0x2f0] sm:$0xff]
        %v4633 = vld [vmem:[#allocation2 + $0x2f8] sm:$0xff]
        %v4634 = vld [vmem:[#allocation2 + $0x300] sm:$0xff]
        %v4635 = vld [vmem:[#allocation2 + $0x308] sm:$0xff]
        %v4636 = vld [vmem:[#allocation2 + $0x310] sm:$0xff]
        %v4637 = vld [vmem:[#allocation2 + $0x318] sm:$0xff]
        %v4638 = vld [vmem:[#allocation2 + $0x320] sm:$0xff]
        %v4639 = vld [vmem:[#allocation2 + $0x328] sm:$0xff]
        %v4640 = vld [vmem:[#allocation2 + $0x330] sm:$0xff]
        %v4641 = vld [vmem:[#allocation2 + $0x338] sm:$0xff]
        %v4642 = vld [vmem:[#allocation2 + $0x340] sm:$0xff]
        %v4643 = vld [vmem:[#allocation2 + $0x348] sm:$0xff]
        %v4644 = vld [vmem:[#allocation2 + $0x350] sm:$0xff]
        %v4645 = vld [vmem:[#allocation2 + $0x358] sm:$0xff]
        %4647 = vset.pattern.permute.xlu0 0
        %4648 = vperm.xlu0 %4647, %v3571
        %v4649 = vpop.permute.xlu0 %4648
        %v4652 = vcombine.high %v3570, %v3570
        %v4653 = vsel %vm1580, %v4652, 0
        %4655 = vmatprep.subr.mxu0 %v4599
        %4656 = vmatpush1.msra.mxu0 %v4598
        %4657 = vmatprep.subr.mxu0 %v4595
        %4658 = vmatpush1.msra.mxu0 %v4594
        %4659 = vmatprep.subr.mxu0 %v4591
        %4660 = vmatpush1.msra.mxu0 %v4590
        %4661 = vmatprep.subr.mxu0 %v4587
        %4662 = vmatpush1.msra.mxu0 %v4586
        %4663 = vmatprep.subr.mxu0 %v4583
        %4664 = vmatpush1.msra.mxu0 %v4582
        %4665 = vmatprep.subr.mxu0 %v4579
        %4666 = vmatpush1.msra.mxu0 %v4578
        %4667 = vmatprep.subr.mxu0 %v4575
        %4668 = vmatpush1.msra.mxu0 %v4574
        %4669 = vmatprep.subr.mxu0 %v4571
        %4670 = vmatpush1.msra.mxu0 %v4570
        %4671 = vmatprep.subr.mxu0 %v4567
        %4672 = vmatpush1.msra.mxu0 %v4566
        %4673 = vmatprep.subr.mxu0 %v4563
        %4674 = vmatpush1.msra.mxu0 %v4562
        %4675 = vmatprep.subr.mxu0 %v4559
        %4676 = vmatpush1.msra.mxu0 %v4558
        %4677 = vmatprep.subr.mxu0 %v4555
        %4678 = vmatpush1.msra.mxu0 %v4554
        %4679 = vmatprep.subr.mxu0 %v4551
        %4680 = vmatpush1.msra.mxu0 %v4550
        %4681 = vmatprep.subr.mxu0 %v4547
        %4682 = vmatpush1.msra.mxu0 %v4546
        %4683 = vmatprep.subr.mxu0 %v4543
        %4684 = vmatpush1.msra.mxu0 %v4542
        %4685 = vmatprep.subr.mxu0 %v4539
        %4686 = vmatpush1.msra.mxu0 %v4538
        %4687 = vmatprep.subr.mxu0 0.0
        %4688 = vmatpush2.msra.mxu0 0.0
        %4689 = vmatprep.subr.mxu0 0.0
        %4690 = vmatpush2.msra.mxu0 0.0
        %4691 = vmatprep.subr.mxu0 0.0
        %4692 = vmatpush2.msra.mxu0 0.0
        %4693 = vmatprep.subr.mxu0 0.0
        %4694 = vmatpush2.msra.mxu0 0.0
        %4695 = vmatprep.subr.mxu0 0.0
        %4696 = vmatpush2.msra.mxu0 0.0
        %4697 = vmatprep.subr.mxu0 %v4643
        %4698 = vmatpush2.msra.mxu0 %v4642
        %4699 = vmatprep.subr.mxu0 %v4639
        %4700 = vmatpush2.msra.mxu0 %v4638
        %4701 = vmatprep.subr.mxu0 %v4635
        %4702 = vmatpush2.msra.mxu0 %v4634
        %4703 = vmatprep.subr.mxu0 %v4631
        %4704 = vmatpush2.msra.mxu0 %v4630
        %4705 = vmatprep.subr.mxu0 %v4627
        %4706 = vmatpush2.msra.mxu0 %v4626
        %4707 = vmatprep.subr.mxu0 %v4623
        %4708 = vmatpush2.msra.mxu0 %v4622
        %4709 = vmatprep.subr.mxu0 %v4619
        %4710 = vmatpush2.msra.mxu0 %v4618
        %4711 = vmatprep.subr.mxu0 %v4615
        %4712 = vmatpush2.msra.mxu0 %v4614
        %4713 = vmatprep.subr.mxu0 %v4611
        %4714 = vmatpush2.msra.mxu0 %v4610
        %4715 = vmatprep.subr.mxu0 %v4607
        %4716 = vmatpush2.msra.mxu0 %v4606
        %4717 = vmatprep.subr.mxu0 %v4603
        %4718 = vmatpush2.msra.mxu0 %v4602
        %4719 = vmatprep.mubr.f32.mxu0 %v4653
        %4720 = vmatmul.mubr.f32.gmra.mxu0 %v3570
        %v4721 = vpop.f32.mrf.mxu0
        %v4722 = vadd.f32 %v4649, %v4721
        %v4723 = vpop.f32.mrf.mxu0
        %v4724 = vadd.f32 %v4649, %v4723
        %4725 = vdwg.mxu0
        %4726 = vmatprep.subr.mxu0 %v4601
        %4727 = vmatpush1.msra.mxu0 %v4600
        %4728 = vmatprep.subr.mxu0 %v4597
        %4729 = vmatpush1.msra.mxu0 %v4596
        %4730 = vmatprep.subr.mxu0 %v4593
        %4731 = vmatpush1.msra.mxu0 %v4592
        %4732 = vmatprep.subr.mxu0 %v4589
        %4733 = vmatpush1.msra.mxu0 %v4588
        %4734 = vmatprep.subr.mxu0 %v4585
        %4735 = vmatpush1.msra.mxu0 %v4584
        %4736 = vmatprep.subr.mxu0 %v4581
        %4737 = vmatpush1.msra.mxu0 %v4580
        %4738 = vmatprep.subr.mxu0 %v4577
        %4739 = vmatpush1.msra.mxu0 %v4576
        %4740 = vmatprep.subr.mxu0 %v4573
        %4741 = vmatpush1.msra.mxu0 %v4572
        %4742 = vmatprep.subr.mxu0 %v4569
        %4743 = vmatpush1.msra.mxu0 %v4568
        %4744 = vmatprep.subr.mxu0 %v4565
        %4745 = vmatpush1.msra.mxu0 %v4564
        %4746 = vmatprep.subr.mxu0 %v4561
        %4747 = vmatpush1.msra.mxu0 %v4560
        %4748 = vmatprep.subr.mxu0 %v4557
        %4749 = vmatpush1.msra.mxu0 %v4556
        %4750 = vmatprep.subr.mxu0 %v4553
        %4751 = vmatpush1.msra.mxu0 %v4552
        %4752 = vmatprep.subr.mxu0 %v4549
        %4753 = vmatpush1.msra.mxu0 %v4548
        %4754 = vmatprep.subr.mxu0 %v4545
        %4755 = vmatpush1.msra.mxu0 %v4544
        %4756 = vmatprep.subr.mxu0 %v4541
        %4757 = vmatpush1.msra.mxu0 %v4540
        %4758 = vmatprep.subr.mxu0 0.0
        %4759 = vmatpush2.msra.mxu0 0.0
        %4760 = vmatprep.subr.mxu0 0.0
        %4761 = vmatpush2.msra.mxu0 0.0
        %4762 = vmatprep.subr.mxu0 0.0
        %4763 = vmatpush2.msra.mxu0 0.0
        %4764 = vmatprep.subr.mxu0 0.0
        %4765 = vmatpush2.msra.mxu0 0.0
        %4766 = vmatprep.subr.mxu0 0.0
        %4767 = vmatpush2.msra.mxu0 0.0
        %4768 = vmatprep.subr.mxu0 %v4645
        %4769 = vmatpush2.msra.mxu0 %v4644
        %4770 = vmatprep.subr.mxu0 %v4641
        %4771 = vmatpush2.msra.mxu0 %v4640
        %4772 = vmatprep.subr.mxu0 %v4637
        %4773 = vmatpush2.msra.mxu0 %v4636
        %4774 = vmatprep.subr.mxu0 %v4633
        %4775 = vmatpush2.msra.mxu0 %v4632
        %4776 = vmatprep.subr.mxu0 %v4629
        %4777 = vmatpush2.msra.mxu0 %v4628
        %4778 = vmatprep.subr.mxu0 %v4625
        %4779 = vmatpush2.msra.mxu0 %v4624
        %4780 = vmatprep.subr.mxu0 %v4621
        %4781 = vmatpush2.msra.mxu0 %v4620
        %4782 = vmatprep.subr.mxu0 %v4617
        %4783 = vmatpush2.msra.mxu0 %v4616
        %4784 = vmatprep.subr.mxu0 %v4613
        %4785 = vmatpush2.msra.mxu0 %v4612
        %4786 = vmatprep.subr.mxu0 %v4609
        %4787 = vmatpush2.msra.mxu0 %v4608
        %4788 = vmatprep.subr.mxu0 %v4605
        %4789 = vmatpush2.msra.mxu0 %v4604
        %4790 = vmatprep.mubr.f32.mxu0 %v4653
        %4791 = vmatmul.mubr.f32.gmra.mxu0 %v3570
        %v4792 = vpop.f32.mrf.mxu0
        %v4793 = vadd.f32 %v4649, %v4792
        %v4794 = vpop.f32.mrf.mxu0
        %v4795 = vadd.f32 %v4649, %v4794
        %4796 = vdwg.mxu0
        %v4797 = vmax.f32 %v4722, 0.0
        %v4798 = vmax.f32 %v4724, 0.0
        %v4799 = vmax.f32 %v4793, 0.0
        %v4800 = vmax.f32 %v4795, 0.0
        %v4801 = vld [vmem:[%s362] sm:$0x7]
        %v4802 = vld [vmem:[%s362 + $0x8] sm:$0x7]
        %v4803 = vld [vmem:[%s362 + $0x10] sm:$0x7]
        %v4804 = vld [vmem:[%s362 + $0x18] sm:$0x7]
        %v4805 = vadd.f32 %v4797, %v4801
        %v4806 = vadd.f32 %v4798, %v4802
        %v4807 = vadd.f32 %v4799, %v4803
        %v4808 = vadd.f32 %v4800, %v4804
        %v4813 = vcombine.low %v4805, %v4806
        %v4814 = vcombine.low %v4807, %v4808
        %4817 = vst [vmem:[%s427] sm:$0x77] %v4813
        %4818 = vst [vmem:[%s427 + $0x8] sm:$0x77] %v4814
        %p4819 = scmp.lt.s32.totalorder %s27, 1
        %s4820 = scalar_select %p4819, %s27, 1
        %s4821 = smul.addr %s4820, 4
        %s4822 = smul.addr %s4821, 4
        %s4823 = scalar_lea.vmem %s9, %s4822
        // Predicated region
        $region77: #{tpu_custom_call.1} parent=55 // pred_check
          %p4824 = pneg %p244
        $region78: #{tpu_custom_call.1} parent=55 // pred_check_branch
          %4826 = sbr.rel (%p4824) target = $region80
        $region79: #{tpu_custom_call.1} parent=55 // pred_region
          _
        $region80: #{tpu_custom_call.1} parent=55 // pred_fallthru
          _
      $region56: #{tpu_custom_call.1} parent=5 // pred_fallthru
        _
      %p4827 = scmp.le.s32.totalorder 2, %s22
      // Predicated region
      $region81: #{tpu_custom_call.1} parent=5 // pred_check
        %p4828 = pneg %p4827
      $region82: #{tpu_custom_call.1} parent=5 // pred_check_branch
        %4830 = sbr.rel (%p4828) target = $region84
      $region83: #{tpu_custom_call.1} parent=5 // pred_region
        %s4831 = ssub.s32 %s22, 2
        // Predicated region
        $region85: #{tpu_custom_call.1} parent=83 // pred_check
          %p4832 = pneg %p250
        $region86: #{tpu_custom_call.1} parent=83 // pred_check_branch
          %4834 = sbr.rel (%p4832) target = $region88
        $region87: #{tpu_custom_call.1} parent=83 // pred_region
          %p4835 = scmp.lt.s32.totalorder %s28, 1
          %s4836 = scalar_select %p4835, %s28, 1
          %s4837 = smul.addr %s4836, 4
          %s4838 = smul.addr %s4837, 4
          %s4839 = scalar_lea.vmem %s9, %s4838
        $region88: #{tpu_custom_call.1} parent=83 // pred_fallthru
          _
      $region84: #{tpu_custom_call.1} parent=5 // pred_fallthru
        _
    $region6: #{tpu_custom_call.1} parent=1 // loop_footer
      %s26 = sadd.s32 1, %s22
    $region7: #{tpu_custom_call.1} parent=1 // loop_footer_branch
      %21 = sbr.rel target = $region3
    $region8: #{tpu_custom_call.1} parent=1 // loop_exit
      _
    %4840 = vsyncpa [#allocation4], 1
    %s4841 = scalar_lea.sflag [#allocation4], 1
    %4842 = vsyncpa %s4841, 1
    %4843 = vsyncpa [#allocation6], 1
    %s4844 = scalar_lea.sflag [#allocation6], 1
    %4845 = vsyncpa %s4844, 1
    %4846 = vsyncpa [#allocation9], 1

</llo_original>
